<compile_context>
chip_gen: v6e
topology: v6e:2x2x1
jax: 0.10.0
libtpu: 0.0.40
codegen_flags: <defaults>
</compile_context>

<pallas_src>
import jax
import jax.numpy as jnp
import numpy as np
from jax.experimental import pallas as pl
from jax.experimental.pallas import tpu as pltpu


def _round_up(a, m):
    return ((a + m - 1) // m) * m


def _tpu_vmem_capacity_bytes():
    """Physical VMEM per core (128 MiB v5e/v6e, 64 MiB v7x); safe default."""
    try:
        info = pltpu.get_tpu_info()
        for name in ("vmem_capacity_bytes", "vmem_size_bytes", "vmem_bytes"):
            v = getattr(info, name, None)
            if isinstance(v, (int, np.integer)) and int(v) > 0:
                return int(v)
    except Exception:
        pass
    return 128 * 1024 * 1024


def _make_kernel(P, ps, H, W, with_mask):
    """Kernel for one block of TN patch rows.

    Refs (in order):
      x_ref : (P, TN, C)  pool-position-major patch features, C on lanes
      w_ref : (C, C)      transposed conv weight, logits = x @ w_ref  (f32 acc)
      ho_ref: (TN, 1) i32 patch top-left row  (only when with_mask)
      wo_ref: (TN, 1) i32 patch top-left col  (only when with_mask)
      o_ref : (TN, C) f32 pooled output
    """
    big_neg = float(-np.finfo(np.float32).max)

    def kernel(*refs):
        if with_mask:
            x_ref, w_ref, ho_ref, wo_ref, o_ref = refs
        else:
            x_ref, w_ref, o_ref = refs

        x = x_ref[...]                              # (P, TN, C)
        _, tn, c = x.shape
        wt = w_ref[...]                             # (C_in, C_out)

        # One large-M MXU matmul instead of P small ones.
        logits_all = jnp.dot(x.reshape(P * tn, c), wt,
                             preferred_element_type=jnp.float32)

        if with_mask:
            hoff = ho_ref[...]                      # (TN, 1) int32
            woff = wo_ref[...]                      # (TN, 1) int32

        logits = []
        for p in range(P):
            lp = logits_all[p * tn:(p + 1) * tn]    # static (TN, C) slice
            if with_mask:
                dh, dw = p // ps, p % ps
                padded = (hoff + dh >= H) | (woff + dw >= W)   # (TN, 1) bool
                lp = jnp.where(padded, jnp.float32(big_neg), lp)
            logits.append(lp)

        # Streaming softmax over the P pool positions; all ops are (TN, C) f32.
        m = logits[0]
        for p in range(1, P):
            m = jnp.maximum(m, logits[p])

        num = jnp.zeros_like(m)
        den = jnp.zeros_like(m)
        for p in range(P):
            e = jnp.exp(logits[p] - m)
            den = den + e
            num = num + x[p].astype(jnp.float32) * e

        o_ref[...] = (num * pl.reciprocal(den, approx=False)).astype(o_ref.dtype)

    return kernel


def attention_pool_2d(x, w, pool_size, *, compute_dtype=jnp.float32,
                      tile_n=None, vmem_limit_bytes=None):
    """x: (B, C, H, W), w: (C, C) (Conv3d 1x1x1 weight squeezed).

    compute_dtype: operand dtype fed to HBM/MXU.  jnp.float32 matches the
    PyTorch reference to ~1e-4; jnp.bfloat16 halves HBM traffic and uses the
    bf16-native MXU (softmax / weighted sum stay in f32).
    """
    b, c, H, W = x.shape
    ps = int(pool_size)
    rh = (-H) % ps
    rw = (-W) % ps
    Hp, Wp = H + rh, W + rw
    nh, nw = Hp // ps, Wp // ps
    P = ps * ps
    N = b * nh * nw
    needs_mask = (rh > 0) or (rw > 0)

    compute_dtype = jnp.dtype(compute_dtype)
    itemsize = compute_dtype.itemsize

    # Cast before the relayout so the wrapper's extra HBM pass over x moves the
    # reduced-precision bytes in bf16 mode.
    xc = x.astype(compute_dtype)
    xp = jnp.pad(xc, ((0, 0), (0, 0), (0, rh), (0, rw))) if needs_mask else xc

    # 'b c (h p) (w q) -> (p q) (b h w) c': channels on the 128-lane axis, pool
    # position as a cheap leading index.
    xk = xp.reshape(b, c, nh, ps, nw, ps).transpose(3, 5, 0, 2, 4, 1)
    xk = xk.reshape(P, N, c)

    wt = jnp.transpose(w).astype(compute_dtype)      # (C_in, C_out)

    # ---- generation-aware tiling -------------------------------------------
    vmem_cap = _tpu_vmem_capacity_bytes()
    small_vmem = vmem_cap <= 64 * 1024 * 1024        # v7x-class parts
    if vmem_limit_bytes is None:
        vmem_limit_bytes = max(32 * 1024 * 1024,
                               min((vmem_cap * 3) // 4, 96 * 1024 * 1024))

    # Row alignment keeps the in-kernel (P, TN, C) -> (P*TN, C) reshape a
    # layout no-op (sublane tile is 8 for f32, 16 for bf16).
    row_align = max(8, 32 // itemsize)
    c_lanes = max(_round_up(c, 128), 128)            # lane-padded VMEM width
    bytes_per_row = P * c_lanes * itemsize

    if tile_n is None:
        block_budget = (4 if small_vmem else 8) * 1024 * 1024
        tile_n = max(row_align,
                     min(2048, block_budget // max(bytes_per_row, 1)))
    tile_n = _round_up(int(max(tile_n, row_align)), row_align)

    n_aligned = _round_up(N, row_align)
    tile_n = min(tile_n, n_aligned)
    if n_aligned >= 2 * row_align:
        # Guarantee >= 2 grid steps so both v7x TensorCores get work on the
        # "parallel" axis (harmless single extra step on v5e/v6e).
        tile_n = min(tile_n, _round_up(n_aligned // 2, row_align))
    Npad = _round_up(N, tile_n)

    if Npad != N:
        xk = jnp.pad(xk, ((0, 0), (0, Npad - N), (0, 0)))

    x_spec = pl.BlockSpec((P, tile_n, c), lambda i: (0, i, 0))

    mask_specs = []
    mask_operands = []
    if needs_mask:
        n_idx = jnp.arange(N, dtype=jnp.int32)
        hw = n_idx % (nh * nw)
        hoff = (hw // nw) * ps                       # patch top-left row
        woff = (hw % nw) * ps                        # patch top-left col
        if Npad != N:
            hoff = jnp.pad(hoff, (0, Npad - N))
            woff = jnp.pad(woff, (0, Npad - N))
        coord_spec = pl.BlockSpec((tile_n, 1), lambda i: (i, 0))
        mask_specs = [coord_spec, coord_spec]
        mask_operands = [hoff.reshape(Npad, 1).astype(jnp.int32),
                         woff.reshape(Npad, 1).astype(jnp.int32)]

    out_spec = pl.BlockSpec((tile_n, c), lambda i: (i, 0))

    bytes_accessed = itemsize * (xk.size + wt.size) + 4 * Npad * c
    if needs_mask:
        bytes_accessed += 2 * 4 * Npad
    cost = pl.CostEstimate(
        flops=int(2 * Npad * P * c * c + 6 * Npad * P * c),
        transcendentals=int(Npad * P * c),
        bytes_accessed=int(bytes_accessed),
    )

    kernel = _make_kernel(P, ps, H, W, needs_mask)

    def _call(weight_pipeline_mode):
        if weight_pipeline_mode is None:
            w_spec = pl.BlockSpec((c, c), lambda i: (0, 0))
        else:
            # Grid-invariant weight: single-buffer it to free VMEM (matters
            # most under v7x's 64 MiB VMEM).
            w_spec = pl.BlockSpec((c, c), lambda i: (0, 0),
                                  pipeline_mode=weight_pipeline_mode)
        return pl.pallas_call(
            kernel,
            out_shape=jax.ShapeDtypeStruct((Npad, c), jnp.float32),
            grid_spec=pltpu.PrefetchScalarGridSpec(
                num_scalar_prefetch=0,
                grid=(Npad // tile_n,),
                in_specs=[x_spec, w_spec] + mask_specs,
                out_specs=out_spec,
            ),
            compiler_params=pltpu.CompilerParams(
                dimension_semantics=("parallel",),
                vmem_limit_bytes=int(vmem_limit_bytes),
            ),
            cost_estimate=cost,
        )(xk, wt, *mask_operands)

    try:
        out = _call(pl.Buffered(buffer_count=1))
    except Exception:
        # Single-buffering via pipeline_mode unsupported on this JAX version;
        # fall back to default double-buffering (correctness unchanged).
        out = _call(None)

    # (Npad, C) -> (B, C, nh, nw)
    out = out[:N].reshape(b, nh, nw, c).transpose(0, 3, 1, 2)
    return out


def reference_attention_pool_2d(x, w, pool_size):
    """Pure-JAX reference mirroring the PyTorch forward exactly."""
    b, c, H, W = x.shape
    ps = pool_size
    rh = (-H) % ps
    rw = (-W) % ps
    Hp, Wp = H + rh, W + rw
    xp = jnp.pad(x, ((0, 0), (0, 0), (0, rh), (0, rw)))
    nh, nw = Hp // ps, Wp // ps
    xr = xp.reshape(b, c, nh, ps, nw, ps).transpose(0, 1, 2, 4, 3, 5)
    xr = xr.reshape(b, c, nh, nw, ps * ps)
    logits = jnp.einsum('oc,bchwp->bohwp', w, xr)
    if rh > 0 or rw > 0:
        m2d = (jnp.arange(Hp)[:, None] >= H) | (jnp.arange(Wp)[None, :] >= W)
        mr = m2d.reshape(nh, ps, nw, ps).transpose(0, 2, 1, 3)
        mr = mr.reshape(1, 1, nh, nw, ps * ps)
        logits = jnp.where(mr, -jnp.finfo(logits.dtype).max, logits)
    attn = jax.nn.softmax(logits, axis=-1)
    return (xr * attn).sum(-1)


if __name__ == "__main__":
    key = jax.random.PRNGKey(0)
    kx, kw = jax.random.split(key)

    b, c, H, W = 2, 4, 16, 16
    x = jax.random.normal(kx, (b, c, H, W), dtype=jnp.float32)
    # Conv3d(c, c, 1, bias=False).weight has shape (c, c, 1, 1, 1); store (c, c).
    bound = 1.0 / np.sqrt(c)
    w = jax.random.uniform(kw, (c, c), minval=-bound, maxval=bound,
                           dtype=jnp.float32)

    # pool_size=3 exercises the zero-pad + mask path; pool_size=4 divides evenly.
    for pool_size in (3, 4):
        out = jax.block_until_ready(attention_pool_2d(x, w, pool_size))
        ref = reference_attention_pool_2d(x, w, pool_size)
        nh = -(-H // pool_size)
        nw = -(-W // pool_size)
        assert out.shape == ref.shape == (b, c, nh, nw)
        np.testing.assert_allclose(np.asarray(out), np.asarray(ref),
                                   rtol=1e-4, atol=1e-4)

    # bf16 fast path (halved HBM traffic, bf16-native MXU): looser tolerance.
    out_bf16 = jax.block_until_ready(
        attention_pool_2d(x, w, 3, compute_dtype=jnp.bfloat16))
    np.testing.assert_allclose(np.asarray(out_bf16),
                               np.asarray(reference_attention_pool_2d(x, w, 3)),
                               rtol=1e-1, atol=1e-1)

    print("KERNEL_OK")
</pallas_src>

<mosaic_0001>
module attributes {stable_mosaic.version = 11 : i64} {
  func.func @kernel(%arg0: i32, %arg1: memref<9x40x4xf32, #tpu.memory_space<vmem>>, %arg2: memref<4x4xf32, #tpu.memory_space<vmem>>, %arg3: memref<40x1xi32, #tpu.memory_space<vmem>>, %arg4: memref<40x1xi32, #tpu.memory_space<vmem>>, %arg5: memref<40x4xf32, #tpu.memory_space<vmem>>) attributes {dimension_semantics = [#tpu.dimension_semantics<parallel>], iteration_bounds = array<i64: 2>, scalar_prefetch = 0 : i64, scratch_operands = 0 : i64, tpu.core_type = #tpu.core_type<tc>, window_params = [{transform_indices = @transform_0, window_bounds = array<i64: 9, 40, 4>}, {pipeline_mode = #tpu.pipeline_mode<synchronous>, transform_indices = @transform_1, window_bounds = array<i64: 4, 4>}, {transform_indices = @transform_2, window_bounds = array<i64: 40, 1>}, {transform_indices = @transform_3, window_bounds = array<i64: 40, 1>}, {transform_indices = @transform_4, window_bounds = array<i64: 40, 4>}]} {
    %c0 = arith.constant 0 : index
    %c0_0 = arith.constant 0 : index
    %c0_1 = arith.constant 0 : index
    %0 = vector.load %arg1[%c0, %c0_0, %c0_1] : memref<9x40x4xf32, #tpu.memory_space<vmem>>, vector<9x40x4xf32>
    %c0_2 = arith.constant 0 : index
    %c0_3 = arith.constant 0 : index
    %1 = vector.load %arg2[%c0_2, %c0_3] : memref<4x4xf32, #tpu.memory_space<vmem>>, vector<4x4xf32>
    %2 = vector.shape_cast %0 : vector<9x40x4xf32> to vector<360x4xf32>
    %cst = arith.constant dense<0.000000e+00> : vector<360x4xf32>
    %3 = tpu.matmul %2, %1, %cst {dimension_numbers = #tpu.dot_dimension_numbers<[1], [0], [0], [1], [0, 0, 1, 1], [], []>} : vector<360x4xf32>, vector<4x4xf32>, vector<360x4xf32> -> vector<360x4xf32>
    %c0_4 = arith.constant 0 : index
    %c0_5 = arith.constant 0 : index
    %4 = vector.load %arg3[%c0_4, %c0_5] : memref<40x1xi32, #tpu.memory_space<vmem>>, vector<40x1xi32>
    %c0_6 = arith.constant 0 : index
    %c0_7 = arith.constant 0 : index
    %5 = vector.load %arg4[%c0_6, %c0_7] : memref<40x1xi32, #tpu.memory_space<vmem>>, vector<40x1xi32>
    %6 = vector.extract_strided_slice %3 {offsets = [0, 0], sizes = [40, 4], strides = [1, 1]} : vector<360x4xf32> to vector<40x4xf32>
    %c0_i32 = arith.constant 0 : i32
    %7 = vector.broadcast %c0_i32 : i32 to vector<40x1xi32>
    %8 = arith.addi %4, %7 : vector<40x1xi32>
    %c16_i32 = arith.constant 16 : i32
    %9 = vector.broadcast %c16_i32 : i32 to vector<40x1xi32>
    %10 = arith.cmpi sge, %8, %9 : vector<40x1xi32>
    %c0_i32_8 = arith.constant 0 : i32
    %11 = vector.broadcast %c0_i32_8 : i32 to vector<40x1xi32>
    %12 = arith.addi %5, %11 : vector<40x1xi32>
    %c16_i32_9 = arith.constant 16 : i32
    %13 = vector.broadcast %c16_i32_9 : i32 to vector<40x1xi32>
    %14 = arith.cmpi sge, %12, %13 : vector<40x1xi32>
    %15 = arith.ori %10, %14 : vector<40x1xi1>
    %cst_10 = arith.constant -3.40282347E+38 : f32
    %16 = vector.shape_cast %15 : vector<40x1xi1> to vector<40x1xi1>
    %17 = vector.broadcast %16 : vector<40x1xi1> to vector<40x4xi1>
    %18 = vector.broadcast %cst_10 : f32 to vector<40x4xf32>
    %19 = arith.select %17, %18, %6 : vector<40x4xi1>, vector<40x4xf32>
    %20 = vector.extract_strided_slice %3 {offsets = [40, 0], sizes = [40, 4], strides = [1, 1]} : vector<360x4xf32> to vector<40x4xf32>
    %c0_i32_11 = arith.constant 0 : i32
    %21 = vector.broadcast %c0_i32_11 : i32 to vector<40x1xi32>
    %22 = arith.addi %4, %21 : vector<40x1xi32>
    %c16_i32_12 = arith.constant 16 : i32
    %23 = vector.broadcast %c16_i32_12 : i32 to vector<40x1xi32>
    %24 = arith.cmpi sge, %22, %23 : vector<40x1xi32>
    %c1_i32 = arith.constant 1 : i32
    %25 = vector.broadcast %c1_i32 : i32 to vector<40x1xi32>
    %26 = arith.addi %5, %25 : vector<40x1xi32>
    %c16_i32_13 = arith.constant 16 : i32
    %27 = vector.broadcast %c16_i32_13 : i32 to vector<40x1xi32>
    %28 = arith.cmpi sge, %26, %27 : vector<40x1xi32>
    %29 = arith.ori %24, %28 : vector<40x1xi1>
    %cst_14 = arith.constant -3.40282347E+38 : f32
    %30 = vector.shape_cast %29 : vector<40x1xi1> to vector<40x1xi1>
    %31 = vector.broadcast %30 : vector<40x1xi1> to vector<40x4xi1>
    %32 = vector.broadcast %cst_14 : f32 to vector<40x4xf32>
    %33 = arith.select %31, %32, %20 : vector<40x4xi1>, vector<40x4xf32>
    %34 = vector.extract_strided_slice %3 {offsets = [80, 0], sizes = [40, 4], strides = [1, 1]} : vector<360x4xf32> to vector<40x4xf32>
    %c0_i32_15 = arith.constant 0 : i32
    %35 = vector.broadcast %c0_i32_15 : i32 to vector<40x1xi32>
    %36 = arith.addi %4, %35 : vector<40x1xi32>
    %c16_i32_16 = arith.constant 16 : i32
    %37 = vector.broadcast %c16_i32_16 : i32 to vector<40x1xi32>
    %38 = arith.cmpi sge, %36, %37 : vector<40x1xi32>
    %c2_i32 = arith.constant 2 : i32
    %39 = vector.broadcast %c2_i32 : i32 to vector<40x1xi32>
    %40 = arith.addi %5, %39 : vector<40x1xi32>
    %c16_i32_17 = arith.constant 16 : i32
    %41 = vector.broadcast %c16_i32_17 : i32 to vector<40x1xi32>
    %42 = arith.cmpi sge, %40, %41 : vector<40x1xi32>
    %43 = arith.ori %38, %42 : vector<40x1xi1>
    %cst_18 = arith.constant -3.40282347E+38 : f32
    %44 = vector.shape_cast %43 : vector<40x1xi1> to vector<40x1xi1>
    %45 = vector.broadcast %44 : vector<40x1xi1> to vector<40x4xi1>
    %46 = vector.broadcast %cst_18 : f32 to vector<40x4xf32>
    %47 = arith.select %45, %46, %34 : vector<40x4xi1>, vector<40x4xf32>
    %48 = vector.extract_strided_slice %3 {offsets = [120, 0], sizes = [40, 4], strides = [1, 1]} : vector<360x4xf32> to vector<40x4xf32>
    %c1_i32_19 = arith.constant 1 : i32
    %49 = vector.broadcast %c1_i32_19 : i32 to vector<40x1xi32>
    %50 = arith.addi %4, %49 : vector<40x1xi32>
    %c16_i32_20 = arith.constant 16 : i32
    %51 = vector.broadcast %c16_i32_20 : i32 to vector<40x1xi32>
    %52 = arith.cmpi sge, %50, %51 : vector<40x1xi32>
    %c0_i32_21 = arith.constant 0 : i32
    %53 = vector.broadcast %c0_i32_21 : i32 to vector<40x1xi32>
    %54 = arith.addi %5, %53 : vector<40x1xi32>
    %c16_i32_22 = arith.constant 16 : i32
    %55 = vector.broadcast %c16_i32_22 : i32 to vector<40x1xi32>
    %56 = arith.cmpi sge, %54, %55 : vector<40x1xi32>
    %57 = arith.ori %52, %56 : vector<40x1xi1>
    %cst_23 = arith.constant -3.40282347E+38 : f32
    %58 = vector.shape_cast %57 : vector<40x1xi1> to vector<40x1xi1>
    %59 = vector.broadcast %58 : vector<40x1xi1> to vector<40x4xi1>
    %60 = vector.broadcast %cst_23 : f32 to vector<40x4xf32>
    %61 = arith.select %59, %60, %48 : vector<40x4xi1>, vector<40x4xf32>
    %62 = vector.extract_strided_slice %3 {offsets = [160, 0], sizes = [40, 4], strides = [1, 1]} : vector<360x4xf32> to vector<40x4xf32>
    %c1_i32_24 = arith.constant 1 : i32
    %63 = vector.broadcast %c1_i32_24 : i32 to vector<40x1xi32>
    %64 = arith.addi %4, %63 : vector<40x1xi32>
    %c16_i32_25 = arith.constant 16 : i32
    %65 = vector.broadcast %c16_i32_25 : i32 to vector<40x1xi32>
    %66 = arith.cmpi sge, %64, %65 : vector<40x1xi32>
    %c1_i32_26 = arith.constant 1 : i32
    %67 = vector.broadcast %c1_i32_26 : i32 to vector<40x1xi32>
    %68 = arith.addi %5, %67 : vector<40x1xi32>
    %c16_i32_27 = arith.constant 16 : i32
    %69 = vector.broadcast %c16_i32_27 : i32 to vector<40x1xi32>
    %70 = arith.cmpi sge, %68, %69 : vector<40x1xi32>
    %71 = arith.ori %66, %70 : vector<40x1xi1>
    %cst_28 = arith.constant -3.40282347E+38 : f32
    %72 = vector.shape_cast %71 : vector<40x1xi1> to vector<40x1xi1>
    %73 = vector.broadcast %72 : vector<40x1xi1> to vector<40x4xi1>
    %74 = vector.broadcast %cst_28 : f32 to vector<40x4xf32>
    %75 = arith.select %73, %74, %62 : vector<40x4xi1>, vector<40x4xf32>
    %76 = vector.extract_strided_slice %3 {offsets = [200, 0], sizes = [40, 4], strides = [1, 1]} : vector<360x4xf32> to vector<40x4xf32>
    %c1_i32_29 = arith.constant 1 : i32
    %77 = vector.broadcast %c1_i32_29 : i32 to vector<40x1xi32>
    %78 = arith.addi %4, %77 : vector<40x1xi32>
    %c16_i32_30 = arith.constant 16 : i32
    %79 = vector.broadcast %c16_i32_30 : i32 to vector<40x1xi32>
    %80 = arith.cmpi sge, %78, %79 : vector<40x1xi32>
    %c2_i32_31 = arith.constant 2 : i32
    %81 = vector.broadcast %c2_i32_31 : i32 to vector<40x1xi32>
    %82 = arith.addi %5, %81 : vector<40x1xi32>
    %c16_i32_32 = arith.constant 16 : i32
    %83 = vector.broadcast %c16_i32_32 : i32 to vector<40x1xi32>
    %84 = arith.cmpi sge, %82, %83 : vector<40x1xi32>
    %85 = arith.ori %80, %84 : vector<40x1xi1>
    %cst_33 = arith.constant -3.40282347E+38 : f32
    %86 = vector.shape_cast %85 : vector<40x1xi1> to vector<40x1xi1>
    %87 = vector.broadcast %86 : vector<40x1xi1> to vector<40x4xi1>
    %88 = vector.broadcast %cst_33 : f32 to vector<40x4xf32>
    %89 = arith.select %87, %88, %76 : vector<40x4xi1>, vector<40x4xf32>
    %90 = vector.extract_strided_slice %3 {offsets = [240, 0], sizes = [40, 4], strides = [1, 1]} : vector<360x4xf32> to vector<40x4xf32>
    %c2_i32_34 = arith.constant 2 : i32
    %91 = vector.broadcast %c2_i32_34 : i32 to vector<40x1xi32>
    %92 = arith.addi %4, %91 : vector<40x1xi32>
    %c16_i32_35 = arith.constant 16 : i32
    %93 = vector.broadcast %c16_i32_35 : i32 to vector<40x1xi32>
    %94 = arith.cmpi sge, %92, %93 : vector<40x1xi32>
    %c0_i32_36 = arith.constant 0 : i32
    %95 = vector.broadcast %c0_i32_36 : i32 to vector<40x1xi32>
    %96 = arith.addi %5, %95 : vector<40x1xi32>
    %c16_i32_37 = arith.constant 16 : i32
    %97 = vector.broadcast %c16_i32_37 : i32 to vector<40x1xi32>
    %98 = arith.cmpi sge, %96, %97 : vector<40x1xi32>
    %99 = arith.ori %94, %98 : vector<40x1xi1>
    %cst_38 = arith.constant -3.40282347E+38 : f32
    %100 = vector.shape_cast %99 : vector<40x1xi1> to vector<40x1xi1>
    %101 = vector.broadcast %100 : vector<40x1xi1> to vector<40x4xi1>
    %102 = vector.broadcast %cst_38 : f32 to vector<40x4xf32>
    %103 = arith.select %101, %102, %90 : vector<40x4xi1>, vector<40x4xf32>
    %104 = vector.extract_strided_slice %3 {offsets = [280, 0], sizes = [40, 4], strides = [1, 1]} : vector<360x4xf32> to vector<40x4xf32>
    %c2_i32_39 = arith.constant 2 : i32
    %105 = vector.broadcast %c2_i32_39 : i32 to vector<40x1xi32>
    %106 = arith.addi %4, %105 : vector<40x1xi32>
    %c16_i32_40 = arith.constant 16 : i32
    %107 = vector.broadcast %c16_i32_40 : i32 to vector<40x1xi32>
    %108 = arith.cmpi sge, %106, %107 : vector<40x1xi32>
    %c1_i32_41 = arith.constant 1 : i32
    %109 = vector.broadcast %c1_i32_41 : i32 to vector<40x1xi32>
    %110 = arith.addi %5, %109 : vector<40x1xi32>
    %c16_i32_42 = arith.constant 16 : i32
    %111 = vector.broadcast %c16_i32_42 : i32 to vector<40x1xi32>
    %112 = arith.cmpi sge, %110, %111 : vector<40x1xi32>
    %113 = arith.ori %108, %112 : vector<40x1xi1>
    %cst_43 = arith.constant -3.40282347E+38 : f32
    %114 = vector.shape_cast %113 : vector<40x1xi1> to vector<40x1xi1>
    %115 = vector.broadcast %114 : vector<40x1xi1> to vector<40x4xi1>
    %116 = vector.broadcast %cst_43 : f32 to vector<40x4xf32>
    %117 = arith.select %115, %116, %104 : vector<40x4xi1>, vector<40x4xf32>
    %118 = vector.extract_strided_slice %3 {offsets = [320, 0], sizes = [40, 4], strides = [1, 1]} : vector<360x4xf32> to vector<40x4xf32>
    %c2_i32_44 = arith.constant 2 : i32
    %119 = vector.broadcast %c2_i32_44 : i32 to vector<40x1xi32>
    %120 = arith.addi %4, %119 : vector<40x1xi32>
    %c16_i32_45 = arith.constant 16 : i32
    %121 = vector.broadcast %c16_i32_45 : i32 to vector<40x1xi32>
    %122 = arith.cmpi sge, %120, %121 : vector<40x1xi32>
    %c2_i32_46 = arith.constant 2 : i32
    %123 = vector.broadcast %c2_i32_46 : i32 to vector<40x1xi32>
    %124 = arith.addi %5, %123 : vector<40x1xi32>
    %c16_i32_47 = arith.constant 16 : i32
    %125 = vector.broadcast %c16_i32_47 : i32 to vector<40x1xi32>
    %126 = arith.cmpi sge, %124, %125 : vector<40x1xi32>
    %127 = arith.ori %122, %126 : vector<40x1xi1>
    %cst_48 = arith.constant -3.40282347E+38 : f32
    %128 = vector.shape_cast %127 : vector<40x1xi1> to vector<40x1xi1>
    %129 = vector.broadcast %128 : vector<40x1xi1> to vector<40x4xi1>
    %130 = vector.broadcast %cst_48 : f32 to vector<40x4xf32>
    %131 = arith.select %129, %130, %118 : vector<40x4xi1>, vector<40x4xf32>
    %132 = arith.maximumf %19, %33 : vector<40x4xf32>
    %133 = arith.maximumf %132, %47 : vector<40x4xf32>
    %134 = arith.maximumf %133, %61 : vector<40x4xf32>
    %135 = arith.maximumf %134, %75 : vector<40x4xf32>
    %136 = arith.maximumf %135, %89 : vector<40x4xf32>
    %137 = arith.maximumf %136, %103 : vector<40x4xf32>
    %138 = arith.maximumf %137, %117 : vector<40x4xf32>
    %139 = arith.maximumf %138, %131 : vector<40x4xf32>
    %cst_49 = arith.constant 0.000000e+00 : f32
    %140 = vector.broadcast %cst_49 : f32 to vector<40x4xf32>
    %cst_50 = arith.constant 0.000000e+00 : f32
    %141 = vector.broadcast %cst_50 : f32 to vector<40x4xf32>
    %142 = arith.subf %19, %139 : vector<40x4xf32>
    %143 = math.exp %142 : vector<40x4xf32>
    %144 = arith.addf %141, %143 : vector<40x4xf32>
    %145 = vector.extract_strided_slice %0 {offsets = [0, 0, 0], sizes = [1, 40, 4], strides = [1, 1, 1]} : vector<9x40x4xf32> to vector<1x40x4xf32>
    %146 = vector.shape_cast %145 : vector<1x40x4xf32> to vector<40x4xf32>
    %147 = arith.mulf %146, %143 : vector<40x4xf32>
    %148 = arith.addf %140, %147 : vector<40x4xf32>
    %149 = arith.subf %33, %139 : vector<40x4xf32>
    %150 = math.exp %149 : vector<40x4xf32>
    %151 = arith.addf %144, %150 : vector<40x4xf32>
    %152 = vector.extract_strided_slice %0 {offsets = [1, 0, 0], sizes = [1, 40, 4], strides = [1, 1, 1]} : vector<9x40x4xf32> to vector<1x40x4xf32>
    %153 = vector.shape_cast %152 : vector<1x40x4xf32> to vector<40x4xf32>
    %154 = arith.mulf %153, %150 : vector<40x4xf32>
    %155 = arith.addf %148, %154 : vector<40x4xf32>
    %156 = arith.subf %47, %139 : vector<40x4xf32>
    %157 = math.exp %156 : vector<40x4xf32>
    %158 = arith.addf %151, %157 : vector<40x4xf32>
    %159 = vector.extract_strided_slice %0 {offsets = [2, 0, 0], sizes = [1, 40, 4], strides = [1, 1, 1]} : vector<9x40x4xf32> to vector<1x40x4xf32>
    %160 = vector.shape_cast %159 : vector<1x40x4xf32> to vector<40x4xf32>
    %161 = arith.mulf %160, %157 : vector<40x4xf32>
    %162 = arith.addf %155, %161 : vector<40x4xf32>
    %163 = arith.subf %61, %139 : vector<40x4xf32>
    %164 = math.exp %163 : vector<40x4xf32>
    %165 = arith.addf %158, %164 : vector<40x4xf32>
    %166 = vector.extract_strided_slice %0 {offsets = [3, 0, 0], sizes = [1, 40, 4], strides = [1, 1, 1]} : vector<9x40x4xf32> to vector<1x40x4xf32>
    %167 = vector.shape_cast %166 : vector<1x40x4xf32> to vector<40x4xf32>
    %168 = arith.mulf %167, %164 : vector<40x4xf32>
    %169 = arith.addf %162, %168 : vector<40x4xf32>
    %170 = arith.subf %75, %139 : vector<40x4xf32>
    %171 = math.exp %170 : vector<40x4xf32>
    %172 = arith.addf %165, %171 : vector<40x4xf32>
    %173 = vector.extract_strided_slice %0 {offsets = [4, 0, 0], sizes = [1, 40, 4], strides = [1, 1, 1]} : vector<9x40x4xf32> to vector<1x40x4xf32>
    %174 = vector.shape_cast %173 : vector<1x40x4xf32> to vector<40x4xf32>
    %175 = arith.mulf %174, %171 : vector<40x4xf32>
    %176 = arith.addf %169, %175 : vector<40x4xf32>
    %177 = arith.subf %89, %139 : vector<40x4xf32>
    %178 = math.exp %177 : vector<40x4xf32>
    %179 = arith.addf %172, %178 : vector<40x4xf32>
    %180 = vector.extract_strided_slice %0 {offsets = [5, 0, 0], sizes = [1, 40, 4], strides = [1, 1, 1]} : vector<9x40x4xf32> to vector<1x40x4xf32>
    %181 = vector.shape_cast %180 : vector<1x40x4xf32> to vector<40x4xf32>
    %182 = arith.mulf %181, %178 : vector<40x4xf32>
    %183 = arith.addf %176, %182 : vector<40x4xf32>
    %184 = arith.subf %103, %139 : vector<40x4xf32>
    %185 = math.exp %184 : vector<40x4xf32>
    %186 = arith.addf %179, %185 : vector<40x4xf32>
    %187 = vector.extract_strided_slice %0 {offsets = [6, 0, 0], sizes = [1, 40, 4], strides = [1, 1, 1]} : vector<9x40x4xf32> to vector<1x40x4xf32>
    %188 = vector.shape_cast %187 : vector<1x40x4xf32> to vector<40x4xf32>
    %189 = arith.mulf %188, %185 : vector<40x4xf32>
    %190 = arith.addf %183, %189 : vector<40x4xf32>
    %191 = arith.subf %117, %139 : vector<40x4xf32>
    %192 = math.exp %191 : vector<40x4xf32>
    %193 = arith.addf %186, %192 : vector<40x4xf32>
    %194 = vector.extract_strided_slice %0 {offsets = [7, 0, 0], sizes = [1, 40, 4], strides = [1, 1, 1]} : vector<9x40x4xf32> to vector<1x40x4xf32>
    %195 = vector.shape_cast %194 : vector<1x40x4xf32> to vector<40x4xf32>
    %196 = arith.mulf %195, %192 : vector<40x4xf32>
    %197 = arith.addf %190, %196 : vector<40x4xf32>
    %198 = arith.subf %131, %139 : vector<40x4xf32>
    %199 = math.exp %198 : vector<40x4xf32>
    %200 = arith.addf %193, %199 : vector<40x4xf32>
    %201 = vector.extract_strided_slice %0 {offsets = [8, 0, 0], sizes = [1, 40, 4], strides = [1, 1, 1]} : vector<9x40x4xf32> to vector<1x40x4xf32>
    %202 = vector.shape_cast %201 : vector<1x40x4xf32> to vector<40x4xf32>
    %203 = arith.mulf %202, %199 : vector<40x4xf32>
    %204 = arith.addf %197, %203 : vector<40x4xf32>
    %205 = tpu.reciprocal %200 : vector<40x4xf32> -> vector<40x4xf32>
    %206 = arith.mulf %204, %205 : vector<40x4xf32>
    %c0_51 = arith.constant 0 : index
    %c0_52 = arith.constant 0 : index
    %207 = vector.load %arg5[%c0_51, %c0_52] : memref<40x4xf32, #tpu.memory_space<vmem>>, vector<40x4xf32>
    tpu.vector_store %arg5[%c0_51, %c0_52], %206 {strides = array<i32>} : memref<40x4xf32, #tpu.memory_space<vmem>>, vector<40x4xf32>,
    return
  }
  func.func @transform_0(%arg0: i32) -> (i32, i32, i32) {
    %c0_i32 = arith.constant 0 : i32
    %c0_i32_0 = arith.constant 0 : i32
    %c0_i32_1 = arith.constant 0 : i32
    return %c0_i32, %arg0, %c0_i32_0 : i32, i32, i32
  }
  func.func @transform_1(%arg0: i32) -> (i32, i32) {
    %c0_i32 = arith.constant 0 : i32
    %c0_i32_0 = arith.constant 0 : i32
    %c0_i32_1 = arith.constant 0 : i32
    return %c0_i32, %c0_i32_0 : i32, i32
  }
  func.func @transform_2(%arg0: i32) -> (i32, i32) {
    %c0_i32 = arith.constant 0 : i32
    %c0_i32_0 = arith.constant 0 : i32
    return %arg0, %c0_i32 : i32, i32
  }
  func.func @transform_3(%arg0: i32) -> (i32, i32) {
    %c0_i32 = arith.constant 0 : i32
    %c0_i32_0 = arith.constant 0 : i32
    return %arg0, %c0_i32 : i32, i32
  }
  func.func @transform_4(%arg0: i32) -> (i32, i32) {
    %c0_i32 = arith.constant 0 : i32
    %c0_i32_0 = arith.constant 0 : i32
    return %arg0, %c0_i32 : i32, i32
  }
}

module attributes {stable_mosaic.version = 11 : i64} {
  func.func @kernel(%arg0: i32, %arg1: memref<9x40x4xf32, #tpu.memory_space<vmem>>, %arg2: memref<4x4xf32, #tpu.memory_space<vmem>>, %arg3: memref<40x1xi32, #tpu.memory_space<vmem>>, %arg4: memref<40x1xi32, #tpu.memory_space<vmem>>, %arg5: memref<40x4xf32, #tpu.memory_space<vmem>>) attributes {dimension_semantics = [#tpu.dimension_semantics<parallel>], iteration_bounds = array<i64: 2>, scalar_prefetch = 0 : i64, scratch_operands = 0 : i64, tpu.core_type = #tpu.core_type<tc>, window_params = [{transform_indices = @transform_0, window_bounds = array<i64: 9, 40, 4>}, {pipeline_mode = #tpu.pipeline_mode<synchronous>, transform_indices = @transform_1, window_bounds = array<i64: 4, 4>}, {transform_indices = @transform_2, window_bounds = array<i64: 40, 1>}, {transform_indices = @transform_3, window_bounds = array<i64: 40, 1>}, {transform_indices = @transform_4, window_bounds = array<i64: 40, 4>}]} {
    %c0 = arith.constant 0 : index
    %c0_0 = arith.constant 0 : index
    %c0_1 = arith.constant 0 : index
    %0 = vector.load %arg1[%c0, %c0_0, %c0_1] : memref<9x40x4xf32, #tpu.memory_space<vmem>>, vector<9x40x4xf32>
    %c0_2 = arith.constant 0 : index
    %c0_3 = arith.constant 0 : index
    %1 = vector.load %arg2[%c0_2, %c0_3] : memref<4x4xf32, #tpu.memory_space<vmem>>, vector<4x4xf32>
    %2 = vector.shape_cast %0 : vector<9x40x4xf32> to vector<360x4xf32>
    %cst = arith.constant dense<0.000000e+00> : vector<360x4xf32>
    %3 = tpu.matmul %2, %1, %cst {dimension_numbers = #tpu.dot_dimension_numbers<[1], [0], [0], [1], [0, 0, 1, 1], [], []>} : vector<360x4xf32>, vector<4x4xf32>, vector<360x4xf32> -> vector<360x4xf32>
    %c0_4 = arith.constant 0 : index
    %c0_5 = arith.constant 0 : index
    %4 = vector.load %arg3[%c0_4, %c0_5] : memref<40x1xi32, #tpu.memory_space<vmem>>, vector<40x1xi32>
    %c0_6 = arith.constant 0 : index
    %c0_7 = arith.constant 0 : index
    %5 = vector.load %arg4[%c0_6, %c0_7] : memref<40x1xi32, #tpu.memory_space<vmem>>, vector<40x1xi32>
    %6 = vector.extract_strided_slice %3 {offsets = [0, 0], sizes = [40, 4], strides = [1, 1]} : vector<360x4xf32> to vector<40x4xf32>
    %c0_i32 = arith.constant 0 : i32
    %7 = vector.broadcast %c0_i32 : i32 to vector<40x1xi32>
    %8 = arith.addi %4, %7 : vector<40x1xi32>
    %c16_i32 = arith.constant 16 : i32
    %9 = vector.broadcast %c16_i32 : i32 to vector<40x1xi32>
    %10 = arith.cmpi sge, %8, %9 : vector<40x1xi32>
    %c0_i32_8 = arith.constant 0 : i32
    %11 = vector.broadcast %c0_i32_8 : i32 to vector<40x1xi32>
    %12 = arith.addi %5, %11 : vector<40x1xi32>
    %c16_i32_9 = arith.constant 16 : i32
    %13 = vector.broadcast %c16_i32_9 : i32 to vector<40x1xi32>
    %14 = arith.cmpi sge, %12, %13 : vector<40x1xi32>
    %15 = arith.ori %10, %14 : vector<40x1xi1>
    %cst_10 = arith.constant -3.40282347E+38 : f32
    %16 = vector.shape_cast %15 : vector<40x1xi1> to vector<40x1xi1>
    %17 = vector.broadcast %16 : vector<40x1xi1> to vector<40x4xi1>
    %18 = vector.broadcast %cst_10 : f32 to vector<40x4xf32>
    %19 = arith.select %17, %18, %6 : vector<40x4xi1>, vector<40x4xf32>
    %20 = vector.extract_strided_slice %3 {offsets = [40, 0], sizes = [40, 4], strides = [1, 1]} : vector<360x4xf32> to vector<40x4xf32>
    %c0_i32_11 = arith.constant 0 : i32
    %21 = vector.broadcast %c0_i32_11 : i32 to vector<40x1xi32>
    %22 = arith.addi %4, %21 : vector<40x1xi32>
    %c16_i32_12 = arith.constant 16 : i32
    %23 = vector.broadcast %c16_i32_12 : i32 to vector<40x1xi32>
    %24 = arith.cmpi sge, %22, %23 : vector<40x1xi32>
    %c1_i32 = arith.constant 1 : i32
    %25 = vector.broadcast %c1_i32 : i32 to vector<40x1xi32>
    %26 = arith.addi %5, %25 : vector<40x1xi32>
    %c16_i32_13 = arith.constant 16 : i32
    %27 = vector.broadcast %c16_i32_13 : i32 to vector<40x1xi32>
    %28 = arith.cmpi sge, %26, %27 : vector<40x1xi32>
    %29 = arith.ori %24, %28 : vector<40x1xi1>
    %cst_14 = arith.constant -3.40282347E+38 : f32
    %30 = vector.shape_cast %29 : vector<40x1xi1> to vector<40x1xi1>
    %31 = vector.broadcast %30 : vector<40x1xi1> to vector<40x4xi1>
    %32 = vector.broadcast %cst_14 : f32 to vector<40x4xf32>
    %33 = arith.select %31, %32, %20 : vector<40x4xi1>, vector<40x4xf32>
    %34 = vector.extract_strided_slice %3 {offsets = [80, 0], sizes = [40, 4], strides = [1, 1]} : vector<360x4xf32> to vector<40x4xf32>
    %c0_i32_15 = arith.constant 0 : i32
    %35 = vector.broadcast %c0_i32_15 : i32 to vector<40x1xi32>
    %36 = arith.addi %4, %35 : vector<40x1xi32>
    %c16_i32_16 = arith.constant 16 : i32
    %37 = vector.broadcast %c16_i32_16 : i32 to vector<40x1xi32>
    %38 = arith.cmpi sge, %36, %37 : vector<40x1xi32>
    %c2_i32 = arith.constant 2 : i32
    %39 = vector.broadcast %c2_i32 : i32 to vector<40x1xi32>
    %40 = arith.addi %5, %39 : vector<40x1xi32>
    %c16_i32_17 = arith.constant 16 : i32
    %41 = vector.broadcast %c16_i32_17 : i32 to vector<40x1xi32>
    %42 = arith.cmpi sge, %40, %41 : vector<40x1xi32>
    %43 = arith.ori %38, %42 : vector<40x1xi1>
    %cst_18 = arith.constant -3.40282347E+38 : f32
    %44 = vector.shape_cast %43 : vector<40x1xi1> to vector<40x1xi1>
    %45 = vector.broadcast %44 : vector<40x1xi1> to vector<40x4xi1>
    %46 = vector.broadcast %cst_18 : f32 to vector<40x4xf32>
    %47 = arith.select %45, %46, %34 : vector<40x4xi1>, vector<40x4xf32>
    %48 = vector.extract_strided_slice %3 {offsets = [120, 0], sizes = [40, 4], strides = [1, 1]} : vector<360x4xf32> to vector<40x4xf32>
    %c1_i32_19 = arith.constant 1 : i32
    %49 = vector.broadcast %c1_i32_19 : i32 to vector<40x1xi32>
    %50 = arith.addi %4, %49 : vector<40x1xi32>
    %c16_i32_20 = arith.constant 16 : i32
    %51 = vector.broadcast %c16_i32_20 : i32 to vector<40x1xi32>
    %52 = arith.cmpi sge, %50, %51 : vector<40x1xi32>
    %c0_i32_21 = arith.constant 0 : i32
    %53 = vector.broadcast %c0_i32_21 : i32 to vector<40x1xi32>
    %54 = arith.addi %5, %53 : vector<40x1xi32>
    %c16_i32_22 = arith.constant 16 : i32
    %55 = vector.broadcast %c16_i32_22 : i32 to vector<40x1xi32>
    %56 = arith.cmpi sge, %54, %55 : vector<40x1xi32>
    %57 = arith.ori %52, %56 : vector<40x1xi1>
    %cst_23 = arith.constant -3.40282347E+38 : f32
    %58 = vector.shape_cast %57 : vector<40x1xi1> to vector<40x1xi1>
    %59 = vector.broadcast %58 : vector<40x1xi1> to vector<40x4xi1>
    %60 = vector.broadcast %cst_23 : f32 to vector<40x4xf32>
    %61 = arith.select %59, %60, %48 : vector<40x4xi1>, vector<40x4xf32>
    %62 = vector.extract_strided_slice %3 {offsets = [160, 0], sizes = [40, 4], strides = [1, 1]} : vector<360x4xf32> to vector<40x4xf32>
    %c1_i32_24 = arith.constant 1 : i32
    %63 = vector.broadcast %c1_i32_24 : i32 to vector<40x1xi32>
    %64 = arith.addi %4, %63 : vector<40x1xi32>
    %c16_i32_25 = arith.constant 16 : i32
    %65 = vector.broadcast %c16_i32_25 : i32 to vector<40x1xi32>
    %66 = arith.cmpi sge, %64, %65 : vector<40x1xi32>
    %c1_i32_26 = arith.constant 1 : i32
    %67 = vector.broadcast %c1_i32_26 : i32 to vector<40x1xi32>
    %68 = arith.addi %5, %67 : vector<40x1xi32>
    %c16_i32_27 = arith.constant 16 : i32
    %69 = vector.broadcast %c16_i32_27 : i32 to vector<40x1xi32>
    %70 = arith.cmpi sge, %68, %69 : vector<40x1xi32>
    %71 = arith.ori %66, %70 : vector<40x1xi1>
    %cst_28 = arith.constant -3.40282347E+38 : f32
    %72 = vector.shape_cast %71 : vector<40x1xi1> to vector<40x1xi1>
    %73 = vector.broadcast %72 : vector<40x1xi1> to vector<40x4xi1>
    %74 = vector.broadcast %cst_28 : f32 to vector<40x4xf32>
    %75 = arith.select %73, %74, %62 : vector<40x4xi1>, vector<40x4xf32>
    %76 = vector.extract_strided_slice %3 {offsets = [200, 0], sizes = [40, 4], strides = [1, 1]} : vector<360x4xf32> to vector<40x4xf32>
    %c1_i32_29 = arith.constant 1 : i32
    %77 = vector.broadcast %c1_i32_29 : i32 to vector<40x1xi32>
    %78 = arith.addi %4, %77 : vector<40x1xi32>
    %c16_i32_30 = arith.constant 16 : i32
    %79 = vector.broadcast %c16_i32_30 : i32 to vector<40x1xi32>
    %80 = arith.cmpi sge, %78, %79 : vector<40x1xi32>
    %c2_i32_31 = arith.constant 2 : i32
    %81 = vector.broadcast %c2_i32_31 : i32 to vector<40x1xi32>
    %82 = arith.addi %5, %81 : vector<40x1xi32>
    %c16_i32_32 = arith.constant 16 : i32
    %83 = vector.broadcast %c16_i32_32 : i32 to vector<40x1xi32>
    %84 = arith.cmpi sge, %82, %83 : vector<40x1xi32>
    %85 = arith.ori %80, %84 : vector<40x1xi1>
    %cst_33 = arith.constant -3.40282347E+38 : f32
    %86 = vector.shape_cast %85 : vector<40x1xi1> to vector<40x1xi1>
    %87 = vector.broadcast %86 : vector<40x1xi1> to vector<40x4xi1>
    %88 = vector.broadcast %cst_33 : f32 to vector<40x4xf32>
    %89 = arith.select %87, %88, %76 : vector<40x4xi1>, vector<40x4xf32>
    %90 = vector.extract_strided_slice %3 {offsets = [240, 0], sizes = [40, 4], strides = [1, 1]} : vector<360x4xf32> to vector<40x4xf32>
    %c2_i32_34 = arith.constant 2 : i32
    %91 = vector.broadcast %c2_i32_34 : i32 to vector<40x1xi32>
    %92 = arith.addi %4, %91 : vector<40x1xi32>
    %c16_i32_35 = arith.constant 16 : i32
    %93 = vector.broadcast %c16_i32_35 : i32 to vector<40x1xi32>
    %94 = arith.cmpi sge, %92, %93 : vector<40x1xi32>
    %c0_i32_36 = arith.constant 0 : i32
    %95 = vector.broadcast %c0_i32_36 : i32 to vector<40x1xi32>
    %96 = arith.addi %5, %95 : vector<40x1xi32>
    %c16_i32_37 = arith.constant 16 : i32
    %97 = vector.broadcast %c16_i32_37 : i32 to vector<40x1xi32>
    %98 = arith.cmpi sge, %96, %97 : vector<40x1xi32>
    %99 = arith.ori %94, %98 : vector<40x1xi1>
    %cst_38 = arith.constant -3.40282347E+38 : f32
    %100 = vector.shape_cast %99 : vector<40x1xi1> to vector<40x1xi1>
    %101 = vector.broadcast %100 : vector<40x1xi1> to vector<40x4xi1>
    %102 = vector.broadcast %cst_38 : f32 to vector<40x4xf32>
    %103 = arith.select %101, %102, %90 : vector<40x4xi1>, vector<40x4xf32>
    %104 = vector.extract_strided_slice %3 {offsets = [280, 0], sizes = [40, 4], strides = [1, 1]} : vector<360x4xf32> to vector<40x4xf32>
    %c2_i32_39 = arith.constant 2 : i32
    %105 = vector.broadcast %c2_i32_39 : i32 to vector<40x1xi32>
    %106 = arith.addi %4, %105 : vector<40x1xi32>
    %c16_i32_40 = arith.constant 16 : i32
    %107 = vector.broadcast %c16_i32_40 : i32 to vector<40x1xi32>
    %108 = arith.cmpi sge, %106, %107 : vector<40x1xi32>
    %c1_i32_41 = arith.constant 1 : i32
    %109 = vector.broadcast %c1_i32_41 : i32 to vector<40x1xi32>
    %110 = arith.addi %5, %109 : vector<40x1xi32>
    %c16_i32_42 = arith.constant 16 : i32
    %111 = vector.broadcast %c16_i32_42 : i32 to vector<40x1xi32>
    %112 = arith.cmpi sge, %110, %111 : vector<40x1xi32>
    %113 = arith.ori %108, %112 : vector<40x1xi1>
    %cst_43 = arith.constant -3.40282347E+38 : f32
    %114 = vector.shape_cast %113 : vector<40x1xi1> to vector<40x1xi1>
    %115 = vector.broadcast %114 : vector<40x1xi1> to vector<40x4xi1>
    %116 = vector.broadcast %cst_43 : f32 to vector<40x4xf32>
    %117 = arith.select %115, %116, %104 : vector<40x4xi1>, vector<40x4xf32>
    %118 = vector.extract_strided_slice %3 {offsets = [320, 0], sizes = [40, 4], strides = [1, 1]} : vector<360x4xf32> to vector<40x4xf32>
    %c2_i32_44 = arith.constant 2 : i32
    %119 = vector.broadcast %c2_i32_44 : i32 to vector<40x1xi32>
    %120 = arith.addi %4, %119 : vector<40x1xi32>
    %c16_i32_45 = arith.constant 16 : i32
    %121 = vector.broadcast %c16_i32_45 : i32 to vector<40x1xi32>
    %122 = arith.cmpi sge, %120, %121 : vector<40x1xi32>
    %c2_i32_46 = arith.constant 2 : i32
    %123 = vector.broadcast %c2_i32_46 : i32 to vector<40x1xi32>
    %124 = arith.addi %5, %123 : vector<40x1xi32>
    %c16_i32_47 = arith.constant 16 : i32
    %125 = vector.broadcast %c16_i32_47 : i32 to vector<40x1xi32>
    %126 = arith.cmpi sge, %124, %125 : vector<40x1xi32>
    %127 = arith.ori %122, %126 : vector<40x1xi1>
    %cst_48 = arith.constant -3.40282347E+38 : f32
    %128 = vector.shape_cast %127 : vector<40x1xi1> to vector<40x1xi1>
    %129 = vector.broadcast %128 : vector<40x1xi1> to vector<40x4xi1>
    %130 = vector.broadcast %cst_48 : f32 to vector<40x4xf32>
    %131 = arith.select %129, %130, %118 : vector<40x4xi1>, vector<40x4xf32>
    %132 = arith.maximumf %19, %33 : vector<40x4xf32>
    %133 = arith.maximumf %132, %47 : vector<40x4xf32>
    %134 = arith.maximumf %133, %61 : vector<40x4xf32>
    %135 = arith.maximumf %134, %75 : vector<40x4xf32>
    %136 = arith.maximumf %135, %89 : vector<40x4xf32>
    %137 = arith.maximumf %136, %103 : vector<40x4xf32>
    %138 = arith.maximumf %137, %117 : vector<40x4xf32>
    %139 = arith.maximumf %138, %131 : vector<40x4xf32>
    %cst_49 = arith.constant 0.000000e+00 : f32
    %140 = vector.broadcast %cst_49 : f32 to vector<40x4xf32>
    %cst_50 = arith.constant 0.000000e+00 : f32
    %141 = vector.broadcast %cst_50 : f32 to vector<40x4xf32>
    %142 = arith.subf %19, %139 : vector<40x4xf32>
    %143 = math.exp %142 : vector<40x4xf32>
    %144 = arith.addf %141, %143 : vector<40x4xf32>
    %145 = vector.extract_strided_slice %0 {offsets = [0, 0, 0], sizes = [1, 40, 4], strides = [1, 1, 1]} : vector<9x40x4xf32> to vector<1x40x4xf32>
    %146 = vector.shape_cast %145 : vector<1x40x4xf32> to vector<40x4xf32>
    %147 = arith.mulf %146, %143 : vector<40x4xf32>
    %148 = arith.addf %140, %147 : vector<40x4xf32>
    %149 = arith.subf %33, %139 : vector<40x4xf32>
    %150 = math.exp %149 : vector<40x4xf32>
    %151 = arith.addf %144, %150 : vector<40x4xf32>
    %152 = vector.extract_strided_slice %0 {offsets = [1, 0, 0], sizes = [1, 40, 4], strides = [1, 1, 1]} : vector<9x40x4xf32> to vector<1x40x4xf32>
    %153 = vector.shape_cast %152 : vector<1x40x4xf32> to vector<40x4xf32>
    %154 = arith.mulf %153, %150 : vector<40x4xf32>
    %155 = arith.addf %148, %154 : vector<40x4xf32>
    %156 = arith.subf %47, %139 : vector<40x4xf32>
    %157 = math.exp %156 : vector<40x4xf32>
    %158 = arith.addf %151, %157 : vector<40x4xf32>
    %159 = vector.extract_strided_slice %0 {offsets = [2, 0, 0], sizes = [1, 40, 4], strides = [1, 1, 1]} : vector<9x40x4xf32> to vector<1x40x4xf32>
    %160 = vector.shape_cast %159 : vector<1x40x4xf32> to vector<40x4xf32>
    %161 = arith.mulf %160, %157 : vector<40x4xf32>
    %162 = arith.addf %155, %161 : vector<40x4xf32>
    %163 = arith.subf %61, %139 : vector<40x4xf32>
    %164 = math.exp %163 : vector<40x4xf32>
    %165 = arith.addf %158, %164 : vector<40x4xf32>
    %166 = vector.extract_strided_slice %0 {offsets = [3, 0, 0], sizes = [1, 40, 4], strides = [1, 1, 1]} : vector<9x40x4xf32> to vector<1x40x4xf32>
    %167 = vector.shape_cast %166 : vector<1x40x4xf32> to vector<40x4xf32>
    %168 = arith.mulf %167, %164 : vector<40x4xf32>
    %169 = arith.addf %162, %168 : vector<40x4xf32>
    %170 = arith.subf %75, %139 : vector<40x4xf32>
    %171 = math.exp %170 : vector<40x4xf32>
    %172 = arith.addf %165, %171 : vector<40x4xf32>
    %173 = vector.extract_strided_slice %0 {offsets = [4, 0, 0], sizes = [1, 40, 4], strides = [1, 1, 1]} : vector<9x40x4xf32> to vector<1x40x4xf32>
    %174 = vector.shape_cast %173 : vector<1x40x4xf32> to vector<40x4xf32>
    %175 = arith.mulf %174, %171 : vector<40x4xf32>
    %176 = arith.addf %169, %175 : vector<40x4xf32>
    %177 = arith.subf %89, %139 : vector<40x4xf32>
    %178 = math.exp %177 : vector<40x4xf32>
    %179 = arith.addf %172, %178 : vector<40x4xf32>
    %180 = vector.extract_strided_slice %0 {offsets = [5, 0, 0], sizes = [1, 40, 4], strides = [1, 1, 1]} : vector<9x40x4xf32> to vector<1x40x4xf32>
    %181 = vector.shape_cast %180 : vector<1x40x4xf32> to vector<40x4xf32>
    %182 = arith.mulf %181, %178 : vector<40x4xf32>
    %183 = arith.addf %176, %182 : vector<40x4xf32>
    %184 = arith.subf %103, %139 : vector<40x4xf32>
    %185 = math.exp %184 : vector<40x4xf32>
    %186 = arith.addf %179, %185 : vector<40x4xf32>
    %187 = vector.extract_strided_slice %0 {offsets = [6, 0, 0], sizes = [1, 40, 4], strides = [1, 1, 1]} : vector<9x40x4xf32> to vector<1x40x4xf32>
    %188 = vector.shape_cast %187 : vector<1x40x4xf32> to vector<40x4xf32>
    %189 = arith.mulf %188, %185 : vector<40x4xf32>
    %190 = arith.addf %183, %189 : vector<40x4xf32>
    %191 = arith.subf %117, %139 : vector<40x4xf32>
    %192 = math.exp %191 : vector<40x4xf32>
    %193 = arith.addf %186, %192 : vector<40x4xf32>
    %194 = vector.extract_strided_slice %0 {offsets = [7, 0, 0], sizes = [1, 40, 4], strides = [1, 1, 1]} : vector<9x40x4xf32> to vector<1x40x4xf32>
    %195 = vector.shape_cast %194 : vector<1x40x4xf32> to vector<40x4xf32>
    %196 = arith.mulf %195, %192 : vector<40x4xf32>
    %197 = arith.addf %190, %196 : vector<40x4xf32>
    %198 = arith.subf %131, %139 : vector<40x4xf32>
    %199 = math.exp %198 : vector<40x4xf32>
    %200 = arith.addf %193, %199 : vector<40x4xf32>
    %201 = vector.extract_strided_slice %0 {offsets = [8, 0, 0], sizes = [1, 40, 4], strides = [1, 1, 1]} : vector<9x40x4xf32> to vector<1x40x4xf32>
    %202 = vector.shape_cast %201 : vector<1x40x4xf32> to vector<40x4xf32>
    %203 = arith.mulf %202, %199 : vector<40x4xf32>
    %204 = arith.addf %197, %203 : vector<40x4xf32>
    %205 = tpu.reciprocal %200 : vector<40x4xf32> -> vector<40x4xf32>
    %206 = arith.mulf %204, %205 : vector<40x4xf32>
    %c0_51 = arith.constant 0 : index
    %c0_52 = arith.constant 0 : index
    %207 = vector.load %arg5[%c0_51, %c0_52] : memref<40x4xf32, #tpu.memory_space<vmem>>, vector<40x4xf32>
    tpu.vector_store %arg5[%c0_51, %c0_52], %206 {strides = array<i32>} : memref<40x4xf32, #tpu.memory_space<vmem>>, vector<40x4xf32>,
    return
  }
  func.func @transform_0(%arg0: i32) -> (i32, i32, i32) {
    %c0_i32 = arith.constant 0 : i32
    %c0_i32_0 = arith.constant 0 : i32
    %c0_i32_1 = arith.constant 0 : i32
    return %c0_i32, %arg0, %c0_i32_0 : i32, i32, i32
  }
  func.func @transform_1(%arg0: i32) -> (i32, i32) {
    %c0_i32 = arith.constant 0 : i32
    %c0_i32_0 = arith.constant 0 : i32
    %c0_i32_1 = arith.constant 0 : i32
    return %c0_i32, %c0_i32_0 : i32, i32
  }
  func.func @transform_2(%arg0: i32) -> (i32, i32) {
    %c0_i32 = arith.constant 0 : i32
    %c0_i32_0 = arith.constant 0 : i32
    return %arg0, %c0_i32 : i32, i32
  }
  func.func @transform_3(%arg0: i32) -> (i32, i32) {
    %c0_i32 = arith.constant 0 : i32
    %c0_i32_0 = arith.constant 0 : i32
    return %arg0, %c0_i32 : i32, i32
  }
  func.func @transform_4(%arg0: i32) -> (i32, i32) {
    %c0_i32 = arith.constant 0 : i32
    %c0_i32_0 = arith.constant 0 : i32
    return %arg0, %c0_i32 : i32, i32
  }
}

</mosaic_0001>

<llo_original>
// kernel: tpu_custom_call.1
$region0: #{tpu_custom_call.1}
  #allocation0 [shape = 'u32[]', space=smem, size = 0x4, offset = 0x4, fixed_abs, tag = 'smem constant byte address 0x4 - core index']
  #allocation1 [shape = 'u32[144,128]{1,0:T(1,128)}', space=vmem, size = 0x12000, scoped, tag = 'internal scratch']
  %s0 = inlined_call_operand.vmem [shape: f32[9,80,4], index: 0, kind: input, shape index: {}]
  %s1 = inlined_call_operand.vmem [shape: f32[4,4], index: 1, kind: input, shape index: {}]
  %s2 = inlined_call_operand.vmem [shape: s32[80,1], index: 2, kind: input, shape index: {}]
  %s3 = inlined_call_operand.vmem [shape: s32[80,1], index: 3, kind: input, shape index: {}]
  %s4 = inlined_call_operand.vmem [shape: f32[80,4], index: 4, kind: output, shape index: {}]
  %s5 = sld [smem:[#allocation0]]
  $region87: #{tpu_custom_call.1} parent=0
    _
  %s7 = ssub.s32 1, %s5
  %s8 = scalar_select 0, %s7, %s5
  $region1: #{tpu_custom_call.1} parent=0
    #allocation2 [shape = 'u8[368640]{0}', space=vmem, size = 0x5a000, scoped, tag = 'input window, operand 0']
    loop: start=0, step=1, limit=4
    $region2: #{tpu_custom_call.1} parent=1 // loop_pre_header
      _
    $region3: #{tpu_custom_call.1} parent=1 // loop_header
      %s10 = sphi 0, %s14
      %p11 = scmp.ge.s32.totalorder %s10, 4
      %s20 = sphi 0, %s22
      %s23 = sphi 0, %s20
      %s24 = sphi 0, %s23
      %s40 = sphi 0, %s24
      %s44 = sphi 0, %s44
      %s46 = sphi 0, %s44
      %s47 = sphi 0, %s46
      %s61 = sphi 0, %s47
      %s67 = sphi 0, %s69
      %s70 = sphi 0, %s67
      %s71 = sphi 0, %s70
      %s87 = sphi 0, %s71
      %s93 = sphi 0, %s95
      %s96 = sphi 0, %s93
      %s97 = sphi 0, %s96
      %s113 = sphi 0, %s97
      %s119 = sphi 0, %s121
      %s122 = sphi 0, %s119
      %s123 = sphi 0, %s122
      %s139 = sphi 0, %s123
    $region4: #{tpu_custom_call.1} parent=1 // loop_header_branch
      %13 = sbr.rel (%p11) target = $region8
    $region5: #{tpu_custom_call.1} parent=1 // loop_body
      %s15 = ssub.s32 %s10, 1
      %s16 = ssub.s32 %s10, 2
      %s17 = sadd.s32 %s10, 1
      %s18 = ssub.s32 %s10, %s17
      %p19 = scmp.eq.s32.totalorder %s18, 0
      %s21 = sadd.s32 %s20, 1
      %s22 = scalar_select %p19, %s20, %s21
      %p25 = pneg %p19
      %p26 = scmp.eq.s32.totalorder %s10, 1
      %p27 = por %p25, %p26
      %p28 = scmp.ne.s32.totalorder %s20, %s23
      %p29 = scmp.eq.s32.totalorder %s10, 0
      %p30 = por %p28, %p29
      %p31 = scmp.ne.s32.totalorder %s20, %s23
      %p32 = scmp.eq.s32.totalorder %s15, 1
      %p33 = por %p31, %p32
      %p34 = scmp.ne.s32.totalorder %s23, %s24
      %p35 = scmp.eq.s32.totalorder %s15, 0
      %p36 = por %p34, %p35
      %p37 = scmp.ne.s32.totalorder %s23, %s24
      %p38 = scmp.eq.s32.totalorder %s16, 1
      %p39 = por %p37, %p38
      %p41 = scmp.ne.s32.totalorder %s24, %s40
      %p42 = scmp.eq.s32.totalorder %s16, 0
      %p43 = por %p41, %p42
      %s45 = sadd.s32 %s44, 1
      %p48 = scmp.eq.s32.totalorder %s10, 1
      %p49 = scmp.ne.s32.totalorder %s44, %s46
      %p50 = scmp.eq.s32.totalorder %s10, 0
      %p51 = por %p49, %p50
      %p52 = scmp.ne.s32.totalorder %s44, %s46
      %p53 = scmp.eq.s32.totalorder %s15, 1
      %p54 = por %p52, %p53
      %p55 = scmp.ne.s32.totalorder %s46, %s47
      %p56 = scmp.eq.s32.totalorder %s15, 0
      %p57 = por %p55, %p56
      %p58 = scmp.ne.s32.totalorder %s46, %s47
      %p59 = scmp.eq.s32.totalorder %s16, 1
      %p60 = por %p58, %p59
      %p62 = scmp.ne.s32.totalorder %s47, %s61
      %p63 = scmp.eq.s32.totalorder %s16, 0
      %p64 = por %p62, %p63
      %s65 = ssub.s32 %s10, %s17
      %p66 = scmp.eq.s32.totalorder %s65, 0
      %s68 = sadd.s32 %s67, 1
      %s69 = scalar_select %p66, %s67, %s68
      %p72 = pneg %p66
      %p73 = scmp.eq.s32.totalorder %s10, 1
      %p74 = por %p72, %p73
      %p75 = scmp.ne.s32.totalorder %s67, %s70
      %p76 = scmp.eq.s32.totalorder %s10, 0
      %p77 = por %p75, %p76
      %p78 = scmp.ne.s32.totalorder %s67, %s70
      %p79 = scmp.eq.s32.totalorder %s15, 1
      %p80 = por %p78, %p79
      %p81 = scmp.ne.s32.totalorder %s70, %s71
      %p82 = scmp.eq.s32.totalorder %s15, 0
      %p83 = por %p81, %p82
      %p84 = scmp.ne.s32.totalorder %s70, %s71
      %p85 = scmp.eq.s32.totalorder %s16, 1
      %p86 = por %p84, %p85
      %p88 = scmp.ne.s32.totalorder %s71, %s87
      %p89 = scmp.eq.s32.totalorder %s16, 0
      %p90 = por %p88, %p89
      %s91 = ssub.s32 %s10, %s17
      %p92 = scmp.eq.s32.totalorder %s91, 0
      %s94 = sadd.s32 %s93, 1
      %s95 = scalar_select %p92, %s93, %s94
      %p98 = pneg %p92
      %p99 = scmp.eq.s32.totalorder %s10, 1
      %p100 = por %p98, %p99
      %p101 = scmp.ne.s32.totalorder %s93, %s96
      %p102 = scmp.eq.s32.totalorder %s10, 0
      %p103 = por %p101, %p102
      %p104 = scmp.ne.s32.totalorder %s93, %s96
      %p105 = scmp.eq.s32.totalorder %s15, 1
      %p106 = por %p104, %p105
      %p107 = scmp.ne.s32.totalorder %s96, %s97
      %p108 = scmp.eq.s32.totalorder %s15, 0
      %p109 = por %p107, %p108
      %p110 = scmp.ne.s32.totalorder %s96, %s97
      %p111 = scmp.eq.s32.totalorder %s16, 1
      %p112 = por %p110, %p111
      %p114 = scmp.ne.s32.totalorder %s97, %s113
      %p115 = scmp.eq.s32.totalorder %s16, 0
      %p116 = por %p114, %p115
      %s117 = ssub.s32 %s10, %s17
      %p118 = scmp.eq.s32.totalorder %s117, 0
      %s120 = sadd.s32 %s119, 1
      %s121 = scalar_select %p118, %s119, %s120
      %p124 = pneg %p118
      %p125 = scmp.eq.s32.totalorder %s10, 1
      %p126 = por %p124, %p125
      %p127 = scmp.ne.s32.totalorder %s119, %s122
      %p128 = scmp.eq.s32.totalorder %s10, 0
      %p129 = por %p127, %p128
      %p130 = scmp.ne.s32.totalorder %s119, %s122
      %p131 = scmp.eq.s32.totalorder %s15, 1
      %p132 = por %p130, %p131
      %p133 = scmp.ne.s32.totalorder %s122, %s123
      %p134 = scmp.eq.s32.totalorder %s15, 0
      %p135 = por %p133, %p134
      %p136 = scmp.ne.s32.totalorder %s122, %s123
      %p137 = scmp.eq.s32.totalorder %s16, 1
      %p138 = por %p136, %p137
      %p140 = scmp.ne.s32.totalorder %s123, %s139
      %p141 = scmp.eq.s32.totalorder %s16, 0
      %p142 = por %p140, %p141
      %p143 = scmp.le.s32.totalorder 1, %s10
      %p144 = scmp.lt.s32.totalorder %s10, 3
      %p145 = pnand %p143, %p144
      %p146 = pneg %p145
      // Predicated region
      $region9: #{tpu_custom_call.1} parent=5 // pred_check
        _
      $region10: #{tpu_custom_call.1} parent=5 // pred_check_branch
        %148 = sbr.rel (%p145) target = $region12
      $region11: #{tpu_custom_call.1} parent=5 // pred_region
        %s149 = ssub.s32 %s10, 1
        // Predicated region
        $region13: #{tpu_custom_call.1} parent=11 // pred_check
          %p150 = pneg %p57
        $region14: #{tpu_custom_call.1} parent=11 // pred_check_branch
          %152 = sbr.rel (%p150) target = $region16
        $region15: #{tpu_custom_call.1} parent=11 // pred_region
          _
        $region16: #{tpu_custom_call.1} parent=11 // pred_fallthru
          _
      $region12: #{tpu_custom_call.1} parent=5 // pred_fallthru
        _
      %p153 = scmp.lt.s32.totalorder %s10, 2
      // Predicated region
      $region17: #{tpu_custom_call.1} parent=5 // pred_check
        %p154 = pneg %p153
      $region18: #{tpu_custom_call.1} parent=5 // pred_check_branch
        %156 = sbr.rel (%p154) target = $region20
      $region19: #{tpu_custom_call.1} parent=5 // pred_region
        // Predicated region
        $region21: #{tpu_custom_call.1} parent=19 // pred_check
          %p157 = pneg %p30
        $region22: #{tpu_custom_call.1} parent=19 // pred_check_branch
          %159 = sbr.rel (%p157) target = $region24
        $region23: #{tpu_custom_call.1} parent=19 // pred_region
          %s160 = sand.u32 %s20, 1
          %s161 = sand.u32 %s20, 1
          %s162 = smul.addr %s161, 360
          %s163 = scalar_lea.vmem [#allocation2], %s162
          %s164 = smul.u32 5, %s10
          %s165 = smul.addr %s164, 8
          %s166 = scalar_lea.vmem %s0, %s165
          // Predicated region
          $region25: #{tpu_custom_call.1} parent=23 // pred_check
            _
          $region26: #{tpu_custom_call.1} parent=23 // pred_check_branch
            %168 = sbr.rel (0) target = $region28
          $region27: #{tpu_custom_call.1} parent=23 // pred_region
            // Predicated region
            $region29: #{tpu_custom_call.1} parent=27 // pred_check
              _
            $region30: #{tpu_custom_call.1} parent=27 // pred_check_branch
              %170 = sbr.rel (0) target = $region32
            $region31: #{tpu_custom_call.1} parent=27 // pred_region
              // Predicated region
              $region44: #{tpu_custom_call.1} parent=31 // pred_check
                _
              $region45: #{tpu_custom_call.1} parent=31 // pred_check_branch
                %274 = sbr.rel (0) target = $region47
              $region46: #{tpu_custom_call.1} parent=31 // pred_region
                loop: start=0, step=1, limit=1
                $region48: #{tpu_custom_call.1} parent=46 // loop_pre_header
                  _
                $region49: #{tpu_custom_call.1} parent=46 // loop_header
                  %s276 = sphi 0, %s280
                  %p277 = scmp.ge.s32.totalorder %s276, 1
                  %s281 = sphi %s166, %s166
                  %s282 = sphi %s163, %s163
                $region50: #{tpu_custom_call.1} parent=46 // loop_header_branch
                  %279 = sbr.rel (%p277) target = $region54
                $region51: #{tpu_custom_call.1} parent=46 // loop_body
                  %v283 = vld [vmem:[%s281] sm:$0xff]
                  %284 = vst [vmem:[%s282] sm:$0xff] %v283
                  %v285 = vld [vmem:[%s281 + $0x8] sm:$0xff]
                  %286 = vst [vmem:[%s282 + $0x8] sm:$0xff] %v285
                  %v287 = vld [vmem:[%s281 + $0x10] sm:$0xff]
                  %288 = vst [vmem:[%s282 + $0x10] sm:$0xff] %v287
                  %v289 = vld [vmem:[%s281 + $0x18] sm:$0xff]
                  %290 = vst [vmem:[%s282 + $0x18] sm:$0xff] %v289
                  %v291 = vld [vmem:[%s281 + $0x20] sm:$0xff]
                  %292 = vst [vmem:[%s282 + $0x20] sm:$0xff] %v291
                  %v293 = vld [vmem:[%s281 + $0x50] sm:$0xff]
                  %294 = vst [vmem:[%s282 + $0x28] sm:$0xff] %v293
                  %v295 = vld [vmem:[%s281 + $0x58] sm:$0xff]
                  %296 = vst [vmem:[%s282 + $0x30] sm:$0xff] %v295
                  %v297 = vld [vmem:[%s281 + $0x60] sm:$0xff]
                  %298 = vst [vmem:[%s282 + $0x38] sm:$0xff] %v297
                  %v299 = vld [vmem:[%s281 + $0x68] sm:$0xff]
                  %300 = vst [vmem:[%s282 + $0x40] sm:$0xff] %v299
                  %v301 = vld [vmem:[%s281 + $0x70] sm:$0xff]
                  %302 = vst [vmem:[%s282 + $0x48] sm:$0xff] %v301
                  %v303 = vld [vmem:[%s281 + $0xa0] sm:$0xff]
                  %304 = vst [vmem:[%s282 + $0x50] sm:$0xff] %v303
                  %v305 = vld [vmem:[%s281 + $0xa8] sm:$0xff]
                  %306 = vst [vmem:[%s282 + $0x58] sm:$0xff] %v305
                  %v307 = vld [vmem:[%s281 + $0xb0] sm:$0xff]
                  %308 = vst [vmem:[%s282 + $0x60] sm:$0xff] %v307
                  %v309 = vld [vmem:[%s281 + $0xb8] sm:$0xff]
                  %310 = vst [vmem:[%s282 + $0x68] sm:$0xff] %v309
                  %v311 = vld [vmem:[%s281 + $0xc0] sm:$0xff]
                  %312 = vst [vmem:[%s282 + $0x70] sm:$0xff] %v311
                  %v313 = vld [vmem:[%s281 + $0xf0] sm:$0xff]
                  %314 = vst [vmem:[%s282 + $0x78] sm:$0xff] %v313
                  %v315 = vld [vmem:[%s281 + $0xf8] sm:$0xff]
                  %316 = vst [vmem:[%s282 + $0x80] sm:$0xff] %v315
                  %v317 = vld [vmem:[%s281 + $0x100] sm:$0xff]
                  %318 = vst [vmem:[%s282 + $0x88] sm:$0xff] %v317
                  %v319 = vld [vmem:[%s281 + $0x108] sm:$0xff]
                  %320 = vst [vmem:[%s282 + $0x90] sm:$0xff] %v319
                  %v321 = vld [vmem:[%s281 + $0x110] sm:$0xff]
                  %322 = vst [vmem:[%s282 + $0x98] sm:$0xff] %v321
                  %v323 = vld [vmem:[%s281 + $0x140] sm:$0xff]
                  %324 = vst [vmem:[%s282 + $0xa0] sm:$0xff] %v323
                  %v325 = vld [vmem:[%s281 + $0x148] sm:$0xff]
                  %326 = vst [vmem:[%s282 + $0xa8] sm:$0xff] %v325
                  %v327 = vld [vmem:[%s281 + $0x150] sm:$0xff]
                  %328 = vst [vmem:[%s282 + $0xb0] sm:$0xff] %v327
                  %v329 = vld [vmem:[%s281 + $0x158] sm:$0xff]
                  %330 = vst [vmem:[%s282 + $0xb8] sm:$0xff] %v329
                  %v331 = vld [vmem:[%s281 + $0x160] sm:$0xff]
                  %332 = vst [vmem:[%s282 + $0xc0] sm:$0xff] %v331
                  %v333 = vld [vmem:[%s281 + $0x190] sm:$0xff]
                  %334 = vst [vmem:[%s282 + $0xc8] sm:$0xff] %v333
                  %v335 = vld [vmem:[%s281 + $0x198] sm:$0xff]
                  %336 = vst [vmem:[%s282 + $0xd0] sm:$0xff] %v335
                  %v337 = vld [vmem:[%s281 + $0x1a0] sm:$0xff]
                  %338 = vst [vmem:[%s282 + $0xd8] sm:$0xff] %v337
                  %v339 = vld [vmem:[%s281 + $0x1a8] sm:$0xff]
                  %340 = vst [vmem:[%s282 + $0xe0] sm:$0xff] %v339
                  %v341 = vld [vmem:[%s281 + $0x1b0] sm:$0xff]
                  %342 = vst [vmem:[%s282 + $0xe8] sm:$0xff] %v341
                  %v343 = vld [vmem:[%s281 + $0x1e0] sm:$0xff]
                  %344 = vst [vmem:[%s282 + $0xf0] sm:$0xff] %v343
                  %v345 = vld [vmem:[%s281 + $0x1e8] sm:$0xff]
                  %346 = vst [vmem:[%s282 + $0xf8] sm:$0xff] %v345
                  %v347 = vld [vmem:[%s281 + $0x1f0] sm:$0xff]
                  %348 = vst [vmem:[%s282 + $0x100] sm:$0xff] %v347
                  %v349 = vld [vmem:[%s281 + $0x1f8] sm:$0xff]
                  %350 = vst [vmem:[%s282 + $0x108] sm:$0xff] %v349
                  %v351 = vld [vmem:[%s281 + $0x200] sm:$0xff]
                  %352 = vst [vmem:[%s282 + $0x110] sm:$0xff] %v351
                  %v353 = vld [vmem:[%s281 + $0x230] sm:$0xff]
                  %354 = vst [vmem:[%s282 + $0x118] sm:$0xff] %v353
                  %v355 = vld [vmem:[%s281 + $0x238] sm:$0xff]
                  %356 = vst [vmem:[%s282 + $0x120] sm:$0xff] %v355
                  %v357 = vld [vmem:[%s281 + $0x240] sm:$0xff]
                  %358 = vst [vmem:[%s282 + $0x128] sm:$0xff] %v357
                  %v359 = vld [vmem:[%s281 + $0x248] sm:$0xff]
                  %360 = vst [vmem:[%s282 + $0x130] sm:$0xff] %v359
                  %v361 = vld [vmem:[%s281 + $0x250] sm:$0xff]
                  %362 = vst [vmem:[%s282 + $0x138] sm:$0xff] %v361
                  %v363 = vld [vmem:[%s281 + $0x280] sm:$0xff]
                  %364 = vst [vmem:[%s282 + $0x140] sm:$0xff] %v363
                  %v365 = vld [vmem:[%s281 + $0x288] sm:$0xff]
                  %366 = vst [vmem:[%s282 + $0x148] sm:$0xff] %v365
                  %v367 = vld [vmem:[%s281 + $0x290] sm:$0xff]
                  %368 = vst [vmem:[%s282 + $0x150] sm:$0xff] %v367
                  %v369 = vld [vmem:[%s281 + $0x298] sm:$0xff]
                  %370 = vst [vmem:[%s282 + $0x158] sm:$0xff] %v369
                  %v371 = vld [vmem:[%s281 + $0x2a0] sm:$0xff]
                  %372 = vst [vmem:[%s282 + $0x160] sm:$0xff] %v371
                $region52: #{tpu_custom_call.1} parent=46 // loop_footer
                  %s280 = sadd.s32 1, %s276
                $region53: #{tpu_custom_call.1} parent=46 // loop_footer_branch
                  %275 = sbr.rel target = $region49
                $region54: #{tpu_custom_call.1} parent=46 // loop_exit
                  _
              $region47: #{tpu_custom_call.1} parent=31 // pred_fallthru
                _
              // Predicated region
              $region55: #{tpu_custom_call.1} parent=31 // pred_check
                _
              $region56: #{tpu_custom_call.1} parent=31 // pred_check_branch
                %374 = sbr.rel target = $region58
              $region57: #{tpu_custom_call.1} parent=31 // pred_region
                _
              $region58: #{tpu_custom_call.1} parent=31 // pred_fallthru
                _
            $region32: #{tpu_custom_call.1} parent=27 // pred_fallthru
              _
            // Predicated region
            $region33: #{tpu_custom_call.1} parent=27 // pred_check
              _
            $region34: #{tpu_custom_call.1} parent=27 // pred_check_branch
              %172 = sbr.rel target = $region36
            $region35: #{tpu_custom_call.1} parent=27 // pred_region
              %s174 = ssub.s32 256, 1
              loop: start=0, step=1, limit=1
              $region37: #{tpu_custom_call.1} parent=35 // loop_pre_header
                _
              $region38: #{tpu_custom_call.1} parent=35 // loop_header
                %s176 = sphi 0, %s180
                %p177 = scmp.ge.s32.totalorder %s176, 1
                %s181 = sphi %s166, %s166
                %s182 = sphi %s163, %s163
              $region39: #{tpu_custom_call.1} parent=35 // loop_header_branch
                %179 = sbr.rel (%p177) target = $region43
              $region40: #{tpu_custom_call.1} parent=35 // loop_body
                %v183 = vld [vmem:[%s181] sm:%s174]
                %184 = vst [vmem:[%s182] sm:%s174] %v183
                %v185 = vld [vmem:[%s181 + $0x8] sm:%s174]
                %186 = vst [vmem:[%s182 + $0x8] sm:%s174] %v185
                %v187 = vld [vmem:[%s181 + $0x10] sm:%s174]
                %188 = vst [vmem:[%s182 + $0x10] sm:%s174] %v187
                %v189 = vld [vmem:[%s181 + $0x18] sm:%s174]
                %190 = vst [vmem:[%s182 + $0x18] sm:%s174] %v189
                %v191 = vld [vmem:[%s181 + $0x20] sm:%s174]
                %192 = vst [vmem:[%s182 + $0x20] sm:%s174] %v191
                %v193 = vld [vmem:[%s181 + $0x50] sm:%s174]
                %194 = vst [vmem:[%s182 + $0x28] sm:%s174] %v193
                %v195 = vld [vmem:[%s181 + $0x58] sm:%s174]
                %196 = vst [vmem:[%s182 + $0x30] sm:%s174] %v195
                %v197 = vld [vmem:[%s181 + $0x60] sm:%s174]
                %198 = vst [vmem:[%s182 + $0x38] sm:%s174] %v197
                %v199 = vld [vmem:[%s181 + $0x68] sm:%s174]
                %200 = vst [vmem:[%s182 + $0x40] sm:%s174] %v199
                %v201 = vld [vmem:[%s181 + $0x70] sm:%s174]
                %202 = vst [vmem:[%s182 + $0x48] sm:%s174] %v201
                %v203 = vld [vmem:[%s181 + $0xa0] sm:%s174]
                %204 = vst [vmem:[%s182 + $0x50] sm:%s174] %v203
                %v205 = vld [vmem:[%s181 + $0xa8] sm:%s174]
                %206 = vst [vmem:[%s182 + $0x58] sm:%s174] %v205
                %v207 = vld [vmem:[%s181 + $0xb0] sm:%s174]
                %208 = vst [vmem:[%s182 + $0x60] sm:%s174] %v207
                %v209 = vld [vmem:[%s181 + $0xb8] sm:%s174]
                %210 = vst [vmem:[%s182 + $0x68] sm:%s174] %v209
                %v211 = vld [vmem:[%s181 + $0xc0] sm:%s174]
                %212 = vst [vmem:[%s182 + $0x70] sm:%s174] %v211
                %v213 = vld [vmem:[%s181 + $0xf0] sm:%s174]
                %214 = vst [vmem:[%s182 + $0x78] sm:%s174] %v213
                %v215 = vld [vmem:[%s181 + $0xf8] sm:%s174]
                %216 = vst [vmem:[%s182 + $0x80] sm:%s174] %v215
                %v217 = vld [vmem:[%s181 + $0x100] sm:%s174]
                %218 = vst [vmem:[%s182 + $0x88] sm:%s174] %v217
                %v219 = vld [vmem:[%s181 + $0x108] sm:%s174]
                %220 = vst [vmem:[%s182 + $0x90] sm:%s174] %v219
                %v221 = vld [vmem:[%s181 + $0x110] sm:%s174]
                %222 = vst [vmem:[%s182 + $0x98] sm:%s174] %v221
                %v223 = vld [vmem:[%s181 + $0x140] sm:%s174]
                %224 = vst [vmem:[%s182 + $0xa0] sm:%s174] %v223
                %v225 = vld [vmem:[%s181 + $0x148] sm:%s174]
                %226 = vst [vmem:[%s182 + $0xa8] sm:%s174] %v225
                %v227 = vld [vmem:[%s181 + $0x150] sm:%s174]
                %228 = vst [vmem:[%s182 + $0xb0] sm:%s174] %v227
                %v229 = vld [vmem:[%s181 + $0x158] sm:%s174]
                %230 = vst [vmem:[%s182 + $0xb8] sm:%s174] %v229
                %v231 = vld [vmem:[%s181 + $0x160] sm:%s174]
                %232 = vst [vmem:[%s182 + $0xc0] sm:%s174] %v231
                %v233 = vld [vmem:[%s181 + $0x190] sm:%s174]
                %234 = vst [vmem:[%s182 + $0xc8] sm:%s174] %v233
                %v235 = vld [vmem:[%s181 + $0x198] sm:%s174]
                %236 = vst [vmem:[%s182 + $0xd0] sm:%s174] %v235
                %v237 = vld [vmem:[%s181 + $0x1a0] sm:%s174]
                %238 = vst [vmem:[%s182 + $0xd8] sm:%s174] %v237
                %v239 = vld [vmem:[%s181 + $0x1a8] sm:%s174]
                %240 = vst [vmem:[%s182 + $0xe0] sm:%s174] %v239
                %v241 = vld [vmem:[%s181 + $0x1b0] sm:%s174]
                %242 = vst [vmem:[%s182 + $0xe8] sm:%s174] %v241
                %v243 = vld [vmem:[%s181 + $0x1e0] sm:%s174]
                %244 = vst [vmem:[%s182 + $0xf0] sm:%s174] %v243
                %v245 = vld [vmem:[%s181 + $0x1e8] sm:%s174]
                %246 = vst [vmem:[%s182 + $0xf8] sm:%s174] %v245
                %v247 = vld [vmem:[%s181 + $0x1f0] sm:%s174]
                %248 = vst [vmem:[%s182 + $0x100] sm:%s174] %v247
                %v249 = vld [vmem:[%s181 + $0x1f8] sm:%s174]
                %250 = vst [vmem:[%s182 + $0x108] sm:%s174] %v249
                %v251 = vld [vmem:[%s181 + $0x200] sm:%s174]
                %252 = vst [vmem:[%s182 + $0x110] sm:%s174] %v251
                %v253 = vld [vmem:[%s181 + $0x230] sm:%s174]
                %254 = vst [vmem:[%s182 + $0x118] sm:%s174] %v253
                %v255 = vld [vmem:[%s181 + $0x238] sm:%s174]
                %256 = vst [vmem:[%s182 + $0x120] sm:%s174] %v255
                %v257 = vld [vmem:[%s181 + $0x240] sm:%s174]
                %258 = vst [vmem:[%s182 + $0x128] sm:%s174] %v257
                %v259 = vld [vmem:[%s181 + $0x248] sm:%s174]
                %260 = vst [vmem:[%s182 + $0x130] sm:%s174] %v259
                %v261 = vld [vmem:[%s181 + $0x250] sm:%s174]
                %262 = vst [vmem:[%s182 + $0x138] sm:%s174] %v261
                %v263 = vld [vmem:[%s181 + $0x280] sm:%s174]
                %264 = vst [vmem:[%s182 + $0x140] sm:%s174] %v263
                %v265 = vld [vmem:[%s181 + $0x288] sm:%s174]
                %266 = vst [vmem:[%s182 + $0x148] sm:%s174] %v265
                %v267 = vld [vmem:[%s181 + $0x290] sm:%s174]
                %268 = vst [vmem:[%s182 + $0x150] sm:%s174] %v267
                %v269 = vld [vmem:[%s181 + $0x298] sm:%s174]
                %270 = vst [vmem:[%s182 + $0x158] sm:%s174] %v269
                %v271 = vld [vmem:[%s181 + $0x2a0] sm:%s174]
                %272 = vst [vmem:[%s182 + $0x160] sm:%s174] %v271
              $region41: #{tpu_custom_call.1} parent=35 // loop_footer
                %s180 = sadd.s32 1, %s176
              $region42: #{tpu_custom_call.1} parent=35 // loop_footer_branch
                %175 = sbr.rel target = $region38
              $region43: #{tpu_custom_call.1} parent=35 // loop_exit
                _
            $region36: #{tpu_custom_call.1} parent=27 // pred_fallthru
              _
          $region28: #{tpu_custom_call.1} parent=23 // pred_fallthru
            _
          %375 = vnop
        $region24: #{tpu_custom_call.1} parent=19 // pred_fallthru
          _
        // Predicated region
        $region59: #{tpu_custom_call.1} parent=19 // pred_check
          %p376 = pneg %p77
        $region60: #{tpu_custom_call.1} parent=19 // pred_check_branch
          %378 = sbr.rel (%p376) target = $region62
        $region61: #{tpu_custom_call.1} parent=19 // pred_region
          %s379 = smul.u32 5, %s10
          %p380 = scmp.lt.s32.totalorder %s379, 9
          %s381 = scalar_select %p380, %s379, 9
          %s382 = smul.addr %s381, 8
          %s383 = scalar_lea.vmem %s2, %s382
          %s384 = smul.u32 5, %s10
        $region62: #{tpu_custom_call.1} parent=19 // pred_fallthru
          _
        // Predicated region
        $region63: #{tpu_custom_call.1} parent=19 // pred_check
          %p385 = pneg %p103
        $region64: #{tpu_custom_call.1} parent=19 // pred_check_branch
          %387 = sbr.rel (%p385) target = $region66
        $region65: #{tpu_custom_call.1} parent=19 // pred_region
          %s388 = smul.u32 5, %s10
          %p389 = scmp.lt.s32.totalorder %s388, 9
          %s390 = scalar_select %p389, %s388, 9
          %s391 = smul.addr %s390, 8
          %s392 = scalar_lea.vmem %s3, %s391
          %s393 = smul.u32 5, %s10
        $region66: #{tpu_custom_call.1} parent=19 // pred_fallthru
          _
      $region20: #{tpu_custom_call.1} parent=5 // pred_fallthru
        _
      %p394 = scmp.le.s32.totalorder 1, %s10
      %p395 = scmp.lt.s32.totalorder %s10, 3
      %p396 = pnand %p394, %p395
      %p397 = pneg %p396
      // Predicated region
      $region67: #{tpu_custom_call.1} parent=5 // pred_check
        _
      $region68: #{tpu_custom_call.1} parent=5 // pred_check_branch
        %399 = sbr.rel (%p396) target = $region70
      $region69: #{tpu_custom_call.1} parent=5 // pred_region
        %s400 = ssub.s32 %s10, 1
        %s401 = sand.u32 %s23, 1
        %s402 = sand.u32 %s23, 1
        %s403 = smul.addr %s402, 360
        %s404 = scalar_lea.vmem [#allocation2], %s403
        // Predicated region
        $region71: #{tpu_custom_call.1} parent=69 // pred_check
          %p405 = pneg %p36
        $region72: #{tpu_custom_call.1} parent=69 // pred_check_branch
          %407 = sbr.rel (%p405) target = $region74
        $region73: #{tpu_custom_call.1} parent=69 // pred_region
          _
        $region74: #{tpu_custom_call.1} parent=69 // pred_fallthru
          _
        %s408 = sand.u32 %s23, 1
        %s409 = sand.u32 %s23, 1
        %s410 = smul.addr %s409, 360
        %s411 = scalar_lea.vmem [#allocation2], %s410
        %p412 = pneg %p36
        %p413 = pneg %p33
        %p414 = pneg %p57
        %p415 = pneg %p54
        %s416 = smul.u32 5, %s15
        %p417 = scmp.lt.s32.totalorder %s416, 9
        %s418 = scalar_select %p417, %s416, 9
        %s419 = smul.addr %s418, 8
        %s420 = scalar_lea.vmem %s2, %s419
        %p421 = pneg %p83
        %p422 = pneg %p80
        %s423 = smul.u32 5, %s15
        %p424 = scmp.lt.s32.totalorder %s423, 9
        %s425 = scalar_select %p424, %s423, 9
        %s426 = smul.addr %s425, 8
        %s427 = scalar_lea.vmem %s3, %s426
        %p428 = pneg %p109
        %p429 = pneg %p106
        %p430 = pneg %p135
        %p431 = pneg %p132
        %s432 = smul.u32 5, %s15
        %p433 = scmp.lt.s32.totalorder %s432, 9
        %s434 = scalar_select %p433, %s432, 9
        %s435 = smul.addr %s434, 8
        %s436 = scalar_lea.vmem %s4, %s435
        %s437 = smul.u32 5, %s15
        %s438 = smul.u32 5, %s15
        %p439 = scmp.lt.s32.totalorder %s438, 9
        %s440 = scalar_select %p439, %s438, 9
        %s441 = smul.addr %s440, 8
        %s442 = scalar_lea.vmem %s2, %s441
        %s443 = smul.u32 5, %s15
        %s444 = smul.u32 5, %s15
        %p445 = scmp.lt.s32.totalorder %s444, 9
        %s446 = scalar_select %p445, %s444, 9
        %s447 = smul.addr %s446, 8
        %s448 = scalar_lea.vmem %s3, %s447
        %s449 = smul.u32 5, %s15
        %s450 = smul.u32 5, %s15
        %p451 = scmp.lt.s32.totalorder %s450, 9
        %s452 = scalar_select %p451, %s450, 9
        %s453 = smul.addr %s452, 8
        %s454 = scalar_lea.vmem %s4, %s453
        %s455 = smul.u32 5, %s15
        %v456 = vld [vmem:[%s404] sm:$0xff]
        %v457 = vld [vmem:[%s404 + $0x8] sm:$0xff]
        %v458 = vld [vmem:[%s404 + $0x10] sm:$0xff]
        %v459 = vld [vmem:[%s404 + $0x18] sm:$0xff]
        %v460 = vld [vmem:[%s404 + $0x20] sm:$0xff]
        %v461 = vld [vmem:[%s404 + $0x28] sm:$0xff]
        %v462 = vld [vmem:[%s404 + $0x30] sm:$0xff]
        %v463 = vld [vmem:[%s404 + $0x38] sm:$0xff]
        %v464 = vld [vmem:[%s404 + $0x40] sm:$0xff]
        %v465 = vld [vmem:[%s404 + $0x48] sm:$0xff]
        %v466 = vld [vmem:[%s404 + $0x50] sm:$0xff]
        %v467 = vld [vmem:[%s404 + $0x58] sm:$0xff]
        %v468 = vld [vmem:[%s404 + $0x60] sm:$0xff]
        %v469 = vld [vmem:[%s404 + $0x68] sm:$0xff]
        %v470 = vld [vmem:[%s404 + $0x70] sm:$0xff]
        %v471 = vld [vmem:[%s404 + $0x78] sm:$0xff]
        %v472 = vld [vmem:[%s404 + $0x80] sm:$0xff]
        %v473 = vld [vmem:[%s404 + $0x88] sm:$0xff]
        %v474 = vld [vmem:[%s404 + $0x90] sm:$0xff]
        %v475 = vld [vmem:[%s404 + $0x98] sm:$0xff]
        %v476 = vld [vmem:[%s404 + $0xa0] sm:$0xff]
        %v477 = vld [vmem:[%s404 + $0xa8] sm:$0xff]
        %v478 = vld [vmem:[%s404 + $0xb0] sm:$0xff]
        %v479 = vld [vmem:[%s404 + $0xb8] sm:$0xff]
        %v480 = vld [vmem:[%s404 + $0xc0] sm:$0xff]
        %v481 = vld [vmem:[%s404 + $0xc8] sm:$0xff]
        %v482 = vld [vmem:[%s404 + $0xd0] sm:$0xff]
        %v483 = vld [vmem:[%s404 + $0xd8] sm:$0xff]
        %v484 = vld [vmem:[%s404 + $0xe0] sm:$0xff]
        %v485 = vld [vmem:[%s404 + $0xe8] sm:$0xff]
        %v486 = vld [vmem:[%s404 + $0xf0] sm:$0xff]
        %v487 = vld [vmem:[%s404 + $0xf8] sm:$0xff]
        %v488 = vld [vmem:[%s404 + $0x100] sm:$0xff]
        %v489 = vld [vmem:[%s404 + $0x108] sm:$0xff]
        %v490 = vld [vmem:[%s404 + $0x110] sm:$0xff]
        %v491 = vld [vmem:[%s404 + $0x118] sm:$0xff]
        %v492 = vld [vmem:[%s404 + $0x120] sm:$0xff]
        %v493 = vld [vmem:[%s404 + $0x128] sm:$0xff]
        %v494 = vld [vmem:[%s404 + $0x130] sm:$0xff]
        %v495 = vld [vmem:[%s404 + $0x138] sm:$0xff]
        %v496 = vld [vmem:[%s404 + $0x140] sm:$0xff]
        %v497 = vld [vmem:[%s404 + $0x148] sm:$0xff]
        %v498 = vld [vmem:[%s404 + $0x150] sm:$0xff]
        %v499 = vld [vmem:[%s404 + $0x158] sm:$0xff]
        %v500 = vld [vmem:[%s404 + $0x160] sm:$0xff]
        %v501 = vld [vmem:[%s1] sm:$0xf]
        %vm502 = vcmask 31744
        %v504 = vsel %vm502, %v456, 0
        %v507 = vsel %vm502, %v457, 0
        %v510 = vsel %vm502, %v458, 0
        %v513 = vsel %vm502, %v459, 0
        %v516 = vsel %vm502, %v460, 0
        %v519 = vsel %vm502, %v461, 0
        %v522 = vsel %vm502, %v462, 0
        %v525 = vsel %vm502, %v463, 0
        %v528 = vsel %vm502, %v464, 0
        %v531 = vsel %vm502, %v465, 0
        %v534 = vsel %vm502, %v466, 0
        %v537 = vsel %vm502, %v467, 0
        %v540 = vsel %vm502, %v468, 0
        %v543 = vsel %vm502, %v469, 0
        %v546 = vsel %vm502, %v470, 0
        %v549 = vsel %vm502, %v471, 0
        %v552 = vsel %vm502, %v472, 0
        %v555 = vsel %vm502, %v473, 0
        %v558 = vsel %vm502, %v474, 0
        %v561 = vsel %vm502, %v475, 0
        %v564 = vsel %vm502, %v476, 0
        %v567 = vsel %vm502, %v477, 0
        %v570 = vsel %vm502, %v478, 0
        %v573 = vsel %vm502, %v479, 0
        %v576 = vsel %vm502, %v480, 0
        %v579 = vsel %vm502, %v481, 0
        %v582 = vsel %vm502, %v482, 0
        %v585 = vsel %vm502, %v483, 0
        %v588 = vsel %vm502, %v484, 0
        %v591 = vsel %vm502, %v485, 0
        %v594 = vsel %vm502, %v486, 0
        %v597 = vsel %vm502, %v487, 0
        %v600 = vsel %vm502, %v488, 0
        %v603 = vsel %vm502, %v489, 0
        %v606 = vsel %vm502, %v490, 0
        %v609 = vsel %vm502, %v491, 0
        %v612 = vsel %vm502, %v492, 0
        %v615 = vsel %vm502, %v493, 0
        %v618 = vsel %vm502, %v494, 0
        %v621 = vsel %vm502, %v495, 0
        %v624 = vsel %vm502, %v496, 0
        %v627 = vsel %vm502, %v497, 0
        %v630 = vsel %vm502, %v498, 0
        %v633 = vsel %vm502, %v499, 0
        %v636 = vsel %vm502, %v500, 0
        %vm638 = vcmask 1043456
        %v640 = vsel %vm638, %v501, 0
        %642 = vmatprep.subr.mxu0 0.0
        %643 = vmatpush1.msra.mxu0 0.0
        %644 = vmatprep.subr.mxu0 0.0
        %645 = vmatpush1.msra.mxu0 0.0
        %646 = vmatprep.subr.mxu0 0.0
        %647 = vmatpush1.msra.mxu0 0.0
        %648 = vmatprep.subr.mxu0 0.0
        %649 = vmatpush1.msra.mxu0 0.0
        %650 = vmatprep.subr.mxu0 0.0
        %651 = vmatpush1.msra.mxu0 0.0
        %652 = vmatprep.subr.mxu0 0.0
        %653 = vmatpush1.msra.mxu0 0.0
        %654 = vmatprep.subr.mxu0 0.0
        %655 = vmatpush1.msra.mxu0 0.0
        %656 = vmatprep.subr.mxu0 0.0
        %657 = vmatpush1.msra.mxu0 0.0
        %658 = vmatprep.subr.mxu0 0.0
        %659 = vmatpush1.msra.mxu0 0.0
        %660 = vmatprep.subr.mxu0 0.0
        %661 = vmatpush1.msra.mxu0 0.0
        %662 = vmatprep.subr.mxu0 0.0
        %663 = vmatpush1.msra.mxu0 0.0
        %664 = vmatprep.subr.mxu0 0.0
        %665 = vmatpush1.msra.mxu0 0.0
        %666 = vmatprep.subr.mxu0 0.0
        %667 = vmatpush1.msra.mxu0 0.0
        %668 = vmatprep.subr.mxu0 0.0
        %669 = vmatpush1.msra.mxu0 0.0
        %670 = vmatprep.subr.mxu0 0.0
        %671 = vmatpush1.msra.mxu0 0.0
        %672 = vmatprep.subr.mxu0 0.0
        %673 = vmatpush1.msra.mxu0 %v640
        %674 = vmatprep.subr.mxu0 0.0
        %675 = vmatpush2.msra.mxu0 0.0
        %676 = vmatprep.subr.mxu0 0.0
        %677 = vmatpush2.msra.mxu0 0.0
        %678 = vmatprep.subr.mxu0 0.0
        %679 = vmatpush2.msra.mxu0 0.0
        %680 = vmatprep.subr.mxu0 0.0
        %681 = vmatpush2.msra.mxu0 0.0
        %682 = vmatprep.subr.mxu0 0.0
        %683 = vmatpush2.msra.mxu0 0.0
        %684 = vmatprep.subr.mxu0 0.0
        %685 = vmatpush2.msra.mxu0 0.0
        %686 = vmatprep.subr.mxu0 0.0
        %687 = vmatpush2.msra.mxu0 0.0
        %688 = vmatprep.subr.mxu0 0.0
        %689 = vmatpush2.msra.mxu0 0.0
        %690 = vmatprep.subr.mxu0 0.0
        %691 = vmatpush2.msra.mxu0 0.0
        %692 = vmatprep.subr.mxu0 0.0
        %693 = vmatpush2.msra.mxu0 0.0
        %694 = vmatprep.subr.mxu0 0.0
        %695 = vmatpush2.msra.mxu0 0.0
        %696 = vmatprep.subr.mxu0 0.0
        %697 = vmatpush2.msra.mxu0 0.0
        %698 = vmatprep.subr.mxu0 0.0
        %699 = vmatpush2.msra.mxu0 0.0
        %700 = vmatprep.subr.mxu0 0.0
        %701 = vmatpush2.msra.mxu0 0.0
        %702 = vmatprep.subr.mxu0 0.0
        %703 = vmatpush2.msra.mxu0 0.0
        %704 = vmatprep.subr.mxu0 0.0
        %705 = vmatpush2.msra.mxu0 0.0
        %706 = vmatprep.mubr.f32.mxu0 0.0
        %707 = vmatmul.mubr.f32.gmra.mxu0 %v504
        %v708 = vpop.f32.mrf.mxu0
        %v709 = vadd.f32 0.0, %v708
        %v710 = vpop.f32.mrf.mxu0
        %711 = vmatprep.mubr.f32.mxu0 0.0
        %712 = vmatmul.mubr.f32.gmra.mxu0 %v507
        %v713 = vpop.f32.mrf.mxu0
        %v714 = vadd.f32 0.0, %v713
        %v715 = vpop.f32.mrf.mxu0
        %716 = vmatprep.mubr.f32.mxu0 0.0
        %717 = vmatmul.mubr.f32.gmra.mxu0 %v510
        %v718 = vpop.f32.mrf.mxu0
        %v719 = vadd.f32 0.0, %v718
        %v720 = vpop.f32.mrf.mxu0
        %721 = vmatprep.mubr.f32.mxu0 0.0
        %722 = vmatmul.mubr.f32.gmra.mxu0 %v513
        %v723 = vpop.f32.mrf.mxu0
        %v724 = vadd.f32 0.0, %v723
        %v725 = vpop.f32.mrf.mxu0
        %726 = vmatprep.mubr.f32.mxu0 0.0
        %727 = vmatmul.mubr.f32.gmra.mxu0 %v516
        %v728 = vpop.f32.mrf.mxu0
        %v729 = vadd.f32 0.0, %v728
        %v730 = vpop.f32.mrf.mxu0
        %731 = vmatprep.mubr.f32.mxu0 0.0
        %732 = vmatmul.mubr.f32.gmra.mxu0 %v519
        %v733 = vpop.f32.mrf.mxu0
        %v734 = vadd.f32 0.0, %v733
        %v735 = vpop.f32.mrf.mxu0
        %736 = vmatprep.mubr.f32.mxu0 0.0
        %737 = vmatmul.mubr.f32.gmra.mxu0 %v522
        %v738 = vpop.f32.mrf.mxu0
        %v739 = vadd.f32 0.0, %v738
        %v740 = vpop.f32.mrf.mxu0
        %741 = vmatprep.mubr.f32.mxu0 0.0
        %742 = vmatmul.mubr.f32.gmra.mxu0 %v525
        %v743 = vpop.f32.mrf.mxu0
        %v744 = vadd.f32 0.0, %v743
        %v745 = vpop.f32.mrf.mxu0
        %746 = vmatprep.mubr.f32.mxu0 0.0
        %747 = vmatmul.mubr.f32.gmra.mxu0 %v528
        %v748 = vpop.f32.mrf.mxu0
        %v749 = vadd.f32 0.0, %v748
        %v750 = vpop.f32.mrf.mxu0
        %751 = vmatprep.mubr.f32.mxu0 0.0
        %752 = vmatmul.mubr.f32.gmra.mxu0 %v531
        %v753 = vpop.f32.mrf.mxu0
        %v754 = vadd.f32 0.0, %v753
        %v755 = vpop.f32.mrf.mxu0
        %756 = vmatprep.mubr.f32.mxu0 0.0
        %757 = vmatmul.mubr.f32.gmra.mxu0 %v534
        %v758 = vpop.f32.mrf.mxu0
        %v759 = vadd.f32 0.0, %v758
        %v760 = vpop.f32.mrf.mxu0
        %761 = vmatprep.mubr.f32.mxu0 0.0
        %762 = vmatmul.mubr.f32.gmra.mxu0 %v537
        %v763 = vpop.f32.mrf.mxu0
        %v764 = vadd.f32 0.0, %v763
        %v765 = vpop.f32.mrf.mxu0
        %766 = vmatprep.mubr.f32.mxu0 0.0
        %767 = vmatmul.mubr.f32.gmra.mxu0 %v540
        %v768 = vpop.f32.mrf.mxu0
        %v769 = vadd.f32 0.0, %v768
        %v770 = vpop.f32.mrf.mxu0
        %771 = vmatprep.mubr.f32.mxu0 0.0
        %772 = vmatmul.mubr.f32.gmra.mxu0 %v543
        %v773 = vpop.f32.mrf.mxu0
        %v774 = vadd.f32 0.0, %v773
        %v775 = vpop.f32.mrf.mxu0
        %776 = vmatprep.mubr.f32.mxu0 0.0
        %777 = vmatmul.mubr.f32.gmra.mxu0 %v546
        %v778 = vpop.f32.mrf.mxu0
        %v779 = vadd.f32 0.0, %v778
        %v780 = vpop.f32.mrf.mxu0
        %781 = vmatprep.mubr.f32.mxu0 0.0
        %782 = vmatmul.mubr.f32.gmra.mxu0 %v549
        %v783 = vpop.f32.mrf.mxu0
        %v784 = vadd.f32 0.0, %v783
        %v785 = vpop.f32.mrf.mxu0
        %786 = vmatprep.mubr.f32.mxu0 0.0
        %787 = vmatmul.mubr.f32.gmra.mxu0 %v552
        %v788 = vpop.f32.mrf.mxu0
        %v789 = vadd.f32 0.0, %v788
        %v790 = vpop.f32.mrf.mxu0
        %791 = vmatprep.mubr.f32.mxu0 0.0
        %792 = vmatmul.mubr.f32.gmra.mxu0 %v555
        %v793 = vpop.f32.mrf.mxu0
        %v794 = vadd.f32 0.0, %v793
        %v795 = vpop.f32.mrf.mxu0
        %796 = vmatprep.mubr.f32.mxu0 0.0
        %797 = vmatmul.mubr.f32.gmra.mxu0 %v558
        %v798 = vpop.f32.mrf.mxu0
        %v799 = vadd.f32 0.0, %v798
        %v800 = vpop.f32.mrf.mxu0
        %801 = vmatprep.mubr.f32.mxu0 0.0
        %802 = vmatmul.mubr.f32.gmra.mxu0 %v561
        %v803 = vpop.f32.mrf.mxu0
        %v804 = vadd.f32 0.0, %v803
        %v805 = vpop.f32.mrf.mxu0
        %806 = vmatprep.mubr.f32.mxu0 0.0
        %807 = vmatmul.mubr.f32.gmra.mxu0 %v564
        %v808 = vpop.f32.mrf.mxu0
        %v809 = vadd.f32 0.0, %v808
        %v810 = vpop.f32.mrf.mxu0
        %811 = vmatprep.mubr.f32.mxu0 0.0
        %812 = vmatmul.mubr.f32.gmra.mxu0 %v567
        %v813 = vpop.f32.mrf.mxu0
        %v814 = vadd.f32 0.0, %v813
        %v815 = vpop.f32.mrf.mxu0
        %816 = vmatprep.mubr.f32.mxu0 0.0
        %817 = vmatmul.mubr.f32.gmra.mxu0 %v570
        %v818 = vpop.f32.mrf.mxu0
        %v819 = vadd.f32 0.0, %v818
        %v820 = vpop.f32.mrf.mxu0
        %821 = vmatprep.mubr.f32.mxu0 0.0
        %822 = vmatmul.mubr.f32.gmra.mxu0 %v573
        %v823 = vpop.f32.mrf.mxu0
        %v824 = vadd.f32 0.0, %v823
        %v825 = vpop.f32.mrf.mxu0
        %826 = vmatprep.mubr.f32.mxu0 0.0
        %827 = vmatmul.mubr.f32.gmra.mxu0 %v576
        %v828 = vpop.f32.mrf.mxu0
        %v829 = vadd.f32 0.0, %v828
        %v830 = vpop.f32.mrf.mxu0
        %831 = vmatprep.mubr.f32.mxu0 0.0
        %832 = vmatmul.mubr.f32.gmra.mxu0 %v579
        %v833 = vpop.f32.mrf.mxu0
        %v834 = vadd.f32 0.0, %v833
        %v835 = vpop.f32.mrf.mxu0
        %836 = vmatprep.mubr.f32.mxu0 0.0
        %837 = vmatmul.mubr.f32.gmra.mxu0 %v582
        %v838 = vpop.f32.mrf.mxu0
        %v839 = vadd.f32 0.0, %v838
        %v840 = vpop.f32.mrf.mxu0
        %841 = vmatprep.mubr.f32.mxu0 0.0
        %842 = vmatmul.mubr.f32.gmra.mxu0 %v585
        %v843 = vpop.f32.mrf.mxu0
        %v844 = vadd.f32 0.0, %v843
        %v845 = vpop.f32.mrf.mxu0
        %846 = vmatprep.mubr.f32.mxu0 0.0
        %847 = vmatmul.mubr.f32.gmra.mxu0 %v588
        %v848 = vpop.f32.mrf.mxu0
        %v849 = vadd.f32 0.0, %v848
        %v850 = vpop.f32.mrf.mxu0
        %851 = vmatprep.mubr.f32.mxu0 0.0
        %852 = vmatmul.mubr.f32.gmra.mxu0 %v591
        %v853 = vpop.f32.mrf.mxu0
        %v854 = vadd.f32 0.0, %v853
        %v855 = vpop.f32.mrf.mxu0
        %856 = vmatprep.mubr.f32.mxu0 0.0
        %857 = vmatmul.mubr.f32.gmra.mxu0 %v594
        %v858 = vpop.f32.mrf.mxu0
        %v859 = vadd.f32 0.0, %v858
        %v860 = vpop.f32.mrf.mxu0
        %861 = vmatprep.mubr.f32.mxu0 0.0
        %862 = vmatmul.mubr.f32.gmra.mxu0 %v597
        %v863 = vpop.f32.mrf.mxu0
        %v864 = vadd.f32 0.0, %v863
        %v865 = vpop.f32.mrf.mxu0
        %866 = vmatprep.mubr.f32.mxu0 0.0
        %867 = vmatmul.mubr.f32.gmra.mxu0 %v600
        %v868 = vpop.f32.mrf.mxu0
        %v869 = vadd.f32 0.0, %v868
        %v870 = vpop.f32.mrf.mxu0
        %871 = vmatprep.mubr.f32.mxu0 0.0
        %872 = vmatmul.mubr.f32.gmra.mxu0 %v603
        %v873 = vpop.f32.mrf.mxu0
        %v874 = vadd.f32 0.0, %v873
        %v875 = vpop.f32.mrf.mxu0
        %876 = vmatprep.mubr.f32.mxu0 0.0
        %877 = vmatmul.mubr.f32.gmra.mxu0 %v606
        %v878 = vpop.f32.mrf.mxu0
        %v879 = vadd.f32 0.0, %v878
        %v880 = vpop.f32.mrf.mxu0
        %881 = vmatprep.mubr.f32.mxu0 0.0
        %882 = vmatmul.mubr.f32.gmra.mxu0 %v609
        %v883 = vpop.f32.mrf.mxu0
        %v884 = vadd.f32 0.0, %v883
        %v885 = vpop.f32.mrf.mxu0
        %886 = vmatprep.mubr.f32.mxu0 0.0
        %887 = vmatmul.mubr.f32.gmra.mxu0 %v612
        %v888 = vpop.f32.mrf.mxu0
        %v889 = vadd.f32 0.0, %v888
        %v890 = vpop.f32.mrf.mxu0
        %891 = vmatprep.mubr.f32.mxu0 0.0
        %892 = vmatmul.mubr.f32.gmra.mxu0 %v615
        %v893 = vpop.f32.mrf.mxu0
        %v894 = vadd.f32 0.0, %v893
        %v895 = vpop.f32.mrf.mxu0
        %896 = vmatprep.mubr.f32.mxu0 0.0
        %897 = vmatmul.mubr.f32.gmra.mxu0 %v618
        %v898 = vpop.f32.mrf.mxu0
        %v899 = vadd.f32 0.0, %v898
        %v900 = vpop.f32.mrf.mxu0
        %901 = vmatprep.mubr.f32.mxu0 0.0
        %902 = vmatmul.mubr.f32.gmra.mxu0 %v621
        %v903 = vpop.f32.mrf.mxu0
        %v904 = vadd.f32 0.0, %v903
        %v905 = vpop.f32.mrf.mxu0
        %906 = vmatprep.mubr.f32.mxu0 0.0
        %907 = vmatmul.mubr.f32.gmra.mxu0 %v624
        %v908 = vpop.f32.mrf.mxu0
        %v909 = vadd.f32 0.0, %v908
        %v910 = vpop.f32.mrf.mxu0
        %911 = vmatprep.mubr.f32.mxu0 0.0
        %912 = vmatmul.mubr.f32.gmra.mxu0 %v627
        %v913 = vpop.f32.mrf.mxu0
        %v914 = vadd.f32 0.0, %v913
        %v915 = vpop.f32.mrf.mxu0
        %916 = vmatprep.mubr.f32.mxu0 0.0
        %917 = vmatmul.mubr.f32.gmra.mxu0 %v630
        %v918 = vpop.f32.mrf.mxu0
        %v919 = vadd.f32 0.0, %v918
        %v920 = vpop.f32.mrf.mxu0
        %921 = vmatprep.mubr.f32.mxu0 0.0
        %922 = vmatmul.mubr.f32.gmra.mxu0 %v633
        %v923 = vpop.f32.mrf.mxu0
        %v924 = vadd.f32 0.0, %v923
        %v925 = vpop.f32.mrf.mxu0
        %926 = vmatprep.mubr.f32.mxu0 0.0
        %927 = vmatmul.mubr.f32.gmra.mxu0 %v636
        %v928 = vpop.f32.mrf.mxu0
        %v929 = vadd.f32 0.0, %v928
        %v930 = vpop.f32.mrf.mxu0
        %931 = vdwg.mxu0
        %v932 = vld [vmem:[%s442] sm:$0xff]
        %v933 = vld [vmem:[%s442 + $0x8] sm:$0xff]
        %v934 = vld [vmem:[%s442 + $0x10] sm:$0xff]
        %v935 = vld [vmem:[%s442 + $0x18] sm:$0xff]
        %v936 = vld [vmem:[%s442 + $0x20] sm:$0xff]
        %v937 = vld [vmem:[%s448] sm:$0xff]
        %v938 = vld [vmem:[%s448 + $0x8] sm:$0xff]
        %v939 = vld [vmem:[%s448 + $0x10] sm:$0xff]
        %v940 = vld [vmem:[%s448 + $0x18] sm:$0xff]
        %v941 = vld [vmem:[%s448 + $0x20] sm:$0xff]
        %vm942 = vcmp.ge.s32.totalorder %v932, 16
        %vm943 = vcmp.ge.s32.totalorder %v933, 16
        %vm944 = vcmp.ge.s32.totalorder %v934, 16
        %vm945 = vcmp.ge.s32.totalorder %v935, 16
        %vm946 = vcmp.ge.s32.totalorder %v936, 16
        %vm947 = vcmp.ge.s32.totalorder %v937, 16
        %vm948 = vcmp.ge.s32.totalorder %v938, 16
        %vm949 = vcmp.ge.s32.totalorder %v939, 16
        %vm950 = vcmp.ge.s32.totalorder %v940, 16
        %vm951 = vcmp.ge.s32.totalorder %v941, 16
        %vm952 = vmor %vm942, %vm947
        %vm953 = vmor %vm943, %vm948
        %vm954 = vmor %vm944, %vm949
        %vm955 = vmor %vm945, %vm950
        %vm956 = vmor %vm946, %vm951
        %v957 = vsel %vm952, 1, 0
        %v958 = vsel %vm953, 1, 0
        %v959 = vsel %vm954, 1, 0
        %v960 = vsel %vm955, 1, 0
        %v961 = vsel %vm956, 1, 0
        %962 = vset.pattern.permute.xlu0 0
        %963 = vperm.xlu0 %962, %v957
        %v964 = vpop.permute.xlu0 %963
        %965 = vset.pattern.permute.xlu0 0
        %966 = vperm.xlu0 %965, %v958
        %v967 = vpop.permute.xlu0 %966
        %968 = vset.pattern.permute.xlu0 0
        %969 = vperm.xlu0 %968, %v959
        %v970 = vpop.permute.xlu0 %969
        %971 = vset.pattern.permute.xlu0 0
        %972 = vperm.xlu0 %971, %v960
        %v973 = vpop.permute.xlu0 %972
        %974 = vset.pattern.permute.xlu0 0
        %975 = vperm.xlu0 %974, %v961
        %v976 = vpop.permute.xlu0 %975
        %vm977 = vcmp.eq.s32.totalorder %v964, 1
        %vm978 = vcmp.eq.s32.totalorder %v967, 1
        %vm979 = vcmp.eq.s32.totalorder %v970, 1
        %vm980 = vcmp.eq.s32.totalorder %v973, 1
        %vm981 = vcmp.eq.s32.totalorder %v976, 1
        %v982 = vsel %vm977, -3.4028235e+38, %v709
        %v983 = vsel %vm978, -3.4028235e+38, %v714
        %v984 = vsel %vm979, -3.4028235e+38, %v719
        %v985 = vsel %vm980, -3.4028235e+38, %v724
        %v986 = vsel %vm981, -3.4028235e+38, %v729
        %v987 = vadd.s32 %v937, 1
        %v988 = vadd.s32 %v938, 1
        %v989 = vadd.s32 %v939, 1
        %v990 = vadd.s32 %v940, 1
        %v991 = vadd.s32 %v941, 1
        %vm992 = vcmp.ge.s32.totalorder %v987, 16
        %vm993 = vcmp.ge.s32.totalorder %v988, 16
        %vm994 = vcmp.ge.s32.totalorder %v989, 16
        %vm995 = vcmp.ge.s32.totalorder %v990, 16
        %vm996 = vcmp.ge.s32.totalorder %v991, 16
        %vm997 = vmor %vm942, %vm992
        %vm998 = vmor %vm943, %vm993
        %vm999 = vmor %vm944, %vm994
        %vm1000 = vmor %vm945, %vm995
        %vm1001 = vmor %vm946, %vm996
        %v1002 = vsel %vm997, 1, 0
        %v1003 = vsel %vm998, 1, 0
        %v1004 = vsel %vm999, 1, 0
        %v1005 = vsel %vm1000, 1, 0
        %v1006 = vsel %vm1001, 1, 0
        %1007 = vset.pattern.permute.xlu0 0
        %1008 = vperm.xlu0 %1007, %v1002
        %v1009 = vpop.permute.xlu0 %1008
        %1010 = vset.pattern.permute.xlu0 0
        %1011 = vperm.xlu0 %1010, %v1003
        %v1012 = vpop.permute.xlu0 %1011
        %1013 = vset.pattern.permute.xlu0 0
        %1014 = vperm.xlu0 %1013, %v1004
        %v1015 = vpop.permute.xlu0 %1014
        %1016 = vset.pattern.permute.xlu0 0
        %1017 = vperm.xlu0 %1016, %v1005
        %v1018 = vpop.permute.xlu0 %1017
        %1019 = vset.pattern.permute.xlu0 0
        %1020 = vperm.xlu0 %1019, %v1006
        %v1021 = vpop.permute.xlu0 %1020
        %vm1022 = vcmp.eq.s32.totalorder %v1009, 1
        %vm1023 = vcmp.eq.s32.totalorder %v1012, 1
        %vm1024 = vcmp.eq.s32.totalorder %v1015, 1
        %vm1025 = vcmp.eq.s32.totalorder %v1018, 1
        %vm1026 = vcmp.eq.s32.totalorder %v1021, 1
        %v1027 = vsel %vm1022, -3.4028235e+38, %v734
        %v1028 = vsel %vm1023, -3.4028235e+38, %v739
        %v1029 = vsel %vm1024, -3.4028235e+38, %v744
        %v1030 = vsel %vm1025, -3.4028235e+38, %v749
        %v1031 = vsel %vm1026, -3.4028235e+38, %v754
        %v1032 = vadd.s32 %v937, 2
        %v1033 = vadd.s32 %v938, 2
        %v1034 = vadd.s32 %v939, 2
        %v1035 = vadd.s32 %v940, 2
        %v1036 = vadd.s32 %v941, 2
        %vm1037 = vcmp.ge.s32.totalorder %v1032, 16
        %vm1038 = vcmp.ge.s32.totalorder %v1033, 16
        %vm1039 = vcmp.ge.s32.totalorder %v1034, 16
        %vm1040 = vcmp.ge.s32.totalorder %v1035, 16
        %vm1041 = vcmp.ge.s32.totalorder %v1036, 16
        %vm1042 = vmor %vm942, %vm1037
        %vm1043 = vmor %vm943, %vm1038
        %vm1044 = vmor %vm944, %vm1039
        %vm1045 = vmor %vm945, %vm1040
        %vm1046 = vmor %vm946, %vm1041
        %v1047 = vsel %vm1042, 1, 0
        %v1048 = vsel %vm1043, 1, 0
        %v1049 = vsel %vm1044, 1, 0
        %v1050 = vsel %vm1045, 1, 0
        %v1051 = vsel %vm1046, 1, 0
        %1052 = vset.pattern.permute.xlu0 0
        %1053 = vperm.xlu0 %1052, %v1047
        %v1054 = vpop.permute.xlu0 %1053
        %1055 = vset.pattern.permute.xlu0 0
        %1056 = vperm.xlu0 %1055, %v1048
        %v1057 = vpop.permute.xlu0 %1056
        %1058 = vset.pattern.permute.xlu0 0
        %1059 = vperm.xlu0 %1058, %v1049
        %v1060 = vpop.permute.xlu0 %1059
        %1061 = vset.pattern.permute.xlu0 0
        %1062 = vperm.xlu0 %1061, %v1050
        %v1063 = vpop.permute.xlu0 %1062
        %1064 = vset.pattern.permute.xlu0 0
        %1065 = vperm.xlu0 %1064, %v1051
        %v1066 = vpop.permute.xlu0 %1065
        %vm1067 = vcmp.eq.s32.totalorder %v1054, 1
        %vm1068 = vcmp.eq.s32.totalorder %v1057, 1
        %vm1069 = vcmp.eq.s32.totalorder %v1060, 1
        %vm1070 = vcmp.eq.s32.totalorder %v1063, 1
        %vm1071 = vcmp.eq.s32.totalorder %v1066, 1
        %v1072 = vsel %vm1067, -3.4028235e+38, %v759
        %v1073 = vsel %vm1068, -3.4028235e+38, %v764
        %v1074 = vsel %vm1069, -3.4028235e+38, %v769
        %v1075 = vsel %vm1070, -3.4028235e+38, %v774
        %v1076 = vsel %vm1071, -3.4028235e+38, %v779
        %v1077 = vadd.s32 %v932, 1
        %v1078 = vadd.s32 %v933, 1
        %v1079 = vadd.s32 %v934, 1
        %v1080 = vadd.s32 %v935, 1
        %v1081 = vadd.s32 %v936, 1
        %vm1082 = vcmp.ge.s32.totalorder %v1077, 16
        %vm1083 = vcmp.ge.s32.totalorder %v1078, 16
        %vm1084 = vcmp.ge.s32.totalorder %v1079, 16
        %vm1085 = vcmp.ge.s32.totalorder %v1080, 16
        %vm1086 = vcmp.ge.s32.totalorder %v1081, 16
        %vm1087 = vmor %vm1082, %vm947
        %vm1088 = vmor %vm1083, %vm948
        %vm1089 = vmor %vm1084, %vm949
        %vm1090 = vmor %vm1085, %vm950
        %vm1091 = vmor %vm1086, %vm951
        %v1092 = vsel %vm1087, 1, 0
        %v1093 = vsel %vm1088, 1, 0
        %v1094 = vsel %vm1089, 1, 0
        %v1095 = vsel %vm1090, 1, 0
        %v1096 = vsel %vm1091, 1, 0
        %1097 = vset.pattern.permute.xlu0 0
        %1098 = vperm.xlu0 %1097, %v1092
        %v1099 = vpop.permute.xlu0 %1098
        %1100 = vset.pattern.permute.xlu0 0
        %1101 = vperm.xlu0 %1100, %v1093
        %v1102 = vpop.permute.xlu0 %1101
        %1103 = vset.pattern.permute.xlu0 0
        %1104 = vperm.xlu0 %1103, %v1094
        %v1105 = vpop.permute.xlu0 %1104
        %1106 = vset.pattern.permute.xlu0 0
        %1107 = vperm.xlu0 %1106, %v1095
        %v1108 = vpop.permute.xlu0 %1107
        %1109 = vset.pattern.permute.xlu0 0
        %1110 = vperm.xlu0 %1109, %v1096
        %v1111 = vpop.permute.xlu0 %1110
        %vm1112 = vcmp.eq.s32.totalorder %v1099, 1
        %vm1113 = vcmp.eq.s32.totalorder %v1102, 1
        %vm1114 = vcmp.eq.s32.totalorder %v1105, 1
        %vm1115 = vcmp.eq.s32.totalorder %v1108, 1
        %vm1116 = vcmp.eq.s32.totalorder %v1111, 1
        %v1117 = vsel %vm1112, -3.4028235e+38, %v784
        %v1118 = vsel %vm1113, -3.4028235e+38, %v789
        %v1119 = vsel %vm1114, -3.4028235e+38, %v794
        %v1120 = vsel %vm1115, -3.4028235e+38, %v799
        %v1121 = vsel %vm1116, -3.4028235e+38, %v804
        %vm1122 = vmor %vm1082, %vm992
        %vm1123 = vmor %vm1083, %vm993
        %vm1124 = vmor %vm1084, %vm994
        %vm1125 = vmor %vm1085, %vm995
        %vm1126 = vmor %vm1086, %vm996
        %v1127 = vsel %vm1122, 1, 0
        %v1128 = vsel %vm1123, 1, 0
        %v1129 = vsel %vm1124, 1, 0
        %v1130 = vsel %vm1125, 1, 0
        %v1131 = vsel %vm1126, 1, 0
        %1132 = vset.pattern.permute.xlu0 0
        %1133 = vperm.xlu0 %1132, %v1127
        %v1134 = vpop.permute.xlu0 %1133
        %1135 = vset.pattern.permute.xlu0 0
        %1136 = vperm.xlu0 %1135, %v1128
        %v1137 = vpop.permute.xlu0 %1136
        %1138 = vset.pattern.permute.xlu0 0
        %1139 = vperm.xlu0 %1138, %v1129
        %v1140 = vpop.permute.xlu0 %1139
        %1141 = vset.pattern.permute.xlu0 0
        %1142 = vperm.xlu0 %1141, %v1130
        %v1143 = vpop.permute.xlu0 %1142
        %1144 = vset.pattern.permute.xlu0 0
        %1145 = vperm.xlu0 %1144, %v1131
        %v1146 = vpop.permute.xlu0 %1145
        %vm1147 = vcmp.eq.s32.totalorder %v1134, 1
        %vm1148 = vcmp.eq.s32.totalorder %v1137, 1
        %vm1149 = vcmp.eq.s32.totalorder %v1140, 1
        %vm1150 = vcmp.eq.s32.totalorder %v1143, 1
        %vm1151 = vcmp.eq.s32.totalorder %v1146, 1
        %v1152 = vsel %vm1147, -3.4028235e+38, %v809
        %v1153 = vsel %vm1148, -3.4028235e+38, %v814
        %v1154 = vsel %vm1149, -3.4028235e+38, %v819
        %v1155 = vsel %vm1150, -3.4028235e+38, %v824
        %v1156 = vsel %vm1151, -3.4028235e+38, %v829
        %vm1157 = vmor %vm1082, %vm1037
        %vm1158 = vmor %vm1083, %vm1038
        %vm1159 = vmor %vm1084, %vm1039
        %vm1160 = vmor %vm1085, %vm1040
        %vm1161 = vmor %vm1086, %vm1041
        %v1162 = vsel %vm1157, 1, 0
        %v1163 = vsel %vm1158, 1, 0
        %v1164 = vsel %vm1159, 1, 0
        %v1165 = vsel %vm1160, 1, 0
        %v1166 = vsel %vm1161, 1, 0
        %1167 = vset.pattern.permute.xlu0 0
        %1168 = vperm.xlu0 %1167, %v1162
        %v1169 = vpop.permute.xlu0 %1168
        %1170 = vset.pattern.permute.xlu0 0
        %1171 = vperm.xlu0 %1170, %v1163
        %v1172 = vpop.permute.xlu0 %1171
        %1173 = vset.pattern.permute.xlu0 0
        %1174 = vperm.xlu0 %1173, %v1164
        %v1175 = vpop.permute.xlu0 %1174
        %1176 = vset.pattern.permute.xlu0 0
        %1177 = vperm.xlu0 %1176, %v1165
        %v1178 = vpop.permute.xlu0 %1177
        %1179 = vset.pattern.permute.xlu0 0
        %1180 = vperm.xlu0 %1179, %v1166
        %v1181 = vpop.permute.xlu0 %1180
        %vm1182 = vcmp.eq.s32.totalorder %v1169, 1
        %vm1183 = vcmp.eq.s32.totalorder %v1172, 1
        %vm1184 = vcmp.eq.s32.totalorder %v1175, 1
        %vm1185 = vcmp.eq.s32.totalorder %v1178, 1
        %vm1186 = vcmp.eq.s32.totalorder %v1181, 1
        %v1187 = vsel %vm1182, -3.4028235e+38, %v834
        %v1188 = vsel %vm1183, -3.4028235e+38, %v839
        %v1189 = vsel %vm1184, -3.4028235e+38, %v844
        %v1190 = vsel %vm1185, -3.4028235e+38, %v849
        %v1191 = vsel %vm1186, -3.4028235e+38, %v854
        %v1192 = vadd.s32 %v932, 2
        %v1193 = vadd.s32 %v933, 2
        %v1194 = vadd.s32 %v934, 2
        %v1195 = vadd.s32 %v935, 2
        %v1196 = vadd.s32 %v936, 2
        %vm1197 = vcmp.ge.s32.totalorder %v1192, 16
        %vm1198 = vcmp.ge.s32.totalorder %v1193, 16
        %vm1199 = vcmp.ge.s32.totalorder %v1194, 16
        %vm1200 = vcmp.ge.s32.totalorder %v1195, 16
        %vm1201 = vcmp.ge.s32.totalorder %v1196, 16
        %vm1202 = vmor %vm1197, %vm947
        %vm1203 = vmor %vm1198, %vm948
        %vm1204 = vmor %vm1199, %vm949
        %vm1205 = vmor %vm1200, %vm950
        %vm1206 = vmor %vm1201, %vm951
        %v1207 = vsel %vm1202, 1, 0
        %v1208 = vsel %vm1203, 1, 0
        %v1209 = vsel %vm1204, 1, 0
        %v1210 = vsel %vm1205, 1, 0
        %v1211 = vsel %vm1206, 1, 0
        %1212 = vset.pattern.permute.xlu0 0
        %1213 = vperm.xlu0 %1212, %v1207
        %v1214 = vpop.permute.xlu0 %1213
        %1215 = vset.pattern.permute.xlu0 0
        %1216 = vperm.xlu0 %1215, %v1208
        %v1217 = vpop.permute.xlu0 %1216
        %1218 = vset.pattern.permute.xlu0 0
        %1219 = vperm.xlu0 %1218, %v1209
        %v1220 = vpop.permute.xlu0 %1219
        %1221 = vset.pattern.permute.xlu0 0
        %1222 = vperm.xlu0 %1221, %v1210
        %v1223 = vpop.permute.xlu0 %1222
        %1224 = vset.pattern.permute.xlu0 0
        %1225 = vperm.xlu0 %1224, %v1211
        %v1226 = vpop.permute.xlu0 %1225
        %vm1227 = vcmp.eq.s32.totalorder %v1214, 1
        %vm1228 = vcmp.eq.s32.totalorder %v1217, 1
        %vm1229 = vcmp.eq.s32.totalorder %v1220, 1
        %vm1230 = vcmp.eq.s32.totalorder %v1223, 1
        %vm1231 = vcmp.eq.s32.totalorder %v1226, 1
        %v1232 = vsel %vm1227, -3.4028235e+38, %v859
        %v1233 = vsel %vm1228, -3.4028235e+38, %v864
        %v1234 = vsel %vm1229, -3.4028235e+38, %v869
        %v1235 = vsel %vm1230, -3.4028235e+38, %v874
        %v1236 = vsel %vm1231, -3.4028235e+38, %v879
        %vm1237 = vmor %vm1197, %vm992
        %vm1238 = vmor %vm1198, %vm993
        %vm1239 = vmor %vm1199, %vm994
        %vm1240 = vmor %vm1200, %vm995
        %vm1241 = vmor %vm1201, %vm996
        %v1242 = vsel %vm1237, 1, 0
        %v1243 = vsel %vm1238, 1, 0
        %v1244 = vsel %vm1239, 1, 0
        %v1245 = vsel %vm1240, 1, 0
        %v1246 = vsel %vm1241, 1, 0
        %1247 = vset.pattern.permute.xlu0 0
        %1248 = vperm.xlu0 %1247, %v1242
        %v1249 = vpop.permute.xlu0 %1248
        %1250 = vset.pattern.permute.xlu0 0
        %1251 = vperm.xlu0 %1250, %v1243
        %v1252 = vpop.permute.xlu0 %1251
        %1253 = vset.pattern.permute.xlu0 0
        %1254 = vperm.xlu0 %1253, %v1244
        %v1255 = vpop.permute.xlu0 %1254
        %1256 = vset.pattern.permute.xlu0 0
        %1257 = vperm.xlu0 %1256, %v1245
        %v1258 = vpop.permute.xlu0 %1257
        %1259 = vset.pattern.permute.xlu0 0
        %1260 = vperm.xlu0 %1259, %v1246
        %v1261 = vpop.permute.xlu0 %1260
        %vm1262 = vcmp.eq.s32.totalorder %v1249, 1
        %vm1263 = vcmp.eq.s32.totalorder %v1252, 1
        %vm1264 = vcmp.eq.s32.totalorder %v1255, 1
        %vm1265 = vcmp.eq.s32.totalorder %v1258, 1
        %vm1266 = vcmp.eq.s32.totalorder %v1261, 1
        %v1267 = vsel %vm1262, -3.4028235e+38, %v884
        %v1268 = vsel %vm1263, -3.4028235e+38, %v889
        %v1269 = vsel %vm1264, -3.4028235e+38, %v894
        %v1270 = vsel %vm1265, -3.4028235e+38, %v899
        %v1271 = vsel %vm1266, -3.4028235e+38, %v904
        %vm1272 = vmor %vm1197, %vm1037
        %vm1273 = vmor %vm1198, %vm1038
        %vm1274 = vmor %vm1199, %vm1039
        %vm1275 = vmor %vm1200, %vm1040
        %vm1276 = vmor %vm1201, %vm1041
        %v1277 = vsel %vm1272, 1, 0
        %v1278 = vsel %vm1273, 1, 0
        %v1279 = vsel %vm1274, 1, 0
        %v1280 = vsel %vm1275, 1, 0
        %v1281 = vsel %vm1276, 1, 0
        %1282 = vset.pattern.permute.xlu0 0
        %1283 = vperm.xlu0 %1282, %v1277
        %v1284 = vpop.permute.xlu0 %1283
        %1285 = vset.pattern.permute.xlu0 0
        %1286 = vperm.xlu0 %1285, %v1278
        %v1287 = vpop.permute.xlu0 %1286
        %1288 = vset.pattern.permute.xlu0 0
        %1289 = vperm.xlu0 %1288, %v1279
        %v1290 = vpop.permute.xlu0 %1289
        %1291 = vset.pattern.permute.xlu0 0
        %1292 = vperm.xlu0 %1291, %v1280
        %v1293 = vpop.permute.xlu0 %1292
        %1294 = vset.pattern.permute.xlu0 0
        %1295 = vperm.xlu0 %1294, %v1281
        %v1296 = vpop.permute.xlu0 %1295
        %vm1297 = vcmp.eq.s32.totalorder %v1284, 1
        %vm1298 = vcmp.eq.s32.totalorder %v1287, 1
        %vm1299 = vcmp.eq.s32.totalorder %v1290, 1
        %vm1300 = vcmp.eq.s32.totalorder %v1293, 1
        %vm1301 = vcmp.eq.s32.totalorder %v1296, 1
        %v1302 = vsel %vm1297, -3.4028235e+38, %v909
        %v1303 = vsel %vm1298, -3.4028235e+38, %v914
        %v1304 = vsel %vm1299, -3.4028235e+38, %v919
        %v1305 = vsel %vm1300, -3.4028235e+38, %v924
        %v1306 = vsel %vm1301, -3.4028235e+38, %v929
        %v1307 = vmax.f32 %v982, %v1027
        %v1308 = vmax.f32 %v983, %v1028
        %v1309 = vmax.f32 %v984, %v1029
        %v1310 = vmax.f32 %v985, %v1030
        %v1311 = vmax.f32 %v986, %v1031
        %v1312 = vmax.f32 %v1307, %v1072
        %v1313 = vmax.f32 %v1308, %v1073
        %v1314 = vmax.f32 %v1309, %v1074
        %v1315 = vmax.f32 %v1310, %v1075
        %v1316 = vmax.f32 %v1311, %v1076
        %v1317 = vmax.f32 %v1312, %v1117
        %v1318 = vmax.f32 %v1313, %v1118
        %v1319 = vmax.f32 %v1314, %v1119
        %v1320 = vmax.f32 %v1315, %v1120
        %v1321 = vmax.f32 %v1316, %v1121
        %v1322 = vmax.f32 %v1317, %v1152
        %v1323 = vmax.f32 %v1318, %v1153
        %v1324 = vmax.f32 %v1319, %v1154
        %v1325 = vmax.f32 %v1320, %v1155
        %v1326 = vmax.f32 %v1321, %v1156
        %v1327 = vmax.f32 %v1322, %v1187
        %v1328 = vmax.f32 %v1323, %v1188
        %v1329 = vmax.f32 %v1324, %v1189
        %v1330 = vmax.f32 %v1325, %v1190
        %v1331 = vmax.f32 %v1326, %v1191
        %v1332 = vmax.f32 %v1327, %v1232
        %v1333 = vmax.f32 %v1328, %v1233
        %v1334 = vmax.f32 %v1329, %v1234
        %v1335 = vmax.f32 %v1330, %v1235
        %v1336 = vmax.f32 %v1331, %v1236
        %v1337 = vmax.f32 %v1332, %v1267
        %v1338 = vmax.f32 %v1333, %v1268
        %v1339 = vmax.f32 %v1334, %v1269
        %v1340 = vmax.f32 %v1335, %v1270
        %v1341 = vmax.f32 %v1336, %v1271
        %v1342 = vmax.f32 %v1337, %v1302
        %v1343 = vmax.f32 %v1338, %v1303
        %v1344 = vmax.f32 %v1339, %v1304
        %v1345 = vmax.f32 %v1340, %v1305
        %v1346 = vmax.f32 %v1341, %v1306
        %v1347 = vsub.f32 %v982, %v1342
        %v1348 = vsub.f32 %v983, %v1343
        %v1349 = vsub.f32 %v984, %v1344
        %v1350 = vsub.f32 %v985, %v1345
        %v1351 = vsub.f32 %v986, %v1346
        %v1352 = vmul.f32 %v1347, 1.442695
        %v1353 = vpow.pop %v1352
        %v1354 = vmul.f32 %v1348, 1.442695
        %v1355 = vpow.pop %v1354
        %v1356 = vmul.f32 %v1349, 1.442695
        %v1357 = vpow.pop %v1356
        %v1358 = vmul.f32 %v1350, 1.442695
        %v1359 = vpow.pop %v1358
        %v1360 = vmul.f32 %v1351, 1.442695
        %v1361 = vpow.pop %v1360
        %v1362 = vadd.f32 %v1353, 0.0
        %v1363 = vadd.f32 %v1355, 0.0
        %v1364 = vadd.f32 %v1357, 0.0
        %v1365 = vadd.f32 %v1359, 0.0
        %v1366 = vadd.f32 %v1361, 0.0
        %v1367 = vmul.f32 %v456, %v1353
        %v1368 = vmul.f32 %v457, %v1355
        %v1369 = vmul.f32 %v458, %v1357
        %v1370 = vmul.f32 %v459, %v1359
        %v1371 = vmul.f32 %v460, %v1361
        %v1372 = vadd.f32 %v1367, 0.0
        %v1373 = vadd.f32 %v1368, 0.0
        %v1374 = vadd.f32 %v1369, 0.0
        %v1375 = vadd.f32 %v1370, 0.0
        %v1376 = vadd.f32 %v1371, 0.0
        %v1377 = vsub.f32 %v1027, %v1342
        %v1378 = vsub.f32 %v1028, %v1343
        %v1379 = vsub.f32 %v1029, %v1344
        %v1380 = vsub.f32 %v1030, %v1345
        %v1381 = vsub.f32 %v1031, %v1346
        %v1382 = vmul.f32 %v1377, 1.442695
        %v1383 = vpow.pop %v1382
        %v1384 = vmul.f32 %v1378, 1.442695
        %v1385 = vpow.pop %v1384
        %v1386 = vmul.f32 %v1379, 1.442695
        %v1387 = vpow.pop %v1386
        %v1388 = vmul.f32 %v1380, 1.442695
        %v1389 = vpow.pop %v1388
        %v1390 = vmul.f32 %v1381, 1.442695
        %v1391 = vpow.pop %v1390
        %v1392 = vadd.f32 %v1362, %v1383
        %v1393 = vadd.f32 %v1363, %v1385
        %v1394 = vadd.f32 %v1364, %v1387
        %v1395 = vadd.f32 %v1365, %v1389
        %v1396 = vadd.f32 %v1366, %v1391
        %v1397 = vmul.f32 %v461, %v1383
        %v1398 = vmul.f32 %v462, %v1385
        %v1399 = vmul.f32 %v463, %v1387
        %v1400 = vmul.f32 %v464, %v1389
        %v1401 = vmul.f32 %v465, %v1391
        %v1402 = vadd.f32 %v1372, %v1397
        %v1403 = vadd.f32 %v1373, %v1398
        %v1404 = vadd.f32 %v1374, %v1399
        %v1405 = vadd.f32 %v1375, %v1400
        %v1406 = vadd.f32 %v1376, %v1401
        %v1407 = vsub.f32 %v1072, %v1342
        %v1408 = vsub.f32 %v1073, %v1343
        %v1409 = vsub.f32 %v1074, %v1344
        %v1410 = vsub.f32 %v1075, %v1345
        %v1411 = vsub.f32 %v1076, %v1346
        %v1412 = vmul.f32 %v1407, 1.442695
        %v1413 = vpow.pop %v1412
        %v1414 = vmul.f32 %v1408, 1.442695
        %v1415 = vpow.pop %v1414
        %v1416 = vmul.f32 %v1409, 1.442695
        %v1417 = vpow.pop %v1416
        %v1418 = vmul.f32 %v1410, 1.442695
        %v1419 = vpow.pop %v1418
        %v1420 = vmul.f32 %v1411, 1.442695
        %v1421 = vpow.pop %v1420
        %v1422 = vadd.f32 %v1392, %v1413
        %v1423 = vadd.f32 %v1393, %v1415
        %v1424 = vadd.f32 %v1394, %v1417
        %v1425 = vadd.f32 %v1395, %v1419
        %v1426 = vadd.f32 %v1396, %v1421
        %v1427 = vmul.f32 %v466, %v1413
        %v1428 = vmul.f32 %v467, %v1415
        %v1429 = vmul.f32 %v468, %v1417
        %v1430 = vmul.f32 %v469, %v1419
        %v1431 = vmul.f32 %v470, %v1421
        %v1432 = vadd.f32 %v1402, %v1427
        %v1433 = vadd.f32 %v1403, %v1428
        %v1434 = vadd.f32 %v1404, %v1429
        %v1435 = vadd.f32 %v1405, %v1430
        %v1436 = vadd.f32 %v1406, %v1431
        %v1437 = vsub.f32 %v1117, %v1342
        %v1438 = vsub.f32 %v1118, %v1343
        %v1439 = vsub.f32 %v1119, %v1344
        %v1440 = vsub.f32 %v1120, %v1345
        %v1441 = vsub.f32 %v1121, %v1346
        %v1442 = vmul.f32 %v1437, 1.442695
        %v1443 = vpow.pop %v1442
        %v1444 = vmul.f32 %v1438, 1.442695
        %v1445 = vpow.pop %v1444
        %v1446 = vmul.f32 %v1439, 1.442695
        %v1447 = vpow.pop %v1446
        %v1448 = vmul.f32 %v1440, 1.442695
        %v1449 = vpow.pop %v1448
        %v1450 = vmul.f32 %v1441, 1.442695
        %v1451 = vpow.pop %v1450
        %v1452 = vadd.f32 %v1422, %v1443
        %v1453 = vadd.f32 %v1423, %v1445
        %v1454 = vadd.f32 %v1424, %v1447
        %v1455 = vadd.f32 %v1425, %v1449
        %v1456 = vadd.f32 %v1426, %v1451
        %v1457 = vmul.f32 %v471, %v1443
        %v1458 = vmul.f32 %v472, %v1445
        %v1459 = vmul.f32 %v473, %v1447
        %v1460 = vmul.f32 %v474, %v1449
        %v1461 = vmul.f32 %v475, %v1451
        %v1462 = vadd.f32 %v1432, %v1457
        %v1463 = vadd.f32 %v1433, %v1458
        %v1464 = vadd.f32 %v1434, %v1459
        %v1465 = vadd.f32 %v1435, %v1460
        %v1466 = vadd.f32 %v1436, %v1461
        %v1467 = vsub.f32 %v1152, %v1342
        %v1468 = vsub.f32 %v1153, %v1343
        %v1469 = vsub.f32 %v1154, %v1344
        %v1470 = vsub.f32 %v1155, %v1345
        %v1471 = vsub.f32 %v1156, %v1346
        %v1472 = vmul.f32 %v1467, 1.442695
        %v1473 = vpow.pop %v1472
        %v1474 = vmul.f32 %v1468, 1.442695
        %v1475 = vpow.pop %v1474
        %v1476 = vmul.f32 %v1469, 1.442695
        %v1477 = vpow.pop %v1476
        %v1478 = vmul.f32 %v1470, 1.442695
        %v1479 = vpow.pop %v1478
        %v1480 = vmul.f32 %v1471, 1.442695
        %v1481 = vpow.pop %v1480
        %v1482 = vadd.f32 %v1452, %v1473
        %v1483 = vadd.f32 %v1453, %v1475
        %v1484 = vadd.f32 %v1454, %v1477
        %v1485 = vadd.f32 %v1455, %v1479
        %v1486 = vadd.f32 %v1456, %v1481
        %v1487 = vmul.f32 %v476, %v1473
        %v1488 = vmul.f32 %v477, %v1475
        %v1489 = vmul.f32 %v478, %v1477
        %v1490 = vmul.f32 %v479, %v1479
        %v1491 = vmul.f32 %v480, %v1481
        %v1492 = vadd.f32 %v1462, %v1487
        %v1493 = vadd.f32 %v1463, %v1488
        %v1494 = vadd.f32 %v1464, %v1489
        %v1495 = vadd.f32 %v1465, %v1490
        %v1496 = vadd.f32 %v1466, %v1491
        %v1497 = vsub.f32 %v1187, %v1342
        %v1498 = vsub.f32 %v1188, %v1343
        %v1499 = vsub.f32 %v1189, %v1344
        %v1500 = vsub.f32 %v1190, %v1345
        %v1501 = vsub.f32 %v1191, %v1346
        %v1502 = vmul.f32 %v1497, 1.442695
        %v1503 = vpow.pop %v1502
        %v1504 = vmul.f32 %v1498, 1.442695
        %v1505 = vpow.pop %v1504
        %v1506 = vmul.f32 %v1499, 1.442695
        %v1507 = vpow.pop %v1506
        %v1508 = vmul.f32 %v1500, 1.442695
        %v1509 = vpow.pop %v1508
        %v1510 = vmul.f32 %v1501, 1.442695
        %v1511 = vpow.pop %v1510
        %v1512 = vadd.f32 %v1482, %v1503
        %v1513 = vadd.f32 %v1483, %v1505
        %v1514 = vadd.f32 %v1484, %v1507
        %v1515 = vadd.f32 %v1485, %v1509
        %v1516 = vadd.f32 %v1486, %v1511
        %v1517 = vmul.f32 %v481, %v1503
        %v1518 = vmul.f32 %v482, %v1505
        %v1519 = vmul.f32 %v483, %v1507
        %v1520 = vmul.f32 %v484, %v1509
        %v1521 = vmul.f32 %v485, %v1511
        %v1522 = vadd.f32 %v1492, %v1517
        %v1523 = vadd.f32 %v1493, %v1518
        %v1524 = vadd.f32 %v1494, %v1519
        %v1525 = vadd.f32 %v1495, %v1520
        %v1526 = vadd.f32 %v1496, %v1521
        %v1527 = vsub.f32 %v1232, %v1342
        %v1528 = vsub.f32 %v1233, %v1343
        %v1529 = vsub.f32 %v1234, %v1344
        %v1530 = vsub.f32 %v1235, %v1345
        %v1531 = vsub.f32 %v1236, %v1346
        %v1532 = vmul.f32 %v1527, 1.442695
        %v1533 = vpow.pop %v1532
        %v1534 = vmul.f32 %v1528, 1.442695
        %v1535 = vpow.pop %v1534
        %v1536 = vmul.f32 %v1529, 1.442695
        %v1537 = vpow.pop %v1536
        %v1538 = vmul.f32 %v1530, 1.442695
        %v1539 = vpow.pop %v1538
        %v1540 = vmul.f32 %v1531, 1.442695
        %v1541 = vpow.pop %v1540
        %v1542 = vadd.f32 %v1512, %v1533
        %v1543 = vadd.f32 %v1513, %v1535
        %v1544 = vadd.f32 %v1514, %v1537
        %v1545 = vadd.f32 %v1515, %v1539
        %v1546 = vadd.f32 %v1516, %v1541
        %v1547 = vmul.f32 %v486, %v1533
        %v1548 = vmul.f32 %v487, %v1535
        %v1549 = vmul.f32 %v488, %v1537
        %v1550 = vmul.f32 %v489, %v1539
        %v1551 = vmul.f32 %v490, %v1541
        %v1552 = vadd.f32 %v1522, %v1547
        %v1553 = vadd.f32 %v1523, %v1548
        %v1554 = vadd.f32 %v1524, %v1549
        %v1555 = vadd.f32 %v1525, %v1550
        %v1556 = vadd.f32 %v1526, %v1551
        %v1557 = vsub.f32 %v1267, %v1342
        %v1558 = vsub.f32 %v1268, %v1343
        %v1559 = vsub.f32 %v1269, %v1344
        %v1560 = vsub.f32 %v1270, %v1345
        %v1561 = vsub.f32 %v1271, %v1346
        %v1562 = vmul.f32 %v1557, 1.442695
        %v1563 = vpow.pop %v1562
        %v1564 = vmul.f32 %v1558, 1.442695
        %v1565 = vpow.pop %v1564
        %v1566 = vmul.f32 %v1559, 1.442695
        %v1567 = vpow.pop %v1566
        %v1568 = vmul.f32 %v1560, 1.442695
        %v1569 = vpow.pop %v1568
        %v1570 = vmul.f32 %v1561, 1.442695
        %v1571 = vpow.pop %v1570
        %v1572 = vadd.f32 %v1542, %v1563
        %v1573 = vadd.f32 %v1543, %v1565
        %v1574 = vadd.f32 %v1544, %v1567
        %v1575 = vadd.f32 %v1545, %v1569
        %v1576 = vadd.f32 %v1546, %v1571
        %v1577 = vmul.f32 %v491, %v1563
        %v1578 = vmul.f32 %v492, %v1565
        %v1579 = vmul.f32 %v493, %v1567
        %v1580 = vmul.f32 %v494, %v1569
        %v1581 = vmul.f32 %v495, %v1571
        %v1582 = vadd.f32 %v1552, %v1577
        %v1583 = vadd.f32 %v1553, %v1578
        %v1584 = vadd.f32 %v1554, %v1579
        %v1585 = vadd.f32 %v1555, %v1580
        %v1586 = vadd.f32 %v1556, %v1581
        %v1587 = vsub.f32 %v1302, %v1342
        %v1588 = vsub.f32 %v1303, %v1343
        %v1589 = vsub.f32 %v1304, %v1344
        %v1590 = vsub.f32 %v1305, %v1345
        %v1591 = vsub.f32 %v1306, %v1346
        %v1592 = vmul.f32 %v1587, 1.442695
        %v1593 = vpow.pop %v1592
        %v1594 = vmul.f32 %v1588, 1.442695
        %v1595 = vpow.pop %v1594
        %v1596 = vmul.f32 %v1589, 1.442695
        %v1597 = vpow.pop %v1596
        %v1598 = vmul.f32 %v1590, 1.442695
        %v1599 = vpow.pop %v1598
        %v1600 = vmul.f32 %v1591, 1.442695
        %v1601 = vpow.pop %v1600
        %v1602 = vadd.f32 %v1572, %v1593
        %v1603 = vadd.f32 %v1573, %v1595
        %v1604 = vadd.f32 %v1574, %v1597
        %v1605 = vadd.f32 %v1575, %v1599
        %v1606 = vadd.f32 %v1576, %v1601
        %v1607 = vmul.f32 %v496, %v1593
        %v1608 = vmul.f32 %v497, %v1595
        %v1609 = vmul.f32 %v498, %v1597
        %v1610 = vmul.f32 %v499, %v1599
        %v1611 = vmul.f32 %v500, %v1601
        %v1612 = vadd.f32 %v1582, %v1607
        %v1613 = vadd.f32 %v1583, %v1608
        %v1614 = vadd.f32 %v1584, %v1609
        %v1615 = vadd.f32 %v1585, %v1610
        %v1616 = vadd.f32 %v1586, %v1611
        %v1617 = vrcp.pop %v1602
        %v1618 = vrcp.pop %v1603
        %v1619 = vrcp.pop %v1604
        %v1620 = vrcp.pop %v1605
        %v1621 = vrcp.pop %v1606
        %v1622 = vmul.f32 %v1612, %v1617
        %v1623 = vmul.f32 %v1613, %v1618
        %v1624 = vmul.f32 %v1614, %v1619
        %v1625 = vmul.f32 %v1615, %v1620
        %v1626 = vmul.f32 %v1616, %v1621
        %1627 = vst.msk [vmem:[%s454] sm:$0xff] %vm502, %v1622
        %1628 = vst.msk [vmem:[%s454 + $0x8] sm:$0xff] %vm502, %v1623
        %1629 = vst.msk [vmem:[%s454 + $0x10] sm:$0xff] %vm502, %v1624
        %1630 = vst.msk [vmem:[%s454 + $0x18] sm:$0xff] %vm502, %v1625
        %1631 = vst.msk [vmem:[%s454 + $0x20] sm:$0xff] %vm502, %v1626
        %s1632 = smul.u32 5, %s15
        %p1633 = scmp.lt.s32.totalorder %s1632, 9
        %s1634 = scalar_select %p1633, %s1632, 9
        %s1635 = smul.addr %s1634, 8
        %s1636 = scalar_lea.vmem %s4, %s1635
        // Predicated region
        $region75: #{tpu_custom_call.1} parent=69 // pred_check
          %p1637 = pneg %p132
        $region76: #{tpu_custom_call.1} parent=69 // pred_check_branch
          %1639 = sbr.rel (%p1637) target = $region78
        $region77: #{tpu_custom_call.1} parent=69 // pred_region
          %s1640 = smul.u32 5, %s15
        $region78: #{tpu_custom_call.1} parent=69 // pred_fallthru
          _
      $region70: #{tpu_custom_call.1} parent=5 // pred_fallthru
        _
      %p1641 = scmp.le.s32.totalorder 2, %s10
      // Predicated region
      $region79: #{tpu_custom_call.1} parent=5 // pred_check
        %p1642 = pneg %p1641
      $region80: #{tpu_custom_call.1} parent=5 // pred_check_branch
        %1644 = sbr.rel (%p1642) target = $region82
      $region81: #{tpu_custom_call.1} parent=5 // pred_region
        %s1645 = ssub.s32 %s10, 2
        // Predicated region
        $region83: #{tpu_custom_call.1} parent=81 // pred_check
          %p1646 = pneg %p138
        $region84: #{tpu_custom_call.1} parent=81 // pred_check_branch
          %1648 = sbr.rel (%p1646) target = $region86
        $region85: #{tpu_custom_call.1} parent=81 // pred_region
          %s1649 = smul.u32 5, %s16
          %p1650 = scmp.lt.s32.totalorder %s1649, 9
          %s1651 = scalar_select %p1650, %s1649, 9
          %s1652 = smul.addr %s1651, 8
          %s1653 = scalar_lea.vmem %s4, %s1652
        $region86: #{tpu_custom_call.1} parent=81 // pred_fallthru
          _
      $region82: #{tpu_custom_call.1} parent=5 // pred_fallthru
        _
    $region6: #{tpu_custom_call.1} parent=1 // loop_footer
      %s14 = sadd.s32 1, %s10
    $region7: #{tpu_custom_call.1} parent=1 // loop_footer_branch
      %9 = sbr.rel target = $region3
    $region8: #{tpu_custom_call.1} parent=1 // loop_exit
      _

// kernel: tpu_custom_call.1
$region0: #{tpu_custom_call.1}
  #allocation0 [shape = 'u32[]', space=smem, size = 0x4, offset = 0x4, fixed_abs, tag = 'smem constant byte address 0x4 - core index']
  #allocation1 [shape = 'u32[144,128]{1,0:T(1,128)}', space=vmem, size = 0x12000, scoped, tag = 'internal scratch']
  %s0 = inlined_call_operand.vmem [shape: f32[9,80,4], index: 0, kind: input, shape index: {}]
  %s1 = inlined_call_operand.vmem [shape: f32[4,4], index: 1, kind: input, shape index: {}]
  %s2 = inlined_call_operand.vmem [shape: s32[80,1], index: 2, kind: input, shape index: {}]
  %s3 = inlined_call_operand.vmem [shape: s32[80,1], index: 3, kind: input, shape index: {}]
  %s4 = inlined_call_operand.vmem [shape: f32[80,4], index: 4, kind: output, shape index: {}]
  %s5 = sld [smem:[#allocation0]]
  $region87: #{tpu_custom_call.1} parent=0
    _
  %s7 = ssub.s32 1, %s5
  %s8 = scalar_select 0, %s7, %s5
  $region1: #{tpu_custom_call.1} parent=0
    #allocation2 [shape = 'u8[368640]{0}', space=vmem, size = 0x5a000, scoped, tag = 'input window, operand 0']
    loop: start=0, step=1, limit=4
    $region2: #{tpu_custom_call.1} parent=1 // loop_pre_header
      _
    $region3: #{tpu_custom_call.1} parent=1 // loop_header
      %s10 = sphi 0, %s14
      %p11 = scmp.ge.s32.totalorder %s10, 4
      %s20 = sphi 0, %s22
      %s23 = sphi 0, %s20
      %s24 = sphi 0, %s23
      %s40 = sphi 0, %s24
      %s44 = sphi 0, %s44
      %s46 = sphi 0, %s44
      %s47 = sphi 0, %s46
      %s61 = sphi 0, %s47
      %s67 = sphi 0, %s69
      %s70 = sphi 0, %s67
      %s71 = sphi 0, %s70
      %s87 = sphi 0, %s71
      %s93 = sphi 0, %s95
      %s96 = sphi 0, %s93
      %s97 = sphi 0, %s96
      %s113 = sphi 0, %s97
      %s119 = sphi 0, %s121
      %s122 = sphi 0, %s119
      %s123 = sphi 0, %s122
      %s139 = sphi 0, %s123
    $region4: #{tpu_custom_call.1} parent=1 // loop_header_branch
      %13 = sbr.rel (%p11) target = $region8
    $region5: #{tpu_custom_call.1} parent=1 // loop_body
      %s15 = ssub.s32 %s10, 1
      %s16 = ssub.s32 %s10, 2
      %s17 = sadd.s32 %s10, 1
      %s18 = ssub.s32 %s10, %s17
      %p19 = scmp.eq.s32.totalorder %s18, 0
      %s21 = sadd.s32 %s20, 1
      %s22 = scalar_select %p19, %s20, %s21
      %p25 = pneg %p19
      %p26 = scmp.eq.s32.totalorder %s10, 1
      %p27 = por %p25, %p26
      %p28 = scmp.ne.s32.totalorder %s20, %s23
      %p29 = scmp.eq.s32.totalorder %s10, 0
      %p30 = por %p28, %p29
      %p31 = scmp.ne.s32.totalorder %s20, %s23
      %p32 = scmp.eq.s32.totalorder %s15, 1
      %p33 = por %p31, %p32
      %p34 = scmp.ne.s32.totalorder %s23, %s24
      %p35 = scmp.eq.s32.totalorder %s15, 0
      %p36 = por %p34, %p35
      %p37 = scmp.ne.s32.totalorder %s23, %s24
      %p38 = scmp.eq.s32.totalorder %s16, 1
      %p39 = por %p37, %p38
      %p41 = scmp.ne.s32.totalorder %s24, %s40
      %p42 = scmp.eq.s32.totalorder %s16, 0
      %p43 = por %p41, %p42
      %s45 = sadd.s32 %s44, 1
      %p48 = scmp.eq.s32.totalorder %s10, 1
      %p49 = scmp.ne.s32.totalorder %s44, %s46
      %p50 = scmp.eq.s32.totalorder %s10, 0
      %p51 = por %p49, %p50
      %p52 = scmp.ne.s32.totalorder %s44, %s46
      %p53 = scmp.eq.s32.totalorder %s15, 1
      %p54 = por %p52, %p53
      %p55 = scmp.ne.s32.totalorder %s46, %s47
      %p56 = scmp.eq.s32.totalorder %s15, 0
      %p57 = por %p55, %p56
      %p58 = scmp.ne.s32.totalorder %s46, %s47
      %p59 = scmp.eq.s32.totalorder %s16, 1
      %p60 = por %p58, %p59
      %p62 = scmp.ne.s32.totalorder %s47, %s61
      %p63 = scmp.eq.s32.totalorder %s16, 0
      %p64 = por %p62, %p63
      %s65 = ssub.s32 %s10, %s17
      %p66 = scmp.eq.s32.totalorder %s65, 0
      %s68 = sadd.s32 %s67, 1
      %s69 = scalar_select %p66, %s67, %s68
      %p72 = pneg %p66
      %p73 = scmp.eq.s32.totalorder %s10, 1
      %p74 = por %p72, %p73
      %p75 = scmp.ne.s32.totalorder %s67, %s70
      %p76 = scmp.eq.s32.totalorder %s10, 0
      %p77 = por %p75, %p76
      %p78 = scmp.ne.s32.totalorder %s67, %s70
      %p79 = scmp.eq.s32.totalorder %s15, 1
      %p80 = por %p78, %p79
      %p81 = scmp.ne.s32.totalorder %s70, %s71
      %p82 = scmp.eq.s32.totalorder %s15, 0
      %p83 = por %p81, %p82
      %p84 = scmp.ne.s32.totalorder %s70, %s71
      %p85 = scmp.eq.s32.totalorder %s16, 1
      %p86 = por %p84, %p85
      %p88 = scmp.ne.s32.totalorder %s71, %s87
      %p89 = scmp.eq.s32.totalorder %s16, 0
      %p90 = por %p88, %p89
      %s91 = ssub.s32 %s10, %s17
      %p92 = scmp.eq.s32.totalorder %s91, 0
      %s94 = sadd.s32 %s93, 1
      %s95 = scalar_select %p92, %s93, %s94
      %p98 = pneg %p92
      %p99 = scmp.eq.s32.totalorder %s10, 1
      %p100 = por %p98, %p99
      %p101 = scmp.ne.s32.totalorder %s93, %s96
      %p102 = scmp.eq.s32.totalorder %s10, 0
      %p103 = por %p101, %p102
      %p104 = scmp.ne.s32.totalorder %s93, %s96
      %p105 = scmp.eq.s32.totalorder %s15, 1
      %p106 = por %p104, %p105
      %p107 = scmp.ne.s32.totalorder %s96, %s97
      %p108 = scmp.eq.s32.totalorder %s15, 0
      %p109 = por %p107, %p108
      %p110 = scmp.ne.s32.totalorder %s96, %s97
      %p111 = scmp.eq.s32.totalorder %s16, 1
      %p112 = por %p110, %p111
      %p114 = scmp.ne.s32.totalorder %s97, %s113
      %p115 = scmp.eq.s32.totalorder %s16, 0
      %p116 = por %p114, %p115
      %s117 = ssub.s32 %s10, %s17
      %p118 = scmp.eq.s32.totalorder %s117, 0
      %s120 = sadd.s32 %s119, 1
      %s121 = scalar_select %p118, %s119, %s120
      %p124 = pneg %p118
      %p125 = scmp.eq.s32.totalorder %s10, 1
      %p126 = por %p124, %p125
      %p127 = scmp.ne.s32.totalorder %s119, %s122
      %p128 = scmp.eq.s32.totalorder %s10, 0
      %p129 = por %p127, %p128
      %p130 = scmp.ne.s32.totalorder %s119, %s122
      %p131 = scmp.eq.s32.totalorder %s15, 1
      %p132 = por %p130, %p131
      %p133 = scmp.ne.s32.totalorder %s122, %s123
      %p134 = scmp.eq.s32.totalorder %s15, 0
      %p135 = por %p133, %p134
      %p136 = scmp.ne.s32.totalorder %s122, %s123
      %p137 = scmp.eq.s32.totalorder %s16, 1
      %p138 = por %p136, %p137
      %p140 = scmp.ne.s32.totalorder %s123, %s139
      %p141 = scmp.eq.s32.totalorder %s16, 0
      %p142 = por %p140, %p141
      %p143 = scmp.le.s32.totalorder 1, %s10
      %p144 = scmp.lt.s32.totalorder %s10, 3
      %p145 = pnand %p143, %p144
      %p146 = pneg %p145
      // Predicated region
      $region9: #{tpu_custom_call.1} parent=5 // pred_check
        _
      $region10: #{tpu_custom_call.1} parent=5 // pred_check_branch
        %148 = sbr.rel (%p145) target = $region12
      $region11: #{tpu_custom_call.1} parent=5 // pred_region
        %s149 = ssub.s32 %s10, 1
        // Predicated region
        $region13: #{tpu_custom_call.1} parent=11 // pred_check
          %p150 = pneg %p57
        $region14: #{tpu_custom_call.1} parent=11 // pred_check_branch
          %152 = sbr.rel (%p150) target = $region16
        $region15: #{tpu_custom_call.1} parent=11 // pred_region
          _
        $region16: #{tpu_custom_call.1} parent=11 // pred_fallthru
          _
      $region12: #{tpu_custom_call.1} parent=5 // pred_fallthru
        _
      %p153 = scmp.lt.s32.totalorder %s10, 2
      // Predicated region
      $region17: #{tpu_custom_call.1} parent=5 // pred_check
        %p154 = pneg %p153
      $region18: #{tpu_custom_call.1} parent=5 // pred_check_branch
        %156 = sbr.rel (%p154) target = $region20
      $region19: #{tpu_custom_call.1} parent=5 // pred_region
        // Predicated region
        $region21: #{tpu_custom_call.1} parent=19 // pred_check
          %p157 = pneg %p30
        $region22: #{tpu_custom_call.1} parent=19 // pred_check_branch
          %159 = sbr.rel (%p157) target = $region24
        $region23: #{tpu_custom_call.1} parent=19 // pred_region
          %s160 = sand.u32 %s20, 1
          %s161 = sand.u32 %s20, 1
          %s162 = smul.addr %s161, 360
          %s163 = scalar_lea.vmem [#allocation2], %s162
          %s164 = smul.u32 5, %s10
          %s165 = smul.addr %s164, 8
          %s166 = scalar_lea.vmem %s0, %s165
          // Predicated region
          $region25: #{tpu_custom_call.1} parent=23 // pred_check
            _
          $region26: #{tpu_custom_call.1} parent=23 // pred_check_branch
            %168 = sbr.rel (0) target = $region28
          $region27: #{tpu_custom_call.1} parent=23 // pred_region
            // Predicated region
            $region29: #{tpu_custom_call.1} parent=27 // pred_check
              _
            $region30: #{tpu_custom_call.1} parent=27 // pred_check_branch
              %170 = sbr.rel (0) target = $region32
            $region31: #{tpu_custom_call.1} parent=27 // pred_region
              // Predicated region
              $region44: #{tpu_custom_call.1} parent=31 // pred_check
                _
              $region45: #{tpu_custom_call.1} parent=31 // pred_check_branch
                %274 = sbr.rel (0) target = $region47
              $region46: #{tpu_custom_call.1} parent=31 // pred_region
                loop: start=0, step=1, limit=1
                $region48: #{tpu_custom_call.1} parent=46 // loop_pre_header
                  _
                $region49: #{tpu_custom_call.1} parent=46 // loop_header
                  %s276 = sphi 0, %s280
                  %p277 = scmp.ge.s32.totalorder %s276, 1
                  %s281 = sphi %s166, %s166
                  %s282 = sphi %s163, %s163
                $region50: #{tpu_custom_call.1} parent=46 // loop_header_branch
                  %279 = sbr.rel (%p277) target = $region54
                $region51: #{tpu_custom_call.1} parent=46 // loop_body
                  %v283 = vld [vmem:[%s281] sm:$0xff]
                  %284 = vst [vmem:[%s282] sm:$0xff] %v283
                  %v285 = vld [vmem:[%s281 + $0x8] sm:$0xff]
                  %286 = vst [vmem:[%s282 + $0x8] sm:$0xff] %v285
                  %v287 = vld [vmem:[%s281 + $0x10] sm:$0xff]
                  %288 = vst [vmem:[%s282 + $0x10] sm:$0xff] %v287
                  %v289 = vld [vmem:[%s281 + $0x18] sm:$0xff]
                  %290 = vst [vmem:[%s282 + $0x18] sm:$0xff] %v289
                  %v291 = vld [vmem:[%s281 + $0x20] sm:$0xff]
                  %292 = vst [vmem:[%s282 + $0x20] sm:$0xff] %v291
                  %v293 = vld [vmem:[%s281 + $0x50] sm:$0xff]
                  %294 = vst [vmem:[%s282 + $0x28] sm:$0xff] %v293
                  %v295 = vld [vmem:[%s281 + $0x58] sm:$0xff]
                  %296 = vst [vmem:[%s282 + $0x30] sm:$0xff] %v295
                  %v297 = vld [vmem:[%s281 + $0x60] sm:$0xff]
                  %298 = vst [vmem:[%s282 + $0x38] sm:$0xff] %v297
                  %v299 = vld [vmem:[%s281 + $0x68] sm:$0xff]
                  %300 = vst [vmem:[%s282 + $0x40] sm:$0xff] %v299
                  %v301 = vld [vmem:[%s281 + $0x70] sm:$0xff]
                  %302 = vst [vmem:[%s282 + $0x48] sm:$0xff] %v301
                  %v303 = vld [vmem:[%s281 + $0xa0] sm:$0xff]
                  %304 = vst [vmem:[%s282 + $0x50] sm:$0xff] %v303
                  %v305 = vld [vmem:[%s281 + $0xa8] sm:$0xff]
                  %306 = vst [vmem:[%s282 + $0x58] sm:$0xff] %v305
                  %v307 = vld [vmem:[%s281 + $0xb0] sm:$0xff]
                  %308 = vst [vmem:[%s282 + $0x60] sm:$0xff] %v307
                  %v309 = vld [vmem:[%s281 + $0xb8] sm:$0xff]
                  %310 = vst [vmem:[%s282 + $0x68] sm:$0xff] %v309
                  %v311 = vld [vmem:[%s281 + $0xc0] sm:$0xff]
                  %312 = vst [vmem:[%s282 + $0x70] sm:$0xff] %v311
                  %v313 = vld [vmem:[%s281 + $0xf0] sm:$0xff]
                  %314 = vst [vmem:[%s282 + $0x78] sm:$0xff] %v313
                  %v315 = vld [vmem:[%s281 + $0xf8] sm:$0xff]
                  %316 = vst [vmem:[%s282 + $0x80] sm:$0xff] %v315
                  %v317 = vld [vmem:[%s281 + $0x100] sm:$0xff]
                  %318 = vst [vmem:[%s282 + $0x88] sm:$0xff] %v317
                  %v319 = vld [vmem:[%s281 + $0x108] sm:$0xff]
                  %320 = vst [vmem:[%s282 + $0x90] sm:$0xff] %v319
                  %v321 = vld [vmem:[%s281 + $0x110] sm:$0xff]
                  %322 = vst [vmem:[%s282 + $0x98] sm:$0xff] %v321
                  %v323 = vld [vmem:[%s281 + $0x140] sm:$0xff]
                  %324 = vst [vmem:[%s282 + $0xa0] sm:$0xff] %v323
                  %v325 = vld [vmem:[%s281 + $0x148] sm:$0xff]
                  %326 = vst [vmem:[%s282 + $0xa8] sm:$0xff] %v325
                  %v327 = vld [vmem:[%s281 + $0x150] sm:$0xff]
                  %328 = vst [vmem:[%s282 + $0xb0] sm:$0xff] %v327
                  %v329 = vld [vmem:[%s281 + $0x158] sm:$0xff]
                  %330 = vst [vmem:[%s282 + $0xb8] sm:$0xff] %v329
                  %v331 = vld [vmem:[%s281 + $0x160] sm:$0xff]
                  %332 = vst [vmem:[%s282 + $0xc0] sm:$0xff] %v331
                  %v333 = vld [vmem:[%s281 + $0x190] sm:$0xff]
                  %334 = vst [vmem:[%s282 + $0xc8] sm:$0xff] %v333
                  %v335 = vld [vmem:[%s281 + $0x198] sm:$0xff]
                  %336 = vst [vmem:[%s282 + $0xd0] sm:$0xff] %v335
                  %v337 = vld [vmem:[%s281 + $0x1a0] sm:$0xff]
                  %338 = vst [vmem:[%s282 + $0xd8] sm:$0xff] %v337
                  %v339 = vld [vmem:[%s281 + $0x1a8] sm:$0xff]
                  %340 = vst [vmem:[%s282 + $0xe0] sm:$0xff] %v339
                  %v341 = vld [vmem:[%s281 + $0x1b0] sm:$0xff]
                  %342 = vst [vmem:[%s282 + $0xe8] sm:$0xff] %v341
                  %v343 = vld [vmem:[%s281 + $0x1e0] sm:$0xff]
                  %344 = vst [vmem:[%s282 + $0xf0] sm:$0xff] %v343
                  %v345 = vld [vmem:[%s281 + $0x1e8] sm:$0xff]
                  %346 = vst [vmem:[%s282 + $0xf8] sm:$0xff] %v345
                  %v347 = vld [vmem:[%s281 + $0x1f0] sm:$0xff]
                  %348 = vst [vmem:[%s282 + $0x100] sm:$0xff] %v347
                  %v349 = vld [vmem:[%s281 + $0x1f8] sm:$0xff]
                  %350 = vst [vmem:[%s282 + $0x108] sm:$0xff] %v349
                  %v351 = vld [vmem:[%s281 + $0x200] sm:$0xff]
                  %352 = vst [vmem:[%s282 + $0x110] sm:$0xff] %v351
                  %v353 = vld [vmem:[%s281 + $0x230] sm:$0xff]
                  %354 = vst [vmem:[%s282 + $0x118] sm:$0xff] %v353
                  %v355 = vld [vmem:[%s281 + $0x238] sm:$0xff]
                  %356 = vst [vmem:[%s282 + $0x120] sm:$0xff] %v355
                  %v357 = vld [vmem:[%s281 + $0x240] sm:$0xff]
                  %358 = vst [vmem:[%s282 + $0x128] sm:$0xff] %v357
                  %v359 = vld [vmem:[%s281 + $0x248] sm:$0xff]
                  %360 = vst [vmem:[%s282 + $0x130] sm:$0xff] %v359
                  %v361 = vld [vmem:[%s281 + $0x250] sm:$0xff]
                  %362 = vst [vmem:[%s282 + $0x138] sm:$0xff] %v361
                  %v363 = vld [vmem:[%s281 + $0x280] sm:$0xff]
                  %364 = vst [vmem:[%s282 + $0x140] sm:$0xff] %v363
                  %v365 = vld [vmem:[%s281 + $0x288] sm:$0xff]
                  %366 = vst [vmem:[%s282 + $0x148] sm:$0xff] %v365
                  %v367 = vld [vmem:[%s281 + $0x290] sm:$0xff]
                  %368 = vst [vmem:[%s282 + $0x150] sm:$0xff] %v367
                  %v369 = vld [vmem:[%s281 + $0x298] sm:$0xff]
                  %370 = vst [vmem:[%s282 + $0x158] sm:$0xff] %v369
                  %v371 = vld [vmem:[%s281 + $0x2a0] sm:$0xff]
                  %372 = vst [vmem:[%s282 + $0x160] sm:$0xff] %v371
                $region52: #{tpu_custom_call.1} parent=46 // loop_footer
                  %s280 = sadd.s32 1, %s276
                $region53: #{tpu_custom_call.1} parent=46 // loop_footer_branch
                  %275 = sbr.rel target = $region49
                $region54: #{tpu_custom_call.1} parent=46 // loop_exit
                  _
              $region47: #{tpu_custom_call.1} parent=31 // pred_fallthru
                _
              // Predicated region
              $region55: #{tpu_custom_call.1} parent=31 // pred_check
                _
              $region56: #{tpu_custom_call.1} parent=31 // pred_check_branch
                %374 = sbr.rel target = $region58
              $region57: #{tpu_custom_call.1} parent=31 // pred_region
                _
              $region58: #{tpu_custom_call.1} parent=31 // pred_fallthru
                _
            $region32: #{tpu_custom_call.1} parent=27 // pred_fallthru
              _
            // Predicated region
            $region33: #{tpu_custom_call.1} parent=27 // pred_check
              _
            $region34: #{tpu_custom_call.1} parent=27 // pred_check_branch
              %172 = sbr.rel target = $region36
            $region35: #{tpu_custom_call.1} parent=27 // pred_region
              %s174 = ssub.s32 256, 1
              loop: start=0, step=1, limit=1
              $region37: #{tpu_custom_call.1} parent=35 // loop_pre_header
                _
              $region38: #{tpu_custom_call.1} parent=35 // loop_header
                %s176 = sphi 0, %s180
                %p177 = scmp.ge.s32.totalorder %s176, 1
                %s181 = sphi %s166, %s166
                %s182 = sphi %s163, %s163
              $region39: #{tpu_custom_call.1} parent=35 // loop_header_branch
                %179 = sbr.rel (%p177) target = $region43
              $region40: #{tpu_custom_call.1} parent=35 // loop_body
                %v183 = vld [vmem:[%s181] sm:%s174]
                %184 = vst [vmem:[%s182] sm:%s174] %v183
                %v185 = vld [vmem:[%s181 + $0x8] sm:%s174]
                %186 = vst [vmem:[%s182 + $0x8] sm:%s174] %v185
                %v187 = vld [vmem:[%s181 + $0x10] sm:%s174]
                %188 = vst [vmem:[%s182 + $0x10] sm:%s174] %v187
                %v189 = vld [vmem:[%s181 + $0x18] sm:%s174]
                %190 = vst [vmem:[%s182 + $0x18] sm:%s174] %v189
                %v191 = vld [vmem:[%s181 + $0x20] sm:%s174]
                %192 = vst [vmem:[%s182 + $0x20] sm:%s174] %v191
                %v193 = vld [vmem:[%s181 + $0x50] sm:%s174]
                %194 = vst [vmem:[%s182 + $0x28] sm:%s174] %v193
                %v195 = vld [vmem:[%s181 + $0x58] sm:%s174]
                %196 = vst [vmem:[%s182 + $0x30] sm:%s174] %v195
                %v197 = vld [vmem:[%s181 + $0x60] sm:%s174]
                %198 = vst [vmem:[%s182 + $0x38] sm:%s174] %v197
                %v199 = vld [vmem:[%s181 + $0x68] sm:%s174]
                %200 = vst [vmem:[%s182 + $0x40] sm:%s174] %v199
                %v201 = vld [vmem:[%s181 + $0x70] sm:%s174]
                %202 = vst [vmem:[%s182 + $0x48] sm:%s174] %v201
                %v203 = vld [vmem:[%s181 + $0xa0] sm:%s174]
                %204 = vst [vmem:[%s182 + $0x50] sm:%s174] %v203
                %v205 = vld [vmem:[%s181 + $0xa8] sm:%s174]
                %206 = vst [vmem:[%s182 + $0x58] sm:%s174] %v205
                %v207 = vld [vmem:[%s181 + $0xb0] sm:%s174]
                %208 = vst [vmem:[%s182 + $0x60] sm:%s174] %v207
                %v209 = vld [vmem:[%s181 + $0xb8] sm:%s174]
                %210 = vst [vmem:[%s182 + $0x68] sm:%s174] %v209
                %v211 = vld [vmem:[%s181 + $0xc0] sm:%s174]
                %212 = vst [vmem:[%s182 + $0x70] sm:%s174] %v211
                %v213 = vld [vmem:[%s181 + $0xf0] sm:%s174]
                %214 = vst [vmem:[%s182 + $0x78] sm:%s174] %v213
                %v215 = vld [vmem:[%s181 + $0xf8] sm:%s174]
                %216 = vst [vmem:[%s182 + $0x80] sm:%s174] %v215
                %v217 = vld [vmem:[%s181 + $0x100] sm:%s174]
                %218 = vst [vmem:[%s182 + $0x88] sm:%s174] %v217
                %v219 = vld [vmem:[%s181 + $0x108] sm:%s174]
                %220 = vst [vmem:[%s182 + $0x90] sm:%s174] %v219
                %v221 = vld [vmem:[%s181 + $0x110] sm:%s174]
                %222 = vst [vmem:[%s182 + $0x98] sm:%s174] %v221
                %v223 = vld [vmem:[%s181 + $0x140] sm:%s174]
                %224 = vst [vmem:[%s182 + $0xa0] sm:%s174] %v223
                %v225 = vld [vmem:[%s181 + $0x148] sm:%s174]
                %226 = vst [vmem:[%s182 + $0xa8] sm:%s174] %v225
                %v227 = vld [vmem:[%s181 + $0x150] sm:%s174]
                %228 = vst [vmem:[%s182 + $0xb0] sm:%s174] %v227
                %v229 = vld [vmem:[%s181 + $0x158] sm:%s174]
                %230 = vst [vmem:[%s182 + $0xb8] sm:%s174] %v229
                %v231 = vld [vmem:[%s181 + $0x160] sm:%s174]
                %232 = vst [vmem:[%s182 + $0xc0] sm:%s174] %v231
                %v233 = vld [vmem:[%s181 + $0x190] sm:%s174]
                %234 = vst [vmem:[%s182 + $0xc8] sm:%s174] %v233
                %v235 = vld [vmem:[%s181 + $0x198] sm:%s174]
                %236 = vst [vmem:[%s182 + $0xd0] sm:%s174] %v235
                %v237 = vld [vmem:[%s181 + $0x1a0] sm:%s174]
                %238 = vst [vmem:[%s182 + $0xd8] sm:%s174] %v237
                %v239 = vld [vmem:[%s181 + $0x1a8] sm:%s174]
                %240 = vst [vmem:[%s182 + $0xe0] sm:%s174] %v239
                %v241 = vld [vmem:[%s181 + $0x1b0] sm:%s174]
                %242 = vst [vmem:[%s182 + $0xe8] sm:%s174] %v241
                %v243 = vld [vmem:[%s181 + $0x1e0] sm:%s174]
                %244 = vst [vmem:[%s182 + $0xf0] sm:%s174] %v243
                %v245 = vld [vmem:[%s181 + $0x1e8] sm:%s174]
                %246 = vst [vmem:[%s182 + $0xf8] sm:%s174] %v245
                %v247 = vld [vmem:[%s181 + $0x1f0] sm:%s174]
                %248 = vst [vmem:[%s182 + $0x100] sm:%s174] %v247
                %v249 = vld [vmem:[%s181 + $0x1f8] sm:%s174]
                %250 = vst [vmem:[%s182 + $0x108] sm:%s174] %v249
                %v251 = vld [vmem:[%s181 + $0x200] sm:%s174]
                %252 = vst [vmem:[%s182 + $0x110] sm:%s174] %v251
                %v253 = vld [vmem:[%s181 + $0x230] sm:%s174]
                %254 = vst [vmem:[%s182 + $0x118] sm:%s174] %v253
                %v255 = vld [vmem:[%s181 + $0x238] sm:%s174]
                %256 = vst [vmem:[%s182 + $0x120] sm:%s174] %v255
                %v257 = vld [vmem:[%s181 + $0x240] sm:%s174]
                %258 = vst [vmem:[%s182 + $0x128] sm:%s174] %v257
                %v259 = vld [vmem:[%s181 + $0x248] sm:%s174]
                %260 = vst [vmem:[%s182 + $0x130] sm:%s174] %v259
                %v261 = vld [vmem:[%s181 + $0x250] sm:%s174]
                %262 = vst [vmem:[%s182 + $0x138] sm:%s174] %v261
                %v263 = vld [vmem:[%s181 + $0x280] sm:%s174]
                %264 = vst [vmem:[%s182 + $0x140] sm:%s174] %v263
                %v265 = vld [vmem:[%s181 + $0x288] sm:%s174]
                %266 = vst [vmem:[%s182 + $0x148] sm:%s174] %v265
                %v267 = vld [vmem:[%s181 + $0x290] sm:%s174]
                %268 = vst [vmem:[%s182 + $0x150] sm:%s174] %v267
                %v269 = vld [vmem:[%s181 + $0x298] sm:%s174]
                %270 = vst [vmem:[%s182 + $0x158] sm:%s174] %v269
                %v271 = vld [vmem:[%s181 + $0x2a0] sm:%s174]
                %272 = vst [vmem:[%s182 + $0x160] sm:%s174] %v271
              $region41: #{tpu_custom_call.1} parent=35 // loop_footer
                %s180 = sadd.s32 1, %s176
              $region42: #{tpu_custom_call.1} parent=35 // loop_footer_branch
                %175 = sbr.rel target = $region38
              $region43: #{tpu_custom_call.1} parent=35 // loop_exit
                _
            $region36: #{tpu_custom_call.1} parent=27 // pred_fallthru
              _
          $region28: #{tpu_custom_call.1} parent=23 // pred_fallthru
            _
          %375 = vnop
        $region24: #{tpu_custom_call.1} parent=19 // pred_fallthru
          _
        // Predicated region
        $region59: #{tpu_custom_call.1} parent=19 // pred_check
          %p376 = pneg %p77
        $region60: #{tpu_custom_call.1} parent=19 // pred_check_branch
          %378 = sbr.rel (%p376) target = $region62
        $region61: #{tpu_custom_call.1} parent=19 // pred_region
          %s379 = smul.u32 5, %s10
          %p380 = scmp.lt.s32.totalorder %s379, 9
          %s381 = scalar_select %p380, %s379, 9
          %s382 = smul.addr %s381, 8
          %s383 = scalar_lea.vmem %s2, %s382
          %s384 = smul.u32 5, %s10
        $region62: #{tpu_custom_call.1} parent=19 // pred_fallthru
          _
        // Predicated region
        $region63: #{tpu_custom_call.1} parent=19 // pred_check
          %p385 = pneg %p103
        $region64: #{tpu_custom_call.1} parent=19 // pred_check_branch
          %387 = sbr.rel (%p385) target = $region66
        $region65: #{tpu_custom_call.1} parent=19 // pred_region
          %s388 = smul.u32 5, %s10
          %p389 = scmp.lt.s32.totalorder %s388, 9
          %s390 = scalar_select %p389, %s388, 9
          %s391 = smul.addr %s390, 8
          %s392 = scalar_lea.vmem %s3, %s391
          %s393 = smul.u32 5, %s10
        $region66: #{tpu_custom_call.1} parent=19 // pred_fallthru
          _
      $region20: #{tpu_custom_call.1} parent=5 // pred_fallthru
        _
      %p394 = scmp.le.s32.totalorder 1, %s10
      %p395 = scmp.lt.s32.totalorder %s10, 3
      %p396 = pnand %p394, %p395
      %p397 = pneg %p396
      // Predicated region
      $region67: #{tpu_custom_call.1} parent=5 // pred_check
        _
      $region68: #{tpu_custom_call.1} parent=5 // pred_check_branch
        %399 = sbr.rel (%p396) target = $region70
      $region69: #{tpu_custom_call.1} parent=5 // pred_region
        %s400 = ssub.s32 %s10, 1
        %s401 = sand.u32 %s23, 1
        %s402 = sand.u32 %s23, 1
        %s403 = smul.addr %s402, 360
        %s404 = scalar_lea.vmem [#allocation2], %s403
        // Predicated region
        $region71: #{tpu_custom_call.1} parent=69 // pred_check
          %p405 = pneg %p36
        $region72: #{tpu_custom_call.1} parent=69 // pred_check_branch
          %407 = sbr.rel (%p405) target = $region74
        $region73: #{tpu_custom_call.1} parent=69 // pred_region
          _
        $region74: #{tpu_custom_call.1} parent=69 // pred_fallthru
          _
        %s408 = sand.u32 %s23, 1
        %s409 = sand.u32 %s23, 1
        %s410 = smul.addr %s409, 360
        %s411 = scalar_lea.vmem [#allocation2], %s410
        %p412 = pneg %p36
        %p413 = pneg %p33
        %p414 = pneg %p57
        %p415 = pneg %p54
        %s416 = smul.u32 5, %s15
        %p417 = scmp.lt.s32.totalorder %s416, 9
        %s418 = scalar_select %p417, %s416, 9
        %s419 = smul.addr %s418, 8
        %s420 = scalar_lea.vmem %s2, %s419
        %p421 = pneg %p83
        %p422 = pneg %p80
        %s423 = smul.u32 5, %s15
        %p424 = scmp.lt.s32.totalorder %s423, 9
        %s425 = scalar_select %p424, %s423, 9
        %s426 = smul.addr %s425, 8
        %s427 = scalar_lea.vmem %s3, %s426
        %p428 = pneg %p109
        %p429 = pneg %p106
        %p430 = pneg %p135
        %p431 = pneg %p132
        %s432 = smul.u32 5, %s15
        %p433 = scmp.lt.s32.totalorder %s432, 9
        %s434 = scalar_select %p433, %s432, 9
        %s435 = smul.addr %s434, 8
        %s436 = scalar_lea.vmem %s4, %s435
        %s437 = smul.u32 5, %s15
        %s438 = smul.u32 5, %s15
        %p439 = scmp.lt.s32.totalorder %s438, 9
        %s440 = scalar_select %p439, %s438, 9
        %s441 = smul.addr %s440, 8
        %s442 = scalar_lea.vmem %s2, %s441
        %s443 = smul.u32 5, %s15
        %s444 = smul.u32 5, %s15
        %p445 = scmp.lt.s32.totalorder %s444, 9
        %s446 = scalar_select %p445, %s444, 9
        %s447 = smul.addr %s446, 8
        %s448 = scalar_lea.vmem %s3, %s447
        %s449 = smul.u32 5, %s15
        %s450 = smul.u32 5, %s15
        %p451 = scmp.lt.s32.totalorder %s450, 9
        %s452 = scalar_select %p451, %s450, 9
        %s453 = smul.addr %s452, 8
        %s454 = scalar_lea.vmem %s4, %s453
        %s455 = smul.u32 5, %s15
        %v456 = vld [vmem:[%s404] sm:$0xff]
        %v457 = vld [vmem:[%s404 + $0x8] sm:$0xff]
        %v458 = vld [vmem:[%s404 + $0x10] sm:$0xff]
        %v459 = vld [vmem:[%s404 + $0x18] sm:$0xff]
        %v460 = vld [vmem:[%s404 + $0x20] sm:$0xff]
        %v461 = vld [vmem:[%s404 + $0x28] sm:$0xff]
        %v462 = vld [vmem:[%s404 + $0x30] sm:$0xff]
        %v463 = vld [vmem:[%s404 + $0x38] sm:$0xff]
        %v464 = vld [vmem:[%s404 + $0x40] sm:$0xff]
        %v465 = vld [vmem:[%s404 + $0x48] sm:$0xff]
        %v466 = vld [vmem:[%s404 + $0x50] sm:$0xff]
        %v467 = vld [vmem:[%s404 + $0x58] sm:$0xff]
        %v468 = vld [vmem:[%s404 + $0x60] sm:$0xff]
        %v469 = vld [vmem:[%s404 + $0x68] sm:$0xff]
        %v470 = vld [vmem:[%s404 + $0x70] sm:$0xff]
        %v471 = vld [vmem:[%s404 + $0x78] sm:$0xff]
        %v472 = vld [vmem:[%s404 + $0x80] sm:$0xff]
        %v473 = vld [vmem:[%s404 + $0x88] sm:$0xff]
        %v474 = vld [vmem:[%s404 + $0x90] sm:$0xff]
        %v475 = vld [vmem:[%s404 + $0x98] sm:$0xff]
        %v476 = vld [vmem:[%s404 + $0xa0] sm:$0xff]
        %v477 = vld [vmem:[%s404 + $0xa8] sm:$0xff]
        %v478 = vld [vmem:[%s404 + $0xb0] sm:$0xff]
        %v479 = vld [vmem:[%s404 + $0xb8] sm:$0xff]
        %v480 = vld [vmem:[%s404 + $0xc0] sm:$0xff]
        %v481 = vld [vmem:[%s404 + $0xc8] sm:$0xff]
        %v482 = vld [vmem:[%s404 + $0xd0] sm:$0xff]
        %v483 = vld [vmem:[%s404 + $0xd8] sm:$0xff]
        %v484 = vld [vmem:[%s404 + $0xe0] sm:$0xff]
        %v485 = vld [vmem:[%s404 + $0xe8] sm:$0xff]
        %v486 = vld [vmem:[%s404 + $0xf0] sm:$0xff]
        %v487 = vld [vmem:[%s404 + $0xf8] sm:$0xff]
        %v488 = vld [vmem:[%s404 + $0x100] sm:$0xff]
        %v489 = vld [vmem:[%s404 + $0x108] sm:$0xff]
        %v490 = vld [vmem:[%s404 + $0x110] sm:$0xff]
        %v491 = vld [vmem:[%s404 + $0x118] sm:$0xff]
        %v492 = vld [vmem:[%s404 + $0x120] sm:$0xff]
        %v493 = vld [vmem:[%s404 + $0x128] sm:$0xff]
        %v494 = vld [vmem:[%s404 + $0x130] sm:$0xff]
        %v495 = vld [vmem:[%s404 + $0x138] sm:$0xff]
        %v496 = vld [vmem:[%s404 + $0x140] sm:$0xff]
        %v497 = vld [vmem:[%s404 + $0x148] sm:$0xff]
        %v498 = vld [vmem:[%s404 + $0x150] sm:$0xff]
        %v499 = vld [vmem:[%s404 + $0x158] sm:$0xff]
        %v500 = vld [vmem:[%s404 + $0x160] sm:$0xff]
        %v501 = vld [vmem:[%s1] sm:$0xf]
        %vm502 = vcmask 31744
        %v504 = vsel %vm502, %v456, 0
        %v507 = vsel %vm502, %v457, 0
        %v510 = vsel %vm502, %v458, 0
        %v513 = vsel %vm502, %v459, 0
        %v516 = vsel %vm502, %v460, 0
        %v519 = vsel %vm502, %v461, 0
        %v522 = vsel %vm502, %v462, 0
        %v525 = vsel %vm502, %v463, 0
        %v528 = vsel %vm502, %v464, 0
        %v531 = vsel %vm502, %v465, 0
        %v534 = vsel %vm502, %v466, 0
        %v537 = vsel %vm502, %v467, 0
        %v540 = vsel %vm502, %v468, 0
        %v543 = vsel %vm502, %v469, 0
        %v546 = vsel %vm502, %v470, 0
        %v549 = vsel %vm502, %v471, 0
        %v552 = vsel %vm502, %v472, 0
        %v555 = vsel %vm502, %v473, 0
        %v558 = vsel %vm502, %v474, 0
        %v561 = vsel %vm502, %v475, 0
        %v564 = vsel %vm502, %v476, 0
        %v567 = vsel %vm502, %v477, 0
        %v570 = vsel %vm502, %v478, 0
        %v573 = vsel %vm502, %v479, 0
        %v576 = vsel %vm502, %v480, 0
        %v579 = vsel %vm502, %v481, 0
        %v582 = vsel %vm502, %v482, 0
        %v585 = vsel %vm502, %v483, 0
        %v588 = vsel %vm502, %v484, 0
        %v591 = vsel %vm502, %v485, 0
        %v594 = vsel %vm502, %v486, 0
        %v597 = vsel %vm502, %v487, 0
        %v600 = vsel %vm502, %v488, 0
        %v603 = vsel %vm502, %v489, 0
        %v606 = vsel %vm502, %v490, 0
        %v609 = vsel %vm502, %v491, 0
        %v612 = vsel %vm502, %v492, 0
        %v615 = vsel %vm502, %v493, 0
        %v618 = vsel %vm502, %v494, 0
        %v621 = vsel %vm502, %v495, 0
        %v624 = vsel %vm502, %v496, 0
        %v627 = vsel %vm502, %v497, 0
        %v630 = vsel %vm502, %v498, 0
        %v633 = vsel %vm502, %v499, 0
        %v636 = vsel %vm502, %v500, 0
        %vm638 = vcmask 1043456
        %v640 = vsel %vm638, %v501, 0
        %642 = vmatprep.subr.mxu0 0.0
        %643 = vmatpush1.msra.mxu0 0.0
        %644 = vmatprep.subr.mxu0 0.0
        %645 = vmatpush1.msra.mxu0 0.0
        %646 = vmatprep.subr.mxu0 0.0
        %647 = vmatpush1.msra.mxu0 0.0
        %648 = vmatprep.subr.mxu0 0.0
        %649 = vmatpush1.msra.mxu0 0.0
        %650 = vmatprep.subr.mxu0 0.0
        %651 = vmatpush1.msra.mxu0 0.0
        %652 = vmatprep.subr.mxu0 0.0
        %653 = vmatpush1.msra.mxu0 0.0
        %654 = vmatprep.subr.mxu0 0.0
        %655 = vmatpush1.msra.mxu0 0.0
        %656 = vmatprep.subr.mxu0 0.0
        %657 = vmatpush1.msra.mxu0 0.0
        %658 = vmatprep.subr.mxu0 0.0
        %659 = vmatpush1.msra.mxu0 0.0
        %660 = vmatprep.subr.mxu0 0.0
        %661 = vmatpush1.msra.mxu0 0.0
        %662 = vmatprep.subr.mxu0 0.0
        %663 = vmatpush1.msra.mxu0 0.0
        %664 = vmatprep.subr.mxu0 0.0
        %665 = vmatpush1.msra.mxu0 0.0
        %666 = vmatprep.subr.mxu0 0.0
        %667 = vmatpush1.msra.mxu0 0.0
        %668 = vmatprep.subr.mxu0 0.0
        %669 = vmatpush1.msra.mxu0 0.0
        %670 = vmatprep.subr.mxu0 0.0
        %671 = vmatpush1.msra.mxu0 0.0
        %672 = vmatprep.subr.mxu0 0.0
        %673 = vmatpush1.msra.mxu0 %v640
        %674 = vmatprep.subr.mxu0 0.0
        %675 = vmatpush2.msra.mxu0 0.0
        %676 = vmatprep.subr.mxu0 0.0
        %677 = vmatpush2.msra.mxu0 0.0
        %678 = vmatprep.subr.mxu0 0.0
        %679 = vmatpush2.msra.mxu0 0.0
        %680 = vmatprep.subr.mxu0 0.0
        %681 = vmatpush2.msra.mxu0 0.0
        %682 = vmatprep.subr.mxu0 0.0
        %683 = vmatpush2.msra.mxu0 0.0
        %684 = vmatprep.subr.mxu0 0.0
        %685 = vmatpush2.msra.mxu0 0.0
        %686 = vmatprep.subr.mxu0 0.0
        %687 = vmatpush2.msra.mxu0 0.0
        %688 = vmatprep.subr.mxu0 0.0
        %689 = vmatpush2.msra.mxu0 0.0
        %690 = vmatprep.subr.mxu0 0.0
        %691 = vmatpush2.msra.mxu0 0.0
        %692 = vmatprep.subr.mxu0 0.0
        %693 = vmatpush2.msra.mxu0 0.0
        %694 = vmatprep.subr.mxu0 0.0
        %695 = vmatpush2.msra.mxu0 0.0
        %696 = vmatprep.subr.mxu0 0.0
        %697 = vmatpush2.msra.mxu0 0.0
        %698 = vmatprep.subr.mxu0 0.0
        %699 = vmatpush2.msra.mxu0 0.0
        %700 = vmatprep.subr.mxu0 0.0
        %701 = vmatpush2.msra.mxu0 0.0
        %702 = vmatprep.subr.mxu0 0.0
        %703 = vmatpush2.msra.mxu0 0.0
        %704 = vmatprep.subr.mxu0 0.0
        %705 = vmatpush2.msra.mxu0 0.0
        %706 = vmatprep.mubr.f32.mxu0 0.0
        %707 = vmatmul.mubr.f32.gmra.mxu0 %v504
        %v708 = vpop.f32.mrf.mxu0
        %v709 = vadd.f32 0.0, %v708
        %v710 = vpop.f32.mrf.mxu0
        %711 = vmatprep.mubr.f32.mxu0 0.0
        %712 = vmatmul.mubr.f32.gmra.mxu0 %v507
        %v713 = vpop.f32.mrf.mxu0
        %v714 = vadd.f32 0.0, %v713
        %v715 = vpop.f32.mrf.mxu0
        %716 = vmatprep.mubr.f32.mxu0 0.0
        %717 = vmatmul.mubr.f32.gmra.mxu0 %v510
        %v718 = vpop.f32.mrf.mxu0
        %v719 = vadd.f32 0.0, %v718
        %v720 = vpop.f32.mrf.mxu0
        %721 = vmatprep.mubr.f32.mxu0 0.0
        %722 = vmatmul.mubr.f32.gmra.mxu0 %v513
        %v723 = vpop.f32.mrf.mxu0
        %v724 = vadd.f32 0.0, %v723
        %v725 = vpop.f32.mrf.mxu0
        %726 = vmatprep.mubr.f32.mxu0 0.0
        %727 = vmatmul.mubr.f32.gmra.mxu0 %v516
        %v728 = vpop.f32.mrf.mxu0
        %v729 = vadd.f32 0.0, %v728
        %v730 = vpop.f32.mrf.mxu0
        %731 = vmatprep.mubr.f32.mxu0 0.0
        %732 = vmatmul.mubr.f32.gmra.mxu0 %v519
        %v733 = vpop.f32.mrf.mxu0
        %v734 = vadd.f32 0.0, %v733
        %v735 = vpop.f32.mrf.mxu0
        %736 = vmatprep.mubr.f32.mxu0 0.0
        %737 = vmatmul.mubr.f32.gmra.mxu0 %v522
        %v738 = vpop.f32.mrf.mxu0
        %v739 = vadd.f32 0.0, %v738
        %v740 = vpop.f32.mrf.mxu0
        %741 = vmatprep.mubr.f32.mxu0 0.0
        %742 = vmatmul.mubr.f32.gmra.mxu0 %v525
        %v743 = vpop.f32.mrf.mxu0
        %v744 = vadd.f32 0.0, %v743
        %v745 = vpop.f32.mrf.mxu0
        %746 = vmatprep.mubr.f32.mxu0 0.0
        %747 = vmatmul.mubr.f32.gmra.mxu0 %v528
        %v748 = vpop.f32.mrf.mxu0
        %v749 = vadd.f32 0.0, %v748
        %v750 = vpop.f32.mrf.mxu0
        %751 = vmatprep.mubr.f32.mxu0 0.0
        %752 = vmatmul.mubr.f32.gmra.mxu0 %v531
        %v753 = vpop.f32.mrf.mxu0
        %v754 = vadd.f32 0.0, %v753
        %v755 = vpop.f32.mrf.mxu0
        %756 = vmatprep.mubr.f32.mxu0 0.0
        %757 = vmatmul.mubr.f32.gmra.mxu0 %v534
        %v758 = vpop.f32.mrf.mxu0
        %v759 = vadd.f32 0.0, %v758
        %v760 = vpop.f32.mrf.mxu0
        %761 = vmatprep.mubr.f32.mxu0 0.0
        %762 = vmatmul.mubr.f32.gmra.mxu0 %v537
        %v763 = vpop.f32.mrf.mxu0
        %v764 = vadd.f32 0.0, %v763
        %v765 = vpop.f32.mrf.mxu0
        %766 = vmatprep.mubr.f32.mxu0 0.0
        %767 = vmatmul.mubr.f32.gmra.mxu0 %v540
        %v768 = vpop.f32.mrf.mxu0
        %v769 = vadd.f32 0.0, %v768
        %v770 = vpop.f32.mrf.mxu0
        %771 = vmatprep.mubr.f32.mxu0 0.0
        %772 = vmatmul.mubr.f32.gmra.mxu0 %v543
        %v773 = vpop.f32.mrf.mxu0
        %v774 = vadd.f32 0.0, %v773
        %v775 = vpop.f32.mrf.mxu0
        %776 = vmatprep.mubr.f32.mxu0 0.0
        %777 = vmatmul.mubr.f32.gmra.mxu0 %v546
        %v778 = vpop.f32.mrf.mxu0
        %v779 = vadd.f32 0.0, %v778
        %v780 = vpop.f32.mrf.mxu0
        %781 = vmatprep.mubr.f32.mxu0 0.0
        %782 = vmatmul.mubr.f32.gmra.mxu0 %v549
        %v783 = vpop.f32.mrf.mxu0
        %v784 = vadd.f32 0.0, %v783
        %v785 = vpop.f32.mrf.mxu0
        %786 = vmatprep.mubr.f32.mxu0 0.0
        %787 = vmatmul.mubr.f32.gmra.mxu0 %v552
        %v788 = vpop.f32.mrf.mxu0
        %v789 = vadd.f32 0.0, %v788
        %v790 = vpop.f32.mrf.mxu0
        %791 = vmatprep.mubr.f32.mxu0 0.0
        %792 = vmatmul.mubr.f32.gmra.mxu0 %v555
        %v793 = vpop.f32.mrf.mxu0
        %v794 = vadd.f32 0.0, %v793
        %v795 = vpop.f32.mrf.mxu0
        %796 = vmatprep.mubr.f32.mxu0 0.0
        %797 = vmatmul.mubr.f32.gmra.mxu0 %v558
        %v798 = vpop.f32.mrf.mxu0
        %v799 = vadd.f32 0.0, %v798
        %v800 = vpop.f32.mrf.mxu0
        %801 = vmatprep.mubr.f32.mxu0 0.0
        %802 = vmatmul.mubr.f32.gmra.mxu0 %v561
        %v803 = vpop.f32.mrf.mxu0
        %v804 = vadd.f32 0.0, %v803
        %v805 = vpop.f32.mrf.mxu0
        %806 = vmatprep.mubr.f32.mxu0 0.0
        %807 = vmatmul.mubr.f32.gmra.mxu0 %v564
        %v808 = vpop.f32.mrf.mxu0
        %v809 = vadd.f32 0.0, %v808
        %v810 = vpop.f32.mrf.mxu0
        %811 = vmatprep.mubr.f32.mxu0 0.0
        %812 = vmatmul.mubr.f32.gmra.mxu0 %v567
        %v813 = vpop.f32.mrf.mxu0
        %v814 = vadd.f32 0.0, %v813
        %v815 = vpop.f32.mrf.mxu0
        %816 = vmatprep.mubr.f32.mxu0 0.0
        %817 = vmatmul.mubr.f32.gmra.mxu0 %v570
        %v818 = vpop.f32.mrf.mxu0
        %v819 = vadd.f32 0.0, %v818
        %v820 = vpop.f32.mrf.mxu0
        %821 = vmatprep.mubr.f32.mxu0 0.0
        %822 = vmatmul.mubr.f32.gmra.mxu0 %v573
        %v823 = vpop.f32.mrf.mxu0
        %v824 = vadd.f32 0.0, %v823
        %v825 = vpop.f32.mrf.mxu0
        %826 = vmatprep.mubr.f32.mxu0 0.0
        %827 = vmatmul.mubr.f32.gmra.mxu0 %v576
        %v828 = vpop.f32.mrf.mxu0
        %v829 = vadd.f32 0.0, %v828
        %v830 = vpop.f32.mrf.mxu0
        %831 = vmatprep.mubr.f32.mxu0 0.0
        %832 = vmatmul.mubr.f32.gmra.mxu0 %v579
        %v833 = vpop.f32.mrf.mxu0
        %v834 = vadd.f32 0.0, %v833
        %v835 = vpop.f32.mrf.mxu0
        %836 = vmatprep.mubr.f32.mxu0 0.0
        %837 = vmatmul.mubr.f32.gmra.mxu0 %v582
        %v838 = vpop.f32.mrf.mxu0
        %v839 = vadd.f32 0.0, %v838
        %v840 = vpop.f32.mrf.mxu0
        %841 = vmatprep.mubr.f32.mxu0 0.0
        %842 = vmatmul.mubr.f32.gmra.mxu0 %v585
        %v843 = vpop.f32.mrf.mxu0
        %v844 = vadd.f32 0.0, %v843
        %v845 = vpop.f32.mrf.mxu0
        %846 = vmatprep.mubr.f32.mxu0 0.0
        %847 = vmatmul.mubr.f32.gmra.mxu0 %v588
        %v848 = vpop.f32.mrf.mxu0
        %v849 = vadd.f32 0.0, %v848
        %v850 = vpop.f32.mrf.mxu0
        %851 = vmatprep.mubr.f32.mxu0 0.0
        %852 = vmatmul.mubr.f32.gmra.mxu0 %v591
        %v853 = vpop.f32.mrf.mxu0
        %v854 = vadd.f32 0.0, %v853
        %v855 = vpop.f32.mrf.mxu0
        %856 = vmatprep.mubr.f32.mxu0 0.0
        %857 = vmatmul.mubr.f32.gmra.mxu0 %v594
        %v858 = vpop.f32.mrf.mxu0
        %v859 = vadd.f32 0.0, %v858
        %v860 = vpop.f32.mrf.mxu0
        %861 = vmatprep.mubr.f32.mxu0 0.0
        %862 = vmatmul.mubr.f32.gmra.mxu0 %v597
        %v863 = vpop.f32.mrf.mxu0
        %v864 = vadd.f32 0.0, %v863
        %v865 = vpop.f32.mrf.mxu0
        %866 = vmatprep.mubr.f32.mxu0 0.0
        %867 = vmatmul.mubr.f32.gmra.mxu0 %v600
        %v868 = vpop.f32.mrf.mxu0
        %v869 = vadd.f32 0.0, %v868
        %v870 = vpop.f32.mrf.mxu0
        %871 = vmatprep.mubr.f32.mxu0 0.0
        %872 = vmatmul.mubr.f32.gmra.mxu0 %v603
        %v873 = vpop.f32.mrf.mxu0
        %v874 = vadd.f32 0.0, %v873
        %v875 = vpop.f32.mrf.mxu0
        %876 = vmatprep.mubr.f32.mxu0 0.0
        %877 = vmatmul.mubr.f32.gmra.mxu0 %v606
        %v878 = vpop.f32.mrf.mxu0
        %v879 = vadd.f32 0.0, %v878
        %v880 = vpop.f32.mrf.mxu0
        %881 = vmatprep.mubr.f32.mxu0 0.0
        %882 = vmatmul.mubr.f32.gmra.mxu0 %v609
        %v883 = vpop.f32.mrf.mxu0
        %v884 = vadd.f32 0.0, %v883
        %v885 = vpop.f32.mrf.mxu0
        %886 = vmatprep.mubr.f32.mxu0 0.0
        %887 = vmatmul.mubr.f32.gmra.mxu0 %v612
        %v888 = vpop.f32.mrf.mxu0
        %v889 = vadd.f32 0.0, %v888
        %v890 = vpop.f32.mrf.mxu0
        %891 = vmatprep.mubr.f32.mxu0 0.0
        %892 = vmatmul.mubr.f32.gmra.mxu0 %v615
        %v893 = vpop.f32.mrf.mxu0
        %v894 = vadd.f32 0.0, %v893
        %v895 = vpop.f32.mrf.mxu0
        %896 = vmatprep.mubr.f32.mxu0 0.0
        %897 = vmatmul.mubr.f32.gmra.mxu0 %v618
        %v898 = vpop.f32.mrf.mxu0
        %v899 = vadd.f32 0.0, %v898
        %v900 = vpop.f32.mrf.mxu0
        %901 = vmatprep.mubr.f32.mxu0 0.0
        %902 = vmatmul.mubr.f32.gmra.mxu0 %v621
        %v903 = vpop.f32.mrf.mxu0
        %v904 = vadd.f32 0.0, %v903
        %v905 = vpop.f32.mrf.mxu0
        %906 = vmatprep.mubr.f32.mxu0 0.0
        %907 = vmatmul.mubr.f32.gmra.mxu0 %v624
        %v908 = vpop.f32.mrf.mxu0
        %v909 = vadd.f32 0.0, %v908
        %v910 = vpop.f32.mrf.mxu0
        %911 = vmatprep.mubr.f32.mxu0 0.0
        %912 = vmatmul.mubr.f32.gmra.mxu0 %v627
        %v913 = vpop.f32.mrf.mxu0
        %v914 = vadd.f32 0.0, %v913
        %v915 = vpop.f32.mrf.mxu0
        %916 = vmatprep.mubr.f32.mxu0 0.0
        %917 = vmatmul.mubr.f32.gmra.mxu0 %v630
        %v918 = vpop.f32.mrf.mxu0
        %v919 = vadd.f32 0.0, %v918
        %v920 = vpop.f32.mrf.mxu0
        %921 = vmatprep.mubr.f32.mxu0 0.0
        %922 = vmatmul.mubr.f32.gmra.mxu0 %v633
        %v923 = vpop.f32.mrf.mxu0
        %v924 = vadd.f32 0.0, %v923
        %v925 = vpop.f32.mrf.mxu0
        %926 = vmatprep.mubr.f32.mxu0 0.0
        %927 = vmatmul.mubr.f32.gmra.mxu0 %v636
        %v928 = vpop.f32.mrf.mxu0
        %v929 = vadd.f32 0.0, %v928
        %v930 = vpop.f32.mrf.mxu0
        %931 = vdwg.mxu0
        %v932 = vld [vmem:[%s442] sm:$0xff]
        %v933 = vld [vmem:[%s442 + $0x8] sm:$0xff]
        %v934 = vld [vmem:[%s442 + $0x10] sm:$0xff]
        %v935 = vld [vmem:[%s442 + $0x18] sm:$0xff]
        %v936 = vld [vmem:[%s442 + $0x20] sm:$0xff]
        %v937 = vld [vmem:[%s448] sm:$0xff]
        %v938 = vld [vmem:[%s448 + $0x8] sm:$0xff]
        %v939 = vld [vmem:[%s448 + $0x10] sm:$0xff]
        %v940 = vld [vmem:[%s448 + $0x18] sm:$0xff]
        %v941 = vld [vmem:[%s448 + $0x20] sm:$0xff]
        %vm942 = vcmp.ge.s32.totalorder %v932, 16
        %vm943 = vcmp.ge.s32.totalorder %v933, 16
        %vm944 = vcmp.ge.s32.totalorder %v934, 16
        %vm945 = vcmp.ge.s32.totalorder %v935, 16
        %vm946 = vcmp.ge.s32.totalorder %v936, 16
        %vm947 = vcmp.ge.s32.totalorder %v937, 16
        %vm948 = vcmp.ge.s32.totalorder %v938, 16
        %vm949 = vcmp.ge.s32.totalorder %v939, 16
        %vm950 = vcmp.ge.s32.totalorder %v940, 16
        %vm951 = vcmp.ge.s32.totalorder %v941, 16
        %vm952 = vmor %vm942, %vm947
        %vm953 = vmor %vm943, %vm948
        %vm954 = vmor %vm944, %vm949
        %vm955 = vmor %vm945, %vm950
        %vm956 = vmor %vm946, %vm951
        %v957 = vsel %vm952, 1, 0
        %v958 = vsel %vm953, 1, 0
        %v959 = vsel %vm954, 1, 0
        %v960 = vsel %vm955, 1, 0
        %v961 = vsel %vm956, 1, 0
        %962 = vset.pattern.permute.xlu0 0
        %963 = vperm.xlu0 %962, %v957
        %v964 = vpop.permute.xlu0 %963
        %965 = vset.pattern.permute.xlu0 0
        %966 = vperm.xlu0 %965, %v958
        %v967 = vpop.permute.xlu0 %966
        %968 = vset.pattern.permute.xlu0 0
        %969 = vperm.xlu0 %968, %v959
        %v970 = vpop.permute.xlu0 %969
        %971 = vset.pattern.permute.xlu0 0
        %972 = vperm.xlu0 %971, %v960
        %v973 = vpop.permute.xlu0 %972
        %974 = vset.pattern.permute.xlu0 0
        %975 = vperm.xlu0 %974, %v961
        %v976 = vpop.permute.xlu0 %975
        %vm977 = vcmp.eq.s32.totalorder %v964, 1
        %vm978 = vcmp.eq.s32.totalorder %v967, 1
        %vm979 = vcmp.eq.s32.totalorder %v970, 1
        %vm980 = vcmp.eq.s32.totalorder %v973, 1
        %vm981 = vcmp.eq.s32.totalorder %v976, 1
        %v982 = vsel %vm977, -3.4028235e+38, %v709
        %v983 = vsel %vm978, -3.4028235e+38, %v714
        %v984 = vsel %vm979, -3.4028235e+38, %v719
        %v985 = vsel %vm980, -3.4028235e+38, %v724
        %v986 = vsel %vm981, -3.4028235e+38, %v729
        %v987 = vadd.s32 %v937, 1
        %v988 = vadd.s32 %v938, 1
        %v989 = vadd.s32 %v939, 1
        %v990 = vadd.s32 %v940, 1
        %v991 = vadd.s32 %v941, 1
        %vm992 = vcmp.ge.s32.totalorder %v987, 16
        %vm993 = vcmp.ge.s32.totalorder %v988, 16
        %vm994 = vcmp.ge.s32.totalorder %v989, 16
        %vm995 = vcmp.ge.s32.totalorder %v990, 16
        %vm996 = vcmp.ge.s32.totalorder %v991, 16
        %vm997 = vmor %vm942, %vm992
        %vm998 = vmor %vm943, %vm993
        %vm999 = vmor %vm944, %vm994
        %vm1000 = vmor %vm945, %vm995
        %vm1001 = vmor %vm946, %vm996
        %v1002 = vsel %vm997, 1, 0
        %v1003 = vsel %vm998, 1, 0
        %v1004 = vsel %vm999, 1, 0
        %v1005 = vsel %vm1000, 1, 0
        %v1006 = vsel %vm1001, 1, 0
        %1007 = vset.pattern.permute.xlu0 0
        %1008 = vperm.xlu0 %1007, %v1002
        %v1009 = vpop.permute.xlu0 %1008
        %1010 = vset.pattern.permute.xlu0 0
        %1011 = vperm.xlu0 %1010, %v1003
        %v1012 = vpop.permute.xlu0 %1011
        %1013 = vset.pattern.permute.xlu0 0
        %1014 = vperm.xlu0 %1013, %v1004
        %v1015 = vpop.permute.xlu0 %1014
        %1016 = vset.pattern.permute.xlu0 0
        %1017 = vperm.xlu0 %1016, %v1005
        %v1018 = vpop.permute.xlu0 %1017
        %1019 = vset.pattern.permute.xlu0 0
        %1020 = vperm.xlu0 %1019, %v1006
        %v1021 = vpop.permute.xlu0 %1020
        %vm1022 = vcmp.eq.s32.totalorder %v1009, 1
        %vm1023 = vcmp.eq.s32.totalorder %v1012, 1
        %vm1024 = vcmp.eq.s32.totalorder %v1015, 1
        %vm1025 = vcmp.eq.s32.totalorder %v1018, 1
        %vm1026 = vcmp.eq.s32.totalorder %v1021, 1
        %v1027 = vsel %vm1022, -3.4028235e+38, %v734
        %v1028 = vsel %vm1023, -3.4028235e+38, %v739
        %v1029 = vsel %vm1024, -3.4028235e+38, %v744
        %v1030 = vsel %vm1025, -3.4028235e+38, %v749
        %v1031 = vsel %vm1026, -3.4028235e+38, %v754
        %v1032 = vadd.s32 %v937, 2
        %v1033 = vadd.s32 %v938, 2
        %v1034 = vadd.s32 %v939, 2
        %v1035 = vadd.s32 %v940, 2
        %v1036 = vadd.s32 %v941, 2
        %vm1037 = vcmp.ge.s32.totalorder %v1032, 16
        %vm1038 = vcmp.ge.s32.totalorder %v1033, 16
        %vm1039 = vcmp.ge.s32.totalorder %v1034, 16
        %vm1040 = vcmp.ge.s32.totalorder %v1035, 16
        %vm1041 = vcmp.ge.s32.totalorder %v1036, 16
        %vm1042 = vmor %vm942, %vm1037
        %vm1043 = vmor %vm943, %vm1038
        %vm1044 = vmor %vm944, %vm1039
        %vm1045 = vmor %vm945, %vm1040
        %vm1046 = vmor %vm946, %vm1041
        %v1047 = vsel %vm1042, 1, 0
        %v1048 = vsel %vm1043, 1, 0
        %v1049 = vsel %vm1044, 1, 0
        %v1050 = vsel %vm1045, 1, 0
        %v1051 = vsel %vm1046, 1, 0
        %1052 = vset.pattern.permute.xlu0 0
        %1053 = vperm.xlu0 %1052, %v1047
        %v1054 = vpop.permute.xlu0 %1053
        %1055 = vset.pattern.permute.xlu0 0
        %1056 = vperm.xlu0 %1055, %v1048
        %v1057 = vpop.permute.xlu0 %1056
        %1058 = vset.pattern.permute.xlu0 0
        %1059 = vperm.xlu0 %1058, %v1049
        %v1060 = vpop.permute.xlu0 %1059
        %1061 = vset.pattern.permute.xlu0 0
        %1062 = vperm.xlu0 %1061, %v1050
        %v1063 = vpop.permute.xlu0 %1062
        %1064 = vset.pattern.permute.xlu0 0
        %1065 = vperm.xlu0 %1064, %v1051
        %v1066 = vpop.permute.xlu0 %1065
        %vm1067 = vcmp.eq.s32.totalorder %v1054, 1
        %vm1068 = vcmp.eq.s32.totalorder %v1057, 1
        %vm1069 = vcmp.eq.s32.totalorder %v1060, 1
        %vm1070 = vcmp.eq.s32.totalorder %v1063, 1
        %vm1071 = vcmp.eq.s32.totalorder %v1066, 1
        %v1072 = vsel %vm1067, -3.4028235e+38, %v759
        %v1073 = vsel %vm1068, -3.4028235e+38, %v764
        %v1074 = vsel %vm1069, -3.4028235e+38, %v769
        %v1075 = vsel %vm1070, -3.4028235e+38, %v774
        %v1076 = vsel %vm1071, -3.4028235e+38, %v779
        %v1077 = vadd.s32 %v932, 1
        %v1078 = vadd.s32 %v933, 1
        %v1079 = vadd.s32 %v934, 1
        %v1080 = vadd.s32 %v935, 1
        %v1081 = vadd.s32 %v936, 1
        %vm1082 = vcmp.ge.s32.totalorder %v1077, 16
        %vm1083 = vcmp.ge.s32.totalorder %v1078, 16
        %vm1084 = vcmp.ge.s32.totalorder %v1079, 16
        %vm1085 = vcmp.ge.s32.totalorder %v1080, 16
        %vm1086 = vcmp.ge.s32.totalorder %v1081, 16
        %vm1087 = vmor %vm1082, %vm947
        %vm1088 = vmor %vm1083, %vm948
        %vm1089 = vmor %vm1084, %vm949
        %vm1090 = vmor %vm1085, %vm950
        %vm1091 = vmor %vm1086, %vm951
        %v1092 = vsel %vm1087, 1, 0
        %v1093 = vsel %vm1088, 1, 0
        %v1094 = vsel %vm1089, 1, 0
        %v1095 = vsel %vm1090, 1, 0
        %v1096 = vsel %vm1091, 1, 0
        %1097 = vset.pattern.permute.xlu0 0
        %1098 = vperm.xlu0 %1097, %v1092
        %v1099 = vpop.permute.xlu0 %1098
        %1100 = vset.pattern.permute.xlu0 0
        %1101 = vperm.xlu0 %1100, %v1093
        %v1102 = vpop.permute.xlu0 %1101
        %1103 = vset.pattern.permute.xlu0 0
        %1104 = vperm.xlu0 %1103, %v1094
        %v1105 = vpop.permute.xlu0 %1104
        %1106 = vset.pattern.permute.xlu0 0
        %1107 = vperm.xlu0 %1106, %v1095
        %v1108 = vpop.permute.xlu0 %1107
        %1109 = vset.pattern.permute.xlu0 0
        %1110 = vperm.xlu0 %1109, %v1096
        %v1111 = vpop.permute.xlu0 %1110
        %vm1112 = vcmp.eq.s32.totalorder %v1099, 1
        %vm1113 = vcmp.eq.s32.totalorder %v1102, 1
        %vm1114 = vcmp.eq.s32.totalorder %v1105, 1
        %vm1115 = vcmp.eq.s32.totalorder %v1108, 1
        %vm1116 = vcmp.eq.s32.totalorder %v1111, 1
        %v1117 = vsel %vm1112, -3.4028235e+38, %v784
        %v1118 = vsel %vm1113, -3.4028235e+38, %v789
        %v1119 = vsel %vm1114, -3.4028235e+38, %v794
        %v1120 = vsel %vm1115, -3.4028235e+38, %v799
        %v1121 = vsel %vm1116, -3.4028235e+38, %v804
        %vm1122 = vmor %vm1082, %vm992
        %vm1123 = vmor %vm1083, %vm993
        %vm1124 = vmor %vm1084, %vm994
        %vm1125 = vmor %vm1085, %vm995
        %vm1126 = vmor %vm1086, %vm996
        %v1127 = vsel %vm1122, 1, 0
        %v1128 = vsel %vm1123, 1, 0
        %v1129 = vsel %vm1124, 1, 0
        %v1130 = vsel %vm1125, 1, 0
        %v1131 = vsel %vm1126, 1, 0
        %1132 = vset.pattern.permute.xlu0 0
        %1133 = vperm.xlu0 %1132, %v1127
        %v1134 = vpop.permute.xlu0 %1133
        %1135 = vset.pattern.permute.xlu0 0
        %1136 = vperm.xlu0 %1135, %v1128
        %v1137 = vpop.permute.xlu0 %1136
        %1138 = vset.pattern.permute.xlu0 0
        %1139 = vperm.xlu0 %1138, %v1129
        %v1140 = vpop.permute.xlu0 %1139
        %1141 = vset.pattern.permute.xlu0 0
        %1142 = vperm.xlu0 %1141, %v1130
        %v1143 = vpop.permute.xlu0 %1142
        %1144 = vset.pattern.permute.xlu0 0
        %1145 = vperm.xlu0 %1144, %v1131
        %v1146 = vpop.permute.xlu0 %1145
        %vm1147 = vcmp.eq.s32.totalorder %v1134, 1
        %vm1148 = vcmp.eq.s32.totalorder %v1137, 1
        %vm1149 = vcmp.eq.s32.totalorder %v1140, 1
        %vm1150 = vcmp.eq.s32.totalorder %v1143, 1
        %vm1151 = vcmp.eq.s32.totalorder %v1146, 1
        %v1152 = vsel %vm1147, -3.4028235e+38, %v809
        %v1153 = vsel %vm1148, -3.4028235e+38, %v814
        %v1154 = vsel %vm1149, -3.4028235e+38, %v819
        %v1155 = vsel %vm1150, -3.4028235e+38, %v824
        %v1156 = vsel %vm1151, -3.4028235e+38, %v829
        %vm1157 = vmor %vm1082, %vm1037
        %vm1158 = vmor %vm1083, %vm1038
        %vm1159 = vmor %vm1084, %vm1039
        %vm1160 = vmor %vm1085, %vm1040
        %vm1161 = vmor %vm1086, %vm1041
        %v1162 = vsel %vm1157, 1, 0
        %v1163 = vsel %vm1158, 1, 0
        %v1164 = vsel %vm1159, 1, 0
        %v1165 = vsel %vm1160, 1, 0
        %v1166 = vsel %vm1161, 1, 0
        %1167 = vset.pattern.permute.xlu0 0
        %1168 = vperm.xlu0 %1167, %v1162
        %v1169 = vpop.permute.xlu0 %1168
        %1170 = vset.pattern.permute.xlu0 0
        %1171 = vperm.xlu0 %1170, %v1163
        %v1172 = vpop.permute.xlu0 %1171
        %1173 = vset.pattern.permute.xlu0 0
        %1174 = vperm.xlu0 %1173, %v1164
        %v1175 = vpop.permute.xlu0 %1174
        %1176 = vset.pattern.permute.xlu0 0
        %1177 = vperm.xlu0 %1176, %v1165
        %v1178 = vpop.permute.xlu0 %1177
        %1179 = vset.pattern.permute.xlu0 0
        %1180 = vperm.xlu0 %1179, %v1166
        %v1181 = vpop.permute.xlu0 %1180
        %vm1182 = vcmp.eq.s32.totalorder %v1169, 1
        %vm1183 = vcmp.eq.s32.totalorder %v1172, 1
        %vm1184 = vcmp.eq.s32.totalorder %v1175, 1
        %vm1185 = vcmp.eq.s32.totalorder %v1178, 1
        %vm1186 = vcmp.eq.s32.totalorder %v1181, 1
        %v1187 = vsel %vm1182, -3.4028235e+38, %v834
        %v1188 = vsel %vm1183, -3.4028235e+38, %v839
        %v1189 = vsel %vm1184, -3.4028235e+38, %v844
        %v1190 = vsel %vm1185, -3.4028235e+38, %v849
        %v1191 = vsel %vm1186, -3.4028235e+38, %v854
        %v1192 = vadd.s32 %v932, 2
        %v1193 = vadd.s32 %v933, 2
        %v1194 = vadd.s32 %v934, 2
        %v1195 = vadd.s32 %v935, 2
        %v1196 = vadd.s32 %v936, 2
        %vm1197 = vcmp.ge.s32.totalorder %v1192, 16
        %vm1198 = vcmp.ge.s32.totalorder %v1193, 16
        %vm1199 = vcmp.ge.s32.totalorder %v1194, 16
        %vm1200 = vcmp.ge.s32.totalorder %v1195, 16
        %vm1201 = vcmp.ge.s32.totalorder %v1196, 16
        %vm1202 = vmor %vm1197, %vm947
        %vm1203 = vmor %vm1198, %vm948
        %vm1204 = vmor %vm1199, %vm949
        %vm1205 = vmor %vm1200, %vm950
        %vm1206 = vmor %vm1201, %vm951
        %v1207 = vsel %vm1202, 1, 0
        %v1208 = vsel %vm1203, 1, 0
        %v1209 = vsel %vm1204, 1, 0
        %v1210 = vsel %vm1205, 1, 0
        %v1211 = vsel %vm1206, 1, 0
        %1212 = vset.pattern.permute.xlu0 0
        %1213 = vperm.xlu0 %1212, %v1207
        %v1214 = vpop.permute.xlu0 %1213
        %1215 = vset.pattern.permute.xlu0 0
        %1216 = vperm.xlu0 %1215, %v1208
        %v1217 = vpop.permute.xlu0 %1216
        %1218 = vset.pattern.permute.xlu0 0
        %1219 = vperm.xlu0 %1218, %v1209
        %v1220 = vpop.permute.xlu0 %1219
        %1221 = vset.pattern.permute.xlu0 0
        %1222 = vperm.xlu0 %1221, %v1210
        %v1223 = vpop.permute.xlu0 %1222
        %1224 = vset.pattern.permute.xlu0 0
        %1225 = vperm.xlu0 %1224, %v1211
        %v1226 = vpop.permute.xlu0 %1225
        %vm1227 = vcmp.eq.s32.totalorder %v1214, 1
        %vm1228 = vcmp.eq.s32.totalorder %v1217, 1
        %vm1229 = vcmp.eq.s32.totalorder %v1220, 1
        %vm1230 = vcmp.eq.s32.totalorder %v1223, 1
        %vm1231 = vcmp.eq.s32.totalorder %v1226, 1
        %v1232 = vsel %vm1227, -3.4028235e+38, %v859
        %v1233 = vsel %vm1228, -3.4028235e+38, %v864
        %v1234 = vsel %vm1229, -3.4028235e+38, %v869
        %v1235 = vsel %vm1230, -3.4028235e+38, %v874
        %v1236 = vsel %vm1231, -3.4028235e+38, %v879
        %vm1237 = vmor %vm1197, %vm992
        %vm1238 = vmor %vm1198, %vm993
        %vm1239 = vmor %vm1199, %vm994
        %vm1240 = vmor %vm1200, %vm995
        %vm1241 = vmor %vm1201, %vm996
        %v1242 = vsel %vm1237, 1, 0
        %v1243 = vsel %vm1238, 1, 0
        %v1244 = vsel %vm1239, 1, 0
        %v1245 = vsel %vm1240, 1, 0
        %v1246 = vsel %vm1241, 1, 0
        %1247 = vset.pattern.permute.xlu0 0
        %1248 = vperm.xlu0 %1247, %v1242
        %v1249 = vpop.permute.xlu0 %1248
        %1250 = vset.pattern.permute.xlu0 0
        %1251 = vperm.xlu0 %1250, %v1243
        %v1252 = vpop.permute.xlu0 %1251
        %1253 = vset.pattern.permute.xlu0 0
        %1254 = vperm.xlu0 %1253, %v1244
        %v1255 = vpop.permute.xlu0 %1254
        %1256 = vset.pattern.permute.xlu0 0
        %1257 = vperm.xlu0 %1256, %v1245
        %v1258 = vpop.permute.xlu0 %1257
        %1259 = vset.pattern.permute.xlu0 0
        %1260 = vperm.xlu0 %1259, %v1246
        %v1261 = vpop.permute.xlu0 %1260
        %vm1262 = vcmp.eq.s32.totalorder %v1249, 1
        %vm1263 = vcmp.eq.s32.totalorder %v1252, 1
        %vm1264 = vcmp.eq.s32.totalorder %v1255, 1
        %vm1265 = vcmp.eq.s32.totalorder %v1258, 1
        %vm1266 = vcmp.eq.s32.totalorder %v1261, 1
        %v1267 = vsel %vm1262, -3.4028235e+38, %v884
        %v1268 = vsel %vm1263, -3.4028235e+38, %v889
        %v1269 = vsel %vm1264, -3.4028235e+38, %v894
        %v1270 = vsel %vm1265, -3.4028235e+38, %v899
        %v1271 = vsel %vm1266, -3.4028235e+38, %v904
        %vm1272 = vmor %vm1197, %vm1037
        %vm1273 = vmor %vm1198, %vm1038
        %vm1274 = vmor %vm1199, %vm1039
        %vm1275 = vmor %vm1200, %vm1040
        %vm1276 = vmor %vm1201, %vm1041
        %v1277 = vsel %vm1272, 1, 0
        %v1278 = vsel %vm1273, 1, 0
        %v1279 = vsel %vm1274, 1, 0
        %v1280 = vsel %vm1275, 1, 0
        %v1281 = vsel %vm1276, 1, 0
        %1282 = vset.pattern.permute.xlu0 0
        %1283 = vperm.xlu0 %1282, %v1277
        %v1284 = vpop.permute.xlu0 %1283
        %1285 = vset.pattern.permute.xlu0 0
        %1286 = vperm.xlu0 %1285, %v1278
        %v1287 = vpop.permute.xlu0 %1286
        %1288 = vset.pattern.permute.xlu0 0
        %1289 = vperm.xlu0 %1288, %v1279
        %v1290 = vpop.permute.xlu0 %1289
        %1291 = vset.pattern.permute.xlu0 0
        %1292 = vperm.xlu0 %1291, %v1280
        %v1293 = vpop.permute.xlu0 %1292
        %1294 = vset.pattern.permute.xlu0 0
        %1295 = vperm.xlu0 %1294, %v1281
        %v1296 = vpop.permute.xlu0 %1295
        %vm1297 = vcmp.eq.s32.totalorder %v1284, 1
        %vm1298 = vcmp.eq.s32.totalorder %v1287, 1
        %vm1299 = vcmp.eq.s32.totalorder %v1290, 1
        %vm1300 = vcmp.eq.s32.totalorder %v1293, 1
        %vm1301 = vcmp.eq.s32.totalorder %v1296, 1
        %v1302 = vsel %vm1297, -3.4028235e+38, %v909
        %v1303 = vsel %vm1298, -3.4028235e+38, %v914
        %v1304 = vsel %vm1299, -3.4028235e+38, %v919
        %v1305 = vsel %vm1300, -3.4028235e+38, %v924
        %v1306 = vsel %vm1301, -3.4028235e+38, %v929
        %v1307 = vmax.f32 %v982, %v1027
        %v1308 = vmax.f32 %v983, %v1028
        %v1309 = vmax.f32 %v984, %v1029
        %v1310 = vmax.f32 %v985, %v1030
        %v1311 = vmax.f32 %v986, %v1031
        %v1312 = vmax.f32 %v1307, %v1072
        %v1313 = vmax.f32 %v1308, %v1073
        %v1314 = vmax.f32 %v1309, %v1074
        %v1315 = vmax.f32 %v1310, %v1075
        %v1316 = vmax.f32 %v1311, %v1076
        %v1317 = vmax.f32 %v1312, %v1117
        %v1318 = vmax.f32 %v1313, %v1118
        %v1319 = vmax.f32 %v1314, %v1119
        %v1320 = vmax.f32 %v1315, %v1120
        %v1321 = vmax.f32 %v1316, %v1121
        %v1322 = vmax.f32 %v1317, %v1152
        %v1323 = vmax.f32 %v1318, %v1153
        %v1324 = vmax.f32 %v1319, %v1154
        %v1325 = vmax.f32 %v1320, %v1155
        %v1326 = vmax.f32 %v1321, %v1156
        %v1327 = vmax.f32 %v1322, %v1187
        %v1328 = vmax.f32 %v1323, %v1188
        %v1329 = vmax.f32 %v1324, %v1189
        %v1330 = vmax.f32 %v1325, %v1190
        %v1331 = vmax.f32 %v1326, %v1191
        %v1332 = vmax.f32 %v1327, %v1232
        %v1333 = vmax.f32 %v1328, %v1233
        %v1334 = vmax.f32 %v1329, %v1234
        %v1335 = vmax.f32 %v1330, %v1235
        %v1336 = vmax.f32 %v1331, %v1236
        %v1337 = vmax.f32 %v1332, %v1267
        %v1338 = vmax.f32 %v1333, %v1268
        %v1339 = vmax.f32 %v1334, %v1269
        %v1340 = vmax.f32 %v1335, %v1270
        %v1341 = vmax.f32 %v1336, %v1271
        %v1342 = vmax.f32 %v1337, %v1302
        %v1343 = vmax.f32 %v1338, %v1303
        %v1344 = vmax.f32 %v1339, %v1304
        %v1345 = vmax.f32 %v1340, %v1305
        %v1346 = vmax.f32 %v1341, %v1306
        %v1347 = vsub.f32 %v982, %v1342
        %v1348 = vsub.f32 %v983, %v1343
        %v1349 = vsub.f32 %v984, %v1344
        %v1350 = vsub.f32 %v985, %v1345
        %v1351 = vsub.f32 %v986, %v1346
        %v1352 = vmul.f32 %v1347, 1.442695
        %v1353 = vpow.pop %v1352
        %v1354 = vmul.f32 %v1348, 1.442695
        %v1355 = vpow.pop %v1354
        %v1356 = vmul.f32 %v1349, 1.442695
        %v1357 = vpow.pop %v1356
        %v1358 = vmul.f32 %v1350, 1.442695
        %v1359 = vpow.pop %v1358
        %v1360 = vmul.f32 %v1351, 1.442695
        %v1361 = vpow.pop %v1360
        %v1362 = vadd.f32 %v1353, 0.0
        %v1363 = vadd.f32 %v1355, 0.0
        %v1364 = vadd.f32 %v1357, 0.0
        %v1365 = vadd.f32 %v1359, 0.0
        %v1366 = vadd.f32 %v1361, 0.0
        %v1367 = vmul.f32 %v456, %v1353
        %v1368 = vmul.f32 %v457, %v1355
        %v1369 = vmul.f32 %v458, %v1357
        %v1370 = vmul.f32 %v459, %v1359
        %v1371 = vmul.f32 %v460, %v1361
        %v1372 = vadd.f32 %v1367, 0.0
        %v1373 = vadd.f32 %v1368, 0.0
        %v1374 = vadd.f32 %v1369, 0.0
        %v1375 = vadd.f32 %v1370, 0.0
        %v1376 = vadd.f32 %v1371, 0.0
        %v1377 = vsub.f32 %v1027, %v1342
        %v1378 = vsub.f32 %v1028, %v1343
        %v1379 = vsub.f32 %v1029, %v1344
        %v1380 = vsub.f32 %v1030, %v1345
        %v1381 = vsub.f32 %v1031, %v1346
        %v1382 = vmul.f32 %v1377, 1.442695
        %v1383 = vpow.pop %v1382
        %v1384 = vmul.f32 %v1378, 1.442695
        %v1385 = vpow.pop %v1384
        %v1386 = vmul.f32 %v1379, 1.442695
        %v1387 = vpow.pop %v1386
        %v1388 = vmul.f32 %v1380, 1.442695
        %v1389 = vpow.pop %v1388
        %v1390 = vmul.f32 %v1381, 1.442695
        %v1391 = vpow.pop %v1390
        %v1392 = vadd.f32 %v1362, %v1383
        %v1393 = vadd.f32 %v1363, %v1385
        %v1394 = vadd.f32 %v1364, %v1387
        %v1395 = vadd.f32 %v1365, %v1389
        %v1396 = vadd.f32 %v1366, %v1391
        %v1397 = vmul.f32 %v461, %v1383
        %v1398 = vmul.f32 %v462, %v1385
        %v1399 = vmul.f32 %v463, %v1387
        %v1400 = vmul.f32 %v464, %v1389
        %v1401 = vmul.f32 %v465, %v1391
        %v1402 = vadd.f32 %v1372, %v1397
        %v1403 = vadd.f32 %v1373, %v1398
        %v1404 = vadd.f32 %v1374, %v1399
        %v1405 = vadd.f32 %v1375, %v1400
        %v1406 = vadd.f32 %v1376, %v1401
        %v1407 = vsub.f32 %v1072, %v1342
        %v1408 = vsub.f32 %v1073, %v1343
        %v1409 = vsub.f32 %v1074, %v1344
        %v1410 = vsub.f32 %v1075, %v1345
        %v1411 = vsub.f32 %v1076, %v1346
        %v1412 = vmul.f32 %v1407, 1.442695
        %v1413 = vpow.pop %v1412
        %v1414 = vmul.f32 %v1408, 1.442695
        %v1415 = vpow.pop %v1414
        %v1416 = vmul.f32 %v1409, 1.442695
        %v1417 = vpow.pop %v1416
        %v1418 = vmul.f32 %v1410, 1.442695
        %v1419 = vpow.pop %v1418
        %v1420 = vmul.f32 %v1411, 1.442695
        %v1421 = vpow.pop %v1420
        %v1422 = vadd.f32 %v1392, %v1413
        %v1423 = vadd.f32 %v1393, %v1415
        %v1424 = vadd.f32 %v1394, %v1417
        %v1425 = vadd.f32 %v1395, %v1419
        %v1426 = vadd.f32 %v1396, %v1421
        %v1427 = vmul.f32 %v466, %v1413
        %v1428 = vmul.f32 %v467, %v1415
        %v1429 = vmul.f32 %v468, %v1417
        %v1430 = vmul.f32 %v469, %v1419
        %v1431 = vmul.f32 %v470, %v1421
        %v1432 = vadd.f32 %v1402, %v1427
        %v1433 = vadd.f32 %v1403, %v1428
        %v1434 = vadd.f32 %v1404, %v1429
        %v1435 = vadd.f32 %v1405, %v1430
        %v1436 = vadd.f32 %v1406, %v1431
        %v1437 = vsub.f32 %v1117, %v1342
        %v1438 = vsub.f32 %v1118, %v1343
        %v1439 = vsub.f32 %v1119, %v1344
        %v1440 = vsub.f32 %v1120, %v1345
        %v1441 = vsub.f32 %v1121, %v1346
        %v1442 = vmul.f32 %v1437, 1.442695
        %v1443 = vpow.pop %v1442
        %v1444 = vmul.f32 %v1438, 1.442695
        %v1445 = vpow.pop %v1444
        %v1446 = vmul.f32 %v1439, 1.442695
        %v1447 = vpow.pop %v1446
        %v1448 = vmul.f32 %v1440, 1.442695
        %v1449 = vpow.pop %v1448
        %v1450 = vmul.f32 %v1441, 1.442695
        %v1451 = vpow.pop %v1450
        %v1452 = vadd.f32 %v1422, %v1443
        %v1453 = vadd.f32 %v1423, %v1445
        %v1454 = vadd.f32 %v1424, %v1447
        %v1455 = vadd.f32 %v1425, %v1449
        %v1456 = vadd.f32 %v1426, %v1451
        %v1457 = vmul.f32 %v471, %v1443
        %v1458 = vmul.f32 %v472, %v1445
        %v1459 = vmul.f32 %v473, %v1447
        %v1460 = vmul.f32 %v474, %v1449
        %v1461 = vmul.f32 %v475, %v1451
        %v1462 = vadd.f32 %v1432, %v1457
        %v1463 = vadd.f32 %v1433, %v1458
        %v1464 = vadd.f32 %v1434, %v1459
        %v1465 = vadd.f32 %v1435, %v1460
        %v1466 = vadd.f32 %v1436, %v1461
        %v1467 = vsub.f32 %v1152, %v1342
        %v1468 = vsub.f32 %v1153, %v1343
        %v1469 = vsub.f32 %v1154, %v1344
        %v1470 = vsub.f32 %v1155, %v1345
        %v1471 = vsub.f32 %v1156, %v1346
        %v1472 = vmul.f32 %v1467, 1.442695
        %v1473 = vpow.pop %v1472
        %v1474 = vmul.f32 %v1468, 1.442695
        %v1475 = vpow.pop %v1474
        %v1476 = vmul.f32 %v1469, 1.442695
        %v1477 = vpow.pop %v1476
        %v1478 = vmul.f32 %v1470, 1.442695
        %v1479 = vpow.pop %v1478
        %v1480 = vmul.f32 %v1471, 1.442695
        %v1481 = vpow.pop %v1480
        %v1482 = vadd.f32 %v1452, %v1473
        %v1483 = vadd.f32 %v1453, %v1475
        %v1484 = vadd.f32 %v1454, %v1477
        %v1485 = vadd.f32 %v1455, %v1479
        %v1486 = vadd.f32 %v1456, %v1481
        %v1487 = vmul.f32 %v476, %v1473
        %v1488 = vmul.f32 %v477, %v1475
        %v1489 = vmul.f32 %v478, %v1477
        %v1490 = vmul.f32 %v479, %v1479
        %v1491 = vmul.f32 %v480, %v1481
        %v1492 = vadd.f32 %v1462, %v1487
        %v1493 = vadd.f32 %v1463, %v1488
        %v1494 = vadd.f32 %v1464, %v1489
        %v1495 = vadd.f32 %v1465, %v1490
        %v1496 = vadd.f32 %v1466, %v1491
        %v1497 = vsub.f32 %v1187, %v1342
        %v1498 = vsub.f32 %v1188, %v1343
        %v1499 = vsub.f32 %v1189, %v1344
        %v1500 = vsub.f32 %v1190, %v1345
        %v1501 = vsub.f32 %v1191, %v1346
        %v1502 = vmul.f32 %v1497, 1.442695
        %v1503 = vpow.pop %v1502
        %v1504 = vmul.f32 %v1498, 1.442695
        %v1505 = vpow.pop %v1504
        %v1506 = vmul.f32 %v1499, 1.442695
        %v1507 = vpow.pop %v1506
        %v1508 = vmul.f32 %v1500, 1.442695
        %v1509 = vpow.pop %v1508
        %v1510 = vmul.f32 %v1501, 1.442695
        %v1511 = vpow.pop %v1510
        %v1512 = vadd.f32 %v1482, %v1503
        %v1513 = vadd.f32 %v1483, %v1505
        %v1514 = vadd.f32 %v1484, %v1507
        %v1515 = vadd.f32 %v1485, %v1509
        %v1516 = vadd.f32 %v1486, %v1511
        %v1517 = vmul.f32 %v481, %v1503
        %v1518 = vmul.f32 %v482, %v1505
        %v1519 = vmul.f32 %v483, %v1507
        %v1520 = vmul.f32 %v484, %v1509
        %v1521 = vmul.f32 %v485, %v1511
        %v1522 = vadd.f32 %v1492, %v1517
        %v1523 = vadd.f32 %v1493, %v1518
        %v1524 = vadd.f32 %v1494, %v1519
        %v1525 = vadd.f32 %v1495, %v1520
        %v1526 = vadd.f32 %v1496, %v1521
        %v1527 = vsub.f32 %v1232, %v1342
        %v1528 = vsub.f32 %v1233, %v1343
        %v1529 = vsub.f32 %v1234, %v1344
        %v1530 = vsub.f32 %v1235, %v1345
        %v1531 = vsub.f32 %v1236, %v1346
        %v1532 = vmul.f32 %v1527, 1.442695
        %v1533 = vpow.pop %v1532
        %v1534 = vmul.f32 %v1528, 1.442695
        %v1535 = vpow.pop %v1534
        %v1536 = vmul.f32 %v1529, 1.442695
        %v1537 = vpow.pop %v1536
        %v1538 = vmul.f32 %v1530, 1.442695
        %v1539 = vpow.pop %v1538
        %v1540 = vmul.f32 %v1531, 1.442695
        %v1541 = vpow.pop %v1540
        %v1542 = vadd.f32 %v1512, %v1533
        %v1543 = vadd.f32 %v1513, %v1535
        %v1544 = vadd.f32 %v1514, %v1537
        %v1545 = vadd.f32 %v1515, %v1539
        %v1546 = vadd.f32 %v1516, %v1541
        %v1547 = vmul.f32 %v486, %v1533
        %v1548 = vmul.f32 %v487, %v1535
        %v1549 = vmul.f32 %v488, %v1537
        %v1550 = vmul.f32 %v489, %v1539
        %v1551 = vmul.f32 %v490, %v1541
        %v1552 = vadd.f32 %v1522, %v1547
        %v1553 = vadd.f32 %v1523, %v1548
        %v1554 = vadd.f32 %v1524, %v1549
        %v1555 = vadd.f32 %v1525, %v1550
        %v1556 = vadd.f32 %v1526, %v1551
        %v1557 = vsub.f32 %v1267, %v1342
        %v1558 = vsub.f32 %v1268, %v1343
        %v1559 = vsub.f32 %v1269, %v1344
        %v1560 = vsub.f32 %v1270, %v1345
        %v1561 = vsub.f32 %v1271, %v1346
        %v1562 = vmul.f32 %v1557, 1.442695
        %v1563 = vpow.pop %v1562
        %v1564 = vmul.f32 %v1558, 1.442695
        %v1565 = vpow.pop %v1564
        %v1566 = vmul.f32 %v1559, 1.442695
        %v1567 = vpow.pop %v1566
        %v1568 = vmul.f32 %v1560, 1.442695
        %v1569 = vpow.pop %v1568
        %v1570 = vmul.f32 %v1561, 1.442695
        %v1571 = vpow.pop %v1570
        %v1572 = vadd.f32 %v1542, %v1563
        %v1573 = vadd.f32 %v1543, %v1565
        %v1574 = vadd.f32 %v1544, %v1567
        %v1575 = vadd.f32 %v1545, %v1569
        %v1576 = vadd.f32 %v1546, %v1571
        %v1577 = vmul.f32 %v491, %v1563
        %v1578 = vmul.f32 %v492, %v1565
        %v1579 = vmul.f32 %v493, %v1567
        %v1580 = vmul.f32 %v494, %v1569
        %v1581 = vmul.f32 %v495, %v1571
        %v1582 = vadd.f32 %v1552, %v1577
        %v1583 = vadd.f32 %v1553, %v1578
        %v1584 = vadd.f32 %v1554, %v1579
        %v1585 = vadd.f32 %v1555, %v1580
        %v1586 = vadd.f32 %v1556, %v1581
        %v1587 = vsub.f32 %v1302, %v1342
        %v1588 = vsub.f32 %v1303, %v1343
        %v1589 = vsub.f32 %v1304, %v1344
        %v1590 = vsub.f32 %v1305, %v1345
        %v1591 = vsub.f32 %v1306, %v1346
        %v1592 = vmul.f32 %v1587, 1.442695
        %v1593 = vpow.pop %v1592
        %v1594 = vmul.f32 %v1588, 1.442695
        %v1595 = vpow.pop %v1594
        %v1596 = vmul.f32 %v1589, 1.442695
        %v1597 = vpow.pop %v1596
        %v1598 = vmul.f32 %v1590, 1.442695
        %v1599 = vpow.pop %v1598
        %v1600 = vmul.f32 %v1591, 1.442695
        %v1601 = vpow.pop %v1600
        %v1602 = vadd.f32 %v1572, %v1593
        %v1603 = vadd.f32 %v1573, %v1595
        %v1604 = vadd.f32 %v1574, %v1597
        %v1605 = vadd.f32 %v1575, %v1599
        %v1606 = vadd.f32 %v1576, %v1601
        %v1607 = vmul.f32 %v496, %v1593
        %v1608 = vmul.f32 %v497, %v1595
        %v1609 = vmul.f32 %v498, %v1597
        %v1610 = vmul.f32 %v499, %v1599
        %v1611 = vmul.f32 %v500, %v1601
        %v1612 = vadd.f32 %v1582, %v1607
        %v1613 = vadd.f32 %v1583, %v1608
        %v1614 = vadd.f32 %v1584, %v1609
        %v1615 = vadd.f32 %v1585, %v1610
        %v1616 = vadd.f32 %v1586, %v1611
        %v1617 = vrcp.pop %v1602
        %v1618 = vrcp.pop %v1603
        %v1619 = vrcp.pop %v1604
        %v1620 = vrcp.pop %v1605
        %v1621 = vrcp.pop %v1606
        %v1622 = vmul.f32 %v1612, %v1617
        %v1623 = vmul.f32 %v1613, %v1618
        %v1624 = vmul.f32 %v1614, %v1619
        %v1625 = vmul.f32 %v1615, %v1620
        %v1626 = vmul.f32 %v1616, %v1621
        %1627 = vst.msk [vmem:[%s454] sm:$0xff] %vm502, %v1622
        %1628 = vst.msk [vmem:[%s454 + $0x8] sm:$0xff] %vm502, %v1623
        %1629 = vst.msk [vmem:[%s454 + $0x10] sm:$0xff] %vm502, %v1624
        %1630 = vst.msk [vmem:[%s454 + $0x18] sm:$0xff] %vm502, %v1625
        %1631 = vst.msk [vmem:[%s454 + $0x20] sm:$0xff] %vm502, %v1626
        %s1632 = smul.u32 5, %s15
        %p1633 = scmp.lt.s32.totalorder %s1632, 9
        %s1634 = scalar_select %p1633, %s1632, 9
        %s1635 = smul.addr %s1634, 8
        %s1636 = scalar_lea.vmem %s4, %s1635
        // Predicated region
        $region75: #{tpu_custom_call.1} parent=69 // pred_check
          %p1637 = pneg %p132
        $region76: #{tpu_custom_call.1} parent=69 // pred_check_branch
          %1639 = sbr.rel (%p1637) target = $region78
        $region77: #{tpu_custom_call.1} parent=69 // pred_region
          %s1640 = smul.u32 5, %s15
        $region78: #{tpu_custom_call.1} parent=69 // pred_fallthru
          _
      $region70: #{tpu_custom_call.1} parent=5 // pred_fallthru
        _
      %p1641 = scmp.le.s32.totalorder 2, %s10
      // Predicated region
      $region79: #{tpu_custom_call.1} parent=5 // pred_check
        %p1642 = pneg %p1641
      $region80: #{tpu_custom_call.1} parent=5 // pred_check_branch
        %1644 = sbr.rel (%p1642) target = $region82
      $region81: #{tpu_custom_call.1} parent=5 // pred_region
        %s1645 = ssub.s32 %s10, 2
        // Predicated region
        $region83: #{tpu_custom_call.1} parent=81 // pred_check
          %p1646 = pneg %p138
        $region84: #{tpu_custom_call.1} parent=81 // pred_check_branch
          %1648 = sbr.rel (%p1646) target = $region86
        $region85: #{tpu_custom_call.1} parent=81 // pred_region
          %s1649 = smul.u32 5, %s16
          %p1650 = scmp.lt.s32.totalorder %s1649, 9
          %s1651 = scalar_select %p1650, %s1649, 9
          %s1652 = smul.addr %s1651, 8
          %s1653 = scalar_lea.vmem %s4, %s1652
        $region86: #{tpu_custom_call.1} parent=81 // pred_fallthru
          _
      $region82: #{tpu_custom_call.1} parent=5 // pred_fallthru
        _
    $region6: #{tpu_custom_call.1} parent=1 // loop_footer
      %s14 = sadd.s32 1, %s10
    $region7: #{tpu_custom_call.1} parent=1 // loop_footer_branch
      %9 = sbr.rel target = $region3
    $region8: #{tpu_custom_call.1} parent=1 // loop_exit
      _

</llo_original>
